<compile_context>
chip_gen: v7x
topology: tpu7x:2x2x1
jax: 0.10.0
libtpu: 0.0.40
codegen_flags: <defaults>
</compile_context>

<pallas_src>
import jax
import jax.numpy as jnp
from jax.experimental import pallas as pl
from jax.experimental.pallas import tpu as pltpu

# ----------------------- small XLM-R-like config -----------------------
VOCAB = 100
HIDDEN = 32
N_HEADS = 2
HEAD_DIM = HIDDEN // N_HEADS
INTERMEDIATE = 64
N_LAYERS = 2
MAX_POS = 64
NUM_LABELS = 5
NUM_LABELS_PAD = 8          # lane-padded classifier width (sliced back to 5 outside)
PAD_ID = 1
LN_EPS = 1e-5


# ----------------------------- fused kernel -----------------------------
def _layernorm(y, g, b):
    mu = jnp.mean(y, axis=-1, keepdims=True)
    var = jnp.mean(jnp.square(y - mu), axis=-1, keepdims=True)
    return (y - mu) * jax.lax.rsqrt(var + LN_EPS) * g + b


def _xlmr_fused_kernel(
    emb_ref, mask_ref,
    emb_ln_g_ref, emb_ln_b_ref,
    wqkv_ref, bqkv_ref, wo_ref, bo_ref, ln1_g_ref, ln1_b_ref,
    wi_ref, bi_ref, wf_ref, bf_ref, ln2_g_ref, ln2_b_ref,
    cls_w_ref, cls_b_ref,
    out_ref,
):
    B, S = mask_ref.shape
    n_layers = wqkv_ref.shape[0]
    scale = 1.0 / float(HEAD_DIM) ** 0.5

    # embedding LayerNorm
    h = _layernorm(emb_ref[...], emb_ln_g_ref[...], emb_ln_b_ref[...])   # [B*S, H]
    mask = mask_ref[...]                                                 # [B, S] additive

    # TODO(synk): for real XLM-R sizes, cast matmul operands to bf16 (keep f32
    # accumulation) and tile M over a 'parallel' grid axis for v7x megacore.
    for l in range(n_layers):
        # ---- fused QKV projection: one [B*S,H] @ [H,3H] matmul ----
        qkv = jnp.dot(h, wqkv_ref[l], preferred_element_type=jnp.float32) + bqkv_ref[l]
        q = qkv[:, 0:HIDDEN]
        k = qkv[:, HIDDEN:2 * HIDDEN]
        v = qkv[:, 2 * HIDDEN:3 * HIDDEN]

        # ---- self attention: per-batch / per-head, fully unrolled in VMEM ----
        ctx_rows = []
        for b in range(B):
            qb = q[b * S:(b + 1) * S]
            kb = k[b * S:(b + 1) * S]
            vb = v[b * S:(b + 1) * S]
            mb = mask[b:b + 1, :]                       # [1, S]
            heads = []
            for hd in range(N_HEADS):
                lo, hi = hd * HEAD_DIM, (hd + 1) * HEAD_DIM
                qh, kh, vh = qb[:, lo:hi], kb[:, lo:hi], vb[:, lo:hi]
                s = jnp.dot(qh, kh.T, preferred_element_type=jnp.float32) * scale + mb
                s = s - jnp.max(s, axis=-1, keepdims=True)
                p = jnp.exp(s)
                p = p / jnp.sum(p, axis=-1, keepdims=True)
                heads.append(jnp.dot(p, vh, preferred_element_type=jnp.float32))
            ctx_rows.append(jnp.concatenate(heads, axis=-1))
        ctx = jnp.concatenate(ctx_rows, axis=0)          # [B*S, H]

        # ---- output projection + residual + LayerNorm (fused) ----
        attn_out = jnp.dot(ctx, wo_ref[l], preferred_element_type=jnp.float32) + bo_ref[l]
        h = _layernorm(attn_out + h, ln1_g_ref[l], ln1_b_ref[l])

        # ---- FFN: dense + GELU + dense + residual + LayerNorm (fused) ----
        inter = jnp.dot(h, wi_ref[l], preferred_element_type=jnp.float32) + bi_ref[l]
        # TODO(synk): HF XLM-R uses exact (erf) GELU; tanh approximation used here.
        inter = jax.nn.gelu(inter, approximate=True)
        ffn = jnp.dot(inter, wf_ref[l], preferred_element_type=jnp.float32) + bf_ref[l]
        h = _layernorm(ffn + h, ln2_g_ref[l], ln2_b_ref[l])

    # ---- token classifier head (lane-padded output) ----
    out_ref[...] = (
        jnp.dot(h, cls_w_ref[...], preferred_element_type=jnp.float32) + cls_b_ref[...]
    )


# ----------------------------- parameters -----------------------------
def init_params(key):
    keys = iter(jax.random.split(key, 64))

    def norm(shape):
        return 0.02 * jax.random.normal(next(keys), shape, jnp.float32)

    p = {
        "word_emb": norm((VOCAB, HIDDEN)),
        "pos_emb": norm((MAX_POS, HIDDEN)),
        "type_emb": norm((1, HIDDEN)),
        "emb_ln_g": jnp.ones((HIDDEN,), jnp.float32),
        "emb_ln_b": jnp.zeros((HIDDEN,), jnp.float32),
        "layers": [],
        "cls_w": norm((HIDDEN, NUM_LABELS)),
        "cls_b": jnp.zeros((NUM_LABELS,), jnp.float32),
    }
    for _ in range(N_LAYERS):
        p["layers"].append(
            {
                "wq": norm((HIDDEN, HIDDEN)), "bq": jnp.zeros((HIDDEN,), jnp.float32),
                "wk": norm((HIDDEN, HIDDEN)), "bk": jnp.zeros((HIDDEN,), jnp.float32),
                "wv": norm((HIDDEN, HIDDEN)), "bv": jnp.zeros((HIDDEN,), jnp.float32),
                "wo": norm((HIDDEN, HIDDEN)), "bo": jnp.zeros((HIDDEN,), jnp.float32),
                "ln1_g": jnp.ones((HIDDEN,), jnp.float32),
                "ln1_b": jnp.zeros((HIDDEN,), jnp.float32),
                "wi": norm((HIDDEN, INTERMEDIATE)),
                "bi": jnp.zeros((INTERMEDIATE,), jnp.float32),
                "wf": norm((INTERMEDIATE, HIDDEN)),
                "bf": jnp.zeros((HIDDEN,), jnp.float32),
                "ln2_g": jnp.ones((HIDDEN,), jnp.float32),
                "ln2_b": jnp.zeros((HIDDEN,), jnp.float32),
            }
        )
    return p


def pack_params(p):
    """Concatenate Q|K|V weights, stack per-layer tensors, lane-pad classifier."""
    layers = p["layers"]

    def stack2d(key):                       # [L, in, out]
        return jnp.stack([l[key] for l in layers])

    def stack_row(key):                     # [L, 1, N]
        return jnp.stack([l[key][None, :] for l in layers])

    packed = {
        "word_emb": p["word_emb"],
        "pos_emb": p["pos_emb"],
        "type_emb": p["type_emb"],
        "emb_ln_g": p["emb_ln_g"][None, :],
        "emb_ln_b": p["emb_ln_b"][None, :],
        "wqkv": jnp.stack(
            [jnp.concatenate([l["wq"], l["wk"], l["wv"]], axis=1) for l in layers]),
        "bqkv": jnp.stack(
            [jnp.concatenate([l["bq"], l["bk"], l["bv"]])[None, :] for l in layers]),
        "wo": stack2d("wo"), "bo": stack_row("bo"),
        "ln1_g": stack_row("ln1_g"), "ln1_b": stack_row("ln1_b"),
        "wi": stack2d("wi"), "bi": stack_row("bi"),
        "wf": stack2d("wf"), "bf": stack_row("bf"),
        "ln2_g": stack_row("ln2_g"), "ln2_b": stack_row("ln2_b"),
        "cls_w": jnp.pad(p["cls_w"], ((0, 0), (0, NUM_LABELS_PAD - NUM_LABELS))),
        "cls_b": jnp.pad(p["cls_b"], (0, NUM_LABELS_PAD - NUM_LABELS))[None, :],
    }
    return packed


# ------------------------------ forward pass ------------------------------
def xlmr_ner_forward(packed, input_ids, attention_mask):
    B, S = input_ids.shape
    mask_f = attention_mask.astype(jnp.float32)

    # XLM-R position ids: padding_idx + cumsum(not-pad) * not-pad
    not_pad = (input_ids != PAD_ID).astype(jnp.int32)
    position_ids = jnp.cumsum(not_pad, axis=1) * not_pad + PAD_ID

    # embedding gathers (plain-JAX glue)
    emb = (
        packed["word_emb"][input_ids]
        + packed["pos_emb"][position_ids]
        + packed["type_emb"][jnp.zeros_like(input_ids)]
    ).reshape(B * S, HIDDEN).astype(jnp.float32)

    add_mask = (1.0 - mask_f) * -1e9                     # [B, S] additive key mask

    args = (
        emb, add_mask,
        packed["emb_ln_g"], packed["emb_ln_b"],
        packed["wqkv"], packed["bqkv"], packed["wo"], packed["bo"],
        packed["ln1_g"], packed["ln1_b"],
        packed["wi"], packed["bi"], packed["wf"], packed["bf"],
        packed["ln2_g"], packed["ln2_b"],
        packed["cls_w"], packed["cls_b"],
    )

    # advisory cost estimate so XLA schedules the single custom call tightly
    flops = 2 * B * S * (
        N_LAYERS * (HIDDEN * 3 * HIDDEN + HIDDEN * HIDDEN
                    + 2 * HIDDEN * INTERMEDIATE + 2 * S * HIDDEN)
        + HIDDEN * NUM_LABELS_PAD
    )
    transcendentals = N_LAYERS * (B * N_HEADS * S * S + B * S * INTERMEDIATE) + 5 * B * S
    bytes_accessed = 4 * (sum(int(a.size) for a in args) + B * S * NUM_LABELS_PAD)

    vmem = pl.BlockSpec(memory_space=pltpu.MemorySpace.VMEM)
    logits_pad = pl.pallas_call(
        _xlmr_fused_kernel,
        out_shape=jax.ShapeDtypeStruct((B * S, NUM_LABELS_PAD), jnp.float32),
        in_specs=[vmem] * len(args),
        out_specs=vmem,
        cost_estimate=pl.CostEstimate(
            flops=flops, transcendentals=transcendentals, bytes_accessed=bytes_accessed),
    )(*args)

    return logits_pad[:, :NUM_LABELS].reshape(B, S, NUM_LABELS)


# --------------------------------- main ---------------------------------
if __name__ == "__main__":
    key = jax.random.PRNGKey(0)
    pkey, dkey = jax.random.split(key)
    params = init_params(pkey)
    packed = pack_params(params)

    B, S = 2, 8
    input_ids = jax.random.randint(dkey, (B, S), 2, VOCAB, dtype=jnp.int32)
    attention_mask = jnp.ones((B, S), jnp.int32)
    attention_mask = attention_mask.at[1, -2:].set(0)          # some padding
    input_ids = jnp.where(attention_mask == 1, input_ids, PAD_ID)

    logits = jax.jit(xlmr_ner_forward)(packed, input_ids, attention_mask)
    jax.block_until_ready(logits)
    assert logits.shape == (B, S, NUM_LABELS)
    assert logits.dtype == jnp.float32
    print("KERNEL_OK")
</pallas_src>

<mosaic_0001>
module attributes {stable_mosaic.version = 11 : i64} {
  func.func @_xlmr_fused_kernel(%arg0: memref<16x32xf32, #tpu.memory_space<vmem>>, %arg1: memref<2x8xf32, #tpu.memory_space<vmem>>, %arg2: memref<1x32xf32, #tpu.memory_space<vmem>>, %arg3: memref<1x32xf32, #tpu.memory_space<vmem>>, %arg4: memref<2x32x96xf32, #tpu.memory_space<vmem>>, %arg5: memref<2x1x96xf32, #tpu.memory_space<vmem>>, %arg6: memref<2x32x32xf32, #tpu.memory_space<vmem>>, %arg7: memref<2x1x32xf32, #tpu.memory_space<vmem>>, %arg8: memref<2x1x32xf32, #tpu.memory_space<vmem>>, %arg9: memref<2x1x32xf32, #tpu.memory_space<vmem>>, %arg10: memref<2x32x64xf32, #tpu.memory_space<vmem>>, %arg11: memref<2x1x64xf32, #tpu.memory_space<vmem>>, %arg12: memref<2x64x32xf32, #tpu.memory_space<vmem>>, %arg13: memref<2x1x32xf32, #tpu.memory_space<vmem>>, %arg14: memref<2x1x32xf32, #tpu.memory_space<vmem>>, %arg15: memref<2x1x32xf32, #tpu.memory_space<vmem>>, %arg16: memref<32x8xf32, #tpu.memory_space<vmem>>, %arg17: memref<1x8xf32, #tpu.memory_space<vmem>>, %arg18: memref<16x8xf32, #tpu.memory_space<vmem>>) attributes {dimension_semantics = [], scalar_prefetch = 0 : i64, scratch_operands = 0 : i64, tpu.core_type = #tpu.core_type<tc>} {
    %c0 = arith.constant 0 : index
    %c0_0 = arith.constant 0 : index
    %0 = vector.load %arg0[%c0, %c0_0] : memref<16x32xf32, #tpu.memory_space<vmem>>, vector<16x32xf32>
    %c0_1 = arith.constant 0 : index
    %c0_2 = arith.constant 0 : index
    %1 = vector.load %arg2[%c0_1, %c0_2] : memref<1x32xf32, #tpu.memory_space<vmem>>, vector<1x32xf32>
    %c0_3 = arith.constant 0 : index
    %c0_4 = arith.constant 0 : index
    %2 = vector.load %arg3[%c0_3, %c0_4] : memref<1x32xf32, #tpu.memory_space<vmem>>, vector<1x32xf32>
    %cst = arith.constant dense<0.000000e+00> : vector<16xf32>
    %3 = vector.multi_reduction <add>, %0, %cst [1] : vector<16x32xf32> to vector<16xf32>
    %4 = vector.shape_cast %3 : vector<16xf32> to vector<16x1xf32>
    %cst_5 = arith.constant 3.200000e+01 : f32
    %5 = vector.broadcast %cst_5 : f32 to vector<16x1xf32>
    %6 = arith.divf %4, %5 : vector<16x1xf32>
    %7 = vector.broadcast %6 : vector<16x1xf32> to vector<16x32xf32>
    %8 = arith.subf %0, %7 : vector<16x32xf32>
    %9 = arith.mulf %8, %8 : vector<16x32xf32>
    %cst_6 = arith.constant dense<0.000000e+00> : vector<16xf32>
    %10 = vector.multi_reduction <add>, %9, %cst_6 [1] : vector<16x32xf32> to vector<16xf32>
    %11 = vector.shape_cast %10 : vector<16xf32> to vector<16x1xf32>
    %cst_7 = arith.constant 3.200000e+01 : f32
    %12 = vector.broadcast %cst_7 : f32 to vector<16x1xf32>
    %13 = arith.divf %11, %12 : vector<16x1xf32>
    %14 = vector.broadcast %6 : vector<16x1xf32> to vector<16x32xf32>
    %15 = arith.subf %0, %14 : vector<16x32xf32>
    %cst_8 = arith.constant 9.99999974E-6 : f32
    %16 = vector.broadcast %cst_8 : f32 to vector<16x1xf32>
    %17 = arith.addf %13, %16 : vector<16x1xf32>
    %18 = math.rsqrt %17 : vector<16x1xf32>
    %19 = vector.broadcast %18 : vector<16x1xf32> to vector<16x32xf32>
    %20 = arith.mulf %15, %19 : vector<16x32xf32>
    %21 = vector.broadcast %1 : vector<1x32xf32> to vector<16x32xf32>
    %22 = arith.mulf %20, %21 : vector<16x32xf32>
    %23 = vector.broadcast %2 : vector<1x32xf32> to vector<16x32xf32>
    %24 = arith.addf %22, %23 : vector<16x32xf32>
    %c0_9 = arith.constant 0 : index
    %c0_10 = arith.constant 0 : index
    %25 = vector.load %arg1[%c0_9, %c0_10] : memref<2x8xf32, #tpu.memory_space<vmem>>, vector<2x8xf32>
    %c0_11 = arith.constant 0 : index
    %c0_12 = arith.constant 0 : index
    %c0_13 = arith.constant 0 : index
    %26 = vector.load %arg4[%c0_11, %c0_12, %c0_13] : memref<2x32x96xf32, #tpu.memory_space<vmem>>, vector<1x32x96xf32>
    %27 = vector.shape_cast %26 : vector<1x32x96xf32> to vector<32x96xf32>
    %cst_14 = arith.constant dense<0.000000e+00> : vector<16x96xf32>
    %28 = tpu.matmul %24, %27, %cst_14 {dimension_numbers = #tpu.dot_dimension_numbers<[1], [0], [0], [1], [0, 0, 1, 1], [], []>} : vector<16x32xf32>, vector<32x96xf32>, vector<16x96xf32> -> vector<16x96xf32>
    %c0_15 = arith.constant 0 : index
    %c0_16 = arith.constant 0 : index
    %c0_17 = arith.constant 0 : index
    %29 = vector.load %arg5[%c0_15, %c0_16, %c0_17] : memref<2x1x96xf32, #tpu.memory_space<vmem>>, vector<1x1x96xf32>
    %30 = vector.shape_cast %29 : vector<1x1x96xf32> to vector<1x96xf32>
    %31 = vector.broadcast %30 : vector<1x96xf32> to vector<16x96xf32>
    %32 = arith.addf %28, %31 : vector<16x96xf32>
    %33 = vector.extract_strided_slice %32 {offsets = [0, 0], sizes = [16, 32], strides = [1, 1]} : vector<16x96xf32> to vector<16x32xf32>
    %34 = vector.extract_strided_slice %32 {offsets = [0, 32], sizes = [16, 32], strides = [1, 1]} : vector<16x96xf32> to vector<16x32xf32>
    %35 = vector.extract_strided_slice %32 {offsets = [0, 64], sizes = [16, 32], strides = [1, 1]} : vector<16x96xf32> to vector<16x32xf32>
    %36 = vector.extract_strided_slice %33 {offsets = [0, 0], sizes = [8, 32], strides = [1, 1]} : vector<16x32xf32> to vector<8x32xf32>
    %37 = vector.extract_strided_slice %34 {offsets = [0, 0], sizes = [8, 32], strides = [1, 1]} : vector<16x32xf32> to vector<8x32xf32>
    %38 = vector.extract_strided_slice %35 {offsets = [0, 0], sizes = [8, 32], strides = [1, 1]} : vector<16x32xf32> to vector<8x32xf32>
    %39 = vector.extract_strided_slice %25 {offsets = [0, 0], sizes = [1, 8], strides = [1, 1]} : vector<2x8xf32> to vector<1x8xf32>
    %40 = vector.extract_strided_slice %36 {offsets = [0, 0], sizes = [8, 16], strides = [1, 1]} : vector<8x32xf32> to vector<8x16xf32>
    %41 = vector.extract_strided_slice %37 {offsets = [0, 0], sizes = [8, 16], strides = [1, 1]} : vector<8x32xf32> to vector<8x16xf32>
    %42 = vector.extract_strided_slice %38 {offsets = [0, 0], sizes = [8, 16], strides = [1, 1]} : vector<8x32xf32> to vector<8x16xf32>
    %43 = tpu.transpose %41, [1, 0] : vector<8x16xf32> -> vector<16x8xf32>
    %cst_18 = arith.constant dense<0.000000e+00> : vector<8x8xf32>
    %44 = tpu.matmul %40, %43, %cst_18 {dimension_numbers = #tpu.dot_dimension_numbers<[1], [0], [0], [1], [0, 0, 1, 1], [], []>} : vector<8x16xf32>, vector<16x8xf32>, vector<8x8xf32> -> vector<8x8xf32>
    %cst_19 = arith.constant 2.500000e-01 : f32
    %45 = vector.broadcast %cst_19 : f32 to vector<8x8xf32>
    %46 = arith.mulf %44, %45 : vector<8x8xf32>
    %47 = vector.broadcast %39 : vector<1x8xf32> to vector<8x8xf32>
    %48 = arith.addf %46, %47 : vector<8x8xf32>
    %cst_20 = arith.constant dense<0xFF800000> : vector<8xf32>
    %49 = vector.multi_reduction <maximumf>, %48, %cst_20 [1] : vector<8x8xf32> to vector<8xf32>
    %50 = vector.shape_cast %49 : vector<8xf32> to vector<8x1xf32>
    %51 = vector.broadcast %50 : vector<8x1xf32> to vector<8x8xf32>
    %52 = arith.subf %48, %51 : vector<8x8xf32>
    %53 = math.exp %52 : vector<8x8xf32>
    %cst_21 = arith.constant dense<0.000000e+00> : vector<8xf32>
    %54 = vector.multi_reduction <add>, %53, %cst_21 [1] : vector<8x8xf32> to vector<8xf32>
    %55 = vector.shape_cast %54 : vector<8xf32> to vector<8x1xf32>
    %56 = vector.broadcast %55 : vector<8x1xf32> to vector<8x8xf32>
    %57 = arith.divf %53, %56 : vector<8x8xf32>
    %cst_22 = arith.constant dense<0.000000e+00> : vector<8x16xf32>
    %58 = tpu.matmul %57, %42, %cst_22 {dimension_numbers = #tpu.dot_dimension_numbers<[1], [0], [0], [1], [0, 0, 1, 1], [], []>} : vector<8x8xf32>, vector<8x16xf32>, vector<8x16xf32> -> vector<8x16xf32>
    %59 = vector.extract_strided_slice %36 {offsets = [0, 16], sizes = [8, 16], strides = [1, 1]} : vector<8x32xf32> to vector<8x16xf32>
    %60 = vector.extract_strided_slice %37 {offsets = [0, 16], sizes = [8, 16], strides = [1, 1]} : vector<8x32xf32> to vector<8x16xf32>
    %61 = vector.extract_strided_slice %38 {offsets = [0, 16], sizes = [8, 16], strides = [1, 1]} : vector<8x32xf32> to vector<8x16xf32>
    %62 = tpu.transpose %60, [1, 0] : vector<8x16xf32> -> vector<16x8xf32>
    %cst_23 = arith.constant dense<0.000000e+00> : vector<8x8xf32>
    %63 = tpu.matmul %59, %62, %cst_23 {dimension_numbers = #tpu.dot_dimension_numbers<[1], [0], [0], [1], [0, 0, 1, 1], [], []>} : vector<8x16xf32>, vector<16x8xf32>, vector<8x8xf32> -> vector<8x8xf32>
    %cst_24 = arith.constant 2.500000e-01 : f32
    %64 = vector.broadcast %cst_24 : f32 to vector<8x8xf32>
    %65 = arith.mulf %63, %64 : vector<8x8xf32>
    %66 = vector.broadcast %39 : vector<1x8xf32> to vector<8x8xf32>
    %67 = arith.addf %65, %66 : vector<8x8xf32>
    %cst_25 = arith.constant dense<0xFF800000> : vector<8xf32>
    %68 = vector.multi_reduction <maximumf>, %67, %cst_25 [1] : vector<8x8xf32> to vector<8xf32>
    %69 = vector.shape_cast %68 : vector<8xf32> to vector<8x1xf32>
    %70 = vector.broadcast %69 : vector<8x1xf32> to vector<8x8xf32>
    %71 = arith.subf %67, %70 : vector<8x8xf32>
    %72 = math.exp %71 : vector<8x8xf32>
    %cst_26 = arith.constant dense<0.000000e+00> : vector<8xf32>
    %73 = vector.multi_reduction <add>, %72, %cst_26 [1] : vector<8x8xf32> to vector<8xf32>
    %74 = vector.shape_cast %73 : vector<8xf32> to vector<8x1xf32>
    %75 = vector.broadcast %74 : vector<8x1xf32> to vector<8x8xf32>
    %76 = arith.divf %72, %75 : vector<8x8xf32>
    %cst_27 = arith.constant dense<0.000000e+00> : vector<8x16xf32>
    %77 = tpu.matmul %76, %61, %cst_27 {dimension_numbers = #tpu.dot_dimension_numbers<[1], [0], [0], [1], [0, 0, 1, 1], [], []>} : vector<8x8xf32>, vector<8x16xf32>, vector<8x16xf32> -> vector<8x16xf32>
    %78 = tpu.concatenate %58, %77 in 1 : vector<8x16xf32>, vector<8x16xf32> -> vector<8x32xf32>
    %79 = vector.extract_strided_slice %33 {offsets = [8, 0], sizes = [8, 32], strides = [1, 1]} : vector<16x32xf32> to vector<8x32xf32>
    %80 = vector.extract_strided_slice %34 {offsets = [8, 0], sizes = [8, 32], strides = [1, 1]} : vector<16x32xf32> to vector<8x32xf32>
    %81 = vector.extract_strided_slice %35 {offsets = [8, 0], sizes = [8, 32], strides = [1, 1]} : vector<16x32xf32> to vector<8x32xf32>
    %82 = vector.extract_strided_slice %25 {offsets = [1, 0], sizes = [1, 8], strides = [1, 1]} : vector<2x8xf32> to vector<1x8xf32>
    %83 = vector.extract_strided_slice %79 {offsets = [0, 0], sizes = [8, 16], strides = [1, 1]} : vector<8x32xf32> to vector<8x16xf32>
    %84 = vector.extract_strided_slice %80 {offsets = [0, 0], sizes = [8, 16], strides = [1, 1]} : vector<8x32xf32> to vector<8x16xf32>
    %85 = vector.extract_strided_slice %81 {offsets = [0, 0], sizes = [8, 16], strides = [1, 1]} : vector<8x32xf32> to vector<8x16xf32>
    %86 = tpu.transpose %84, [1, 0] : vector<8x16xf32> -> vector<16x8xf32>
    %cst_28 = arith.constant dense<0.000000e+00> : vector<8x8xf32>
    %87 = tpu.matmul %83, %86, %cst_28 {dimension_numbers = #tpu.dot_dimension_numbers<[1], [0], [0], [1], [0, 0, 1, 1], [], []>} : vector<8x16xf32>, vector<16x8xf32>, vector<8x8xf32> -> vector<8x8xf32>
    %cst_29 = arith.constant 2.500000e-01 : f32
    %88 = vector.broadcast %cst_29 : f32 to vector<8x8xf32>
    %89 = arith.mulf %87, %88 : vector<8x8xf32>
    %90 = vector.broadcast %82 : vector<1x8xf32> to vector<8x8xf32>
    %91 = arith.addf %89, %90 : vector<8x8xf32>
    %cst_30 = arith.constant dense<0xFF800000> : vector<8xf32>
    %92 = vector.multi_reduction <maximumf>, %91, %cst_30 [1] : vector<8x8xf32> to vector<8xf32>
    %93 = vector.shape_cast %92 : vector<8xf32> to vector<8x1xf32>
    %94 = vector.broadcast %93 : vector<8x1xf32> to vector<8x8xf32>
    %95 = arith.subf %91, %94 : vector<8x8xf32>
    %96 = math.exp %95 : vector<8x8xf32>
    %cst_31 = arith.constant dense<0.000000e+00> : vector<8xf32>
    %97 = vector.multi_reduction <add>, %96, %cst_31 [1] : vector<8x8xf32> to vector<8xf32>
    %98 = vector.shape_cast %97 : vector<8xf32> to vector<8x1xf32>
    %99 = vector.broadcast %98 : vector<8x1xf32> to vector<8x8xf32>
    %100 = arith.divf %96, %99 : vector<8x8xf32>
    %cst_32 = arith.constant dense<0.000000e+00> : vector<8x16xf32>
    %101 = tpu.matmul %100, %85, %cst_32 {dimension_numbers = #tpu.dot_dimension_numbers<[1], [0], [0], [1], [0, 0, 1, 1], [], []>} : vector<8x8xf32>, vector<8x16xf32>, vector<8x16xf32> -> vector<8x16xf32>
    %102 = vector.extract_strided_slice %79 {offsets = [0, 16], sizes = [8, 16], strides = [1, 1]} : vector<8x32xf32> to vector<8x16xf32>
    %103 = vector.extract_strided_slice %80 {offsets = [0, 16], sizes = [8, 16], strides = [1, 1]} : vector<8x32xf32> to vector<8x16xf32>
    %104 = vector.extract_strided_slice %81 {offsets = [0, 16], sizes = [8, 16], strides = [1, 1]} : vector<8x32xf32> to vector<8x16xf32>
    %105 = tpu.transpose %103, [1, 0] : vector<8x16xf32> -> vector<16x8xf32>
    %cst_33 = arith.constant dense<0.000000e+00> : vector<8x8xf32>
    %106 = tpu.matmul %102, %105, %cst_33 {dimension_numbers = #tpu.dot_dimension_numbers<[1], [0], [0], [1], [0, 0, 1, 1], [], []>} : vector<8x16xf32>, vector<16x8xf32>, vector<8x8xf32> -> vector<8x8xf32>
    %cst_34 = arith.constant 2.500000e-01 : f32
    %107 = vector.broadcast %cst_34 : f32 to vector<8x8xf32>
    %108 = arith.mulf %106, %107 : vector<8x8xf32>
    %109 = vector.broadcast %82 : vector<1x8xf32> to vector<8x8xf32>
    %110 = arith.addf %108, %109 : vector<8x8xf32>
    %cst_35 = arith.constant dense<0xFF800000> : vector<8xf32>
    %111 = vector.multi_reduction <maximumf>, %110, %cst_35 [1] : vector<8x8xf32> to vector<8xf32>
    %112 = vector.shape_cast %111 : vector<8xf32> to vector<8x1xf32>
    %113 = vector.broadcast %112 : vector<8x1xf32> to vector<8x8xf32>
    %114 = arith.subf %110, %113 : vector<8x8xf32>
    %115 = math.exp %114 : vector<8x8xf32>
    %cst_36 = arith.constant dense<0.000000e+00> : vector<8xf32>
    %116 = vector.multi_reduction <add>, %115, %cst_36 [1] : vector<8x8xf32> to vector<8xf32>
    %117 = vector.shape_cast %116 : vector<8xf32> to vector<8x1xf32>
    %118 = vector.broadcast %117 : vector<8x1xf32> to vector<8x8xf32>
    %119 = arith.divf %115, %118 : vector<8x8xf32>
    %cst_37 = arith.constant dense<0.000000e+00> : vector<8x16xf32>
    %120 = tpu.matmul %119, %104, %cst_37 {dimension_numbers = #tpu.dot_dimension_numbers<[1], [0], [0], [1], [0, 0, 1, 1], [], []>} : vector<8x8xf32>, vector<8x16xf32>, vector<8x16xf32> -> vector<8x16xf32>
    %121 = tpu.concatenate %101, %120 in 1 : vector<8x16xf32>, vector<8x16xf32> -> vector<8x32xf32>
    %122 = tpu.concatenate %78, %121 in 0 : vector<8x32xf32>, vector<8x32xf32> -> vector<16x32xf32>
    %c0_38 = arith.constant 0 : index
    %c0_39 = arith.constant 0 : index
    %c0_40 = arith.constant 0 : index
    %123 = vector.load %arg6[%c0_38, %c0_39, %c0_40] : memref<2x32x32xf32, #tpu.memory_space<vmem>>, vector<1x32x32xf32>
    %124 = vector.shape_cast %123 : vector<1x32x32xf32> to vector<32x32xf32>
    %cst_41 = arith.constant dense<0.000000e+00> : vector<16x32xf32>
    %125 = tpu.matmul %122, %124, %cst_41 {dimension_numbers = #tpu.dot_dimension_numbers<[1], [0], [0], [1], [0, 0, 1, 1], [], []>} : vector<16x32xf32>, vector<32x32xf32>, vector<16x32xf32> -> vector<16x32xf32>
    %c0_42 = arith.constant 0 : index
    %c0_43 = arith.constant 0 : index
    %c0_44 = arith.constant 0 : index
    %126 = vector.load %arg7[%c0_42, %c0_43, %c0_44] : memref<2x1x32xf32, #tpu.memory_space<vmem>>, vector<1x1x32xf32>
    %127 = vector.shape_cast %126 : vector<1x1x32xf32> to vector<1x32xf32>
    %128 = vector.broadcast %127 : vector<1x32xf32> to vector<16x32xf32>
    %129 = arith.addf %125, %128 : vector<16x32xf32>
    %130 = arith.addf %129, %24 : vector<16x32xf32>
    %c0_45 = arith.constant 0 : index
    %c0_46 = arith.constant 0 : index
    %c0_47 = arith.constant 0 : index
    %131 = vector.load %arg8[%c0_45, %c0_46, %c0_47] : memref<2x1x32xf32, #tpu.memory_space<vmem>>, vector<1x1x32xf32>
    %132 = vector.shape_cast %131 : vector<1x1x32xf32> to vector<1x32xf32>
    %c0_48 = arith.constant 0 : index
    %c0_49 = arith.constant 0 : index
    %c0_50 = arith.constant 0 : index
    %133 = vector.load %arg9[%c0_48, %c0_49, %c0_50] : memref<2x1x32xf32, #tpu.memory_space<vmem>>, vector<1x1x32xf32>
    %134 = vector.shape_cast %133 : vector<1x1x32xf32> to vector<1x32xf32>
    %cst_51 = arith.constant dense<0.000000e+00> : vector<16xf32>
    %135 = vector.multi_reduction <add>, %130, %cst_51 [1] : vector<16x32xf32> to vector<16xf32>
    %136 = vector.shape_cast %135 : vector<16xf32> to vector<16x1xf32>
    %cst_52 = arith.constant 3.200000e+01 : f32
    %137 = vector.broadcast %cst_52 : f32 to vector<16x1xf32>
    %138 = arith.divf %136, %137 : vector<16x1xf32>
    %139 = vector.broadcast %138 : vector<16x1xf32> to vector<16x32xf32>
    %140 = arith.subf %130, %139 : vector<16x32xf32>
    %141 = arith.mulf %140, %140 : vector<16x32xf32>
    %cst_53 = arith.constant dense<0.000000e+00> : vector<16xf32>
    %142 = vector.multi_reduction <add>, %141, %cst_53 [1] : vector<16x32xf32> to vector<16xf32>
    %143 = vector.shape_cast %142 : vector<16xf32> to vector<16x1xf32>
    %cst_54 = arith.constant 3.200000e+01 : f32
    %144 = vector.broadcast %cst_54 : f32 to vector<16x1xf32>
    %145 = arith.divf %143, %144 : vector<16x1xf32>
    %146 = vector.broadcast %138 : vector<16x1xf32> to vector<16x32xf32>
    %147 = arith.subf %130, %146 : vector<16x32xf32>
    %cst_55 = arith.constant 9.99999974E-6 : f32
    %148 = vector.broadcast %cst_55 : f32 to vector<16x1xf32>
    %149 = arith.addf %145, %148 : vector<16x1xf32>
    %150 = math.rsqrt %149 : vector<16x1xf32>
    %151 = vector.broadcast %150 : vector<16x1xf32> to vector<16x32xf32>
    %152 = arith.mulf %147, %151 : vector<16x32xf32>
    %153 = vector.broadcast %132 : vector<1x32xf32> to vector<16x32xf32>
    %154 = arith.mulf %152, %153 : vector<16x32xf32>
    %155 = vector.broadcast %134 : vector<1x32xf32> to vector<16x32xf32>
    %156 = arith.addf %154, %155 : vector<16x32xf32>
    %c0_56 = arith.constant 0 : index
    %c0_57 = arith.constant 0 : index
    %c0_58 = arith.constant 0 : index
    %157 = vector.load %arg10[%c0_56, %c0_57, %c0_58] : memref<2x32x64xf32, #tpu.memory_space<vmem>>, vector<1x32x64xf32>
    %158 = vector.shape_cast %157 : vector<1x32x64xf32> to vector<32x64xf32>
    %cst_59 = arith.constant dense<0.000000e+00> : vector<16x64xf32>
    %159 = tpu.matmul %156, %158, %cst_59 {dimension_numbers = #tpu.dot_dimension_numbers<[1], [0], [0], [1], [0, 0, 1, 1], [], []>} : vector<16x32xf32>, vector<32x64xf32>, vector<16x64xf32> -> vector<16x64xf32>
    %c0_60 = arith.constant 0 : index
    %c0_61 = arith.constant 0 : index
    %c0_62 = arith.constant 0 : index
    %160 = vector.load %arg11[%c0_60, %c0_61, %c0_62] : memref<2x1x64xf32, #tpu.memory_space<vmem>>, vector<1x1x64xf32>
    %161 = vector.shape_cast %160 : vector<1x1x64xf32> to vector<1x64xf32>
    %162 = vector.broadcast %161 : vector<1x64xf32> to vector<16x64xf32>
    %163 = arith.addf %159, %162 : vector<16x64xf32>
    %164 = arith.mulf %163, %163 : vector<16x64xf32>
    %165 = arith.mulf %163, %164 : vector<16x64xf32>
    %cst_63 = arith.constant 4.471500e-02 : f32
    %166 = vector.broadcast %cst_63 : f32 to vector<16x64xf32>
    %167 = arith.mulf %166, %165 : vector<16x64xf32>
    %168 = arith.addf %163, %167 : vector<16x64xf32>
    %cst_64 = arith.constant 0.797884583 : f32
    %169 = vector.broadcast %cst_64 : f32 to vector<16x64xf32>
    %170 = arith.mulf %169, %168 : vector<16x64xf32>
    %171 = math.tanh %170 : vector<16x64xf32>
    %cst_65 = arith.constant 1.000000e+00 : f32
    %172 = vector.broadcast %cst_65 : f32 to vector<16x64xf32>
    %173 = arith.addf %172, %171 : vector<16x64xf32>
    %cst_66 = arith.constant 5.000000e-01 : f32
    %174 = vector.broadcast %cst_66 : f32 to vector<16x64xf32>
    %175 = arith.mulf %174, %173 : vector<16x64xf32>
    %176 = arith.mulf %163, %175 : vector<16x64xf32>
    %c0_67 = arith.constant 0 : index
    %c0_68 = arith.constant 0 : index
    %c0_69 = arith.constant 0 : index
    %177 = vector.load %arg12[%c0_67, %c0_68, %c0_69] : memref<2x64x32xf32, #tpu.memory_space<vmem>>, vector<1x64x32xf32>
    %178 = vector.shape_cast %177 : vector<1x64x32xf32> to vector<64x32xf32>
    %cst_70 = arith.constant dense<0.000000e+00> : vector<16x32xf32>
    %179 = tpu.matmul %176, %178, %cst_70 {dimension_numbers = #tpu.dot_dimension_numbers<[1], [0], [0], [1], [0, 0, 1, 1], [], []>} : vector<16x64xf32>, vector<64x32xf32>, vector<16x32xf32> -> vector<16x32xf32>
    %c0_71 = arith.constant 0 : index
    %c0_72 = arith.constant 0 : index
    %c0_73 = arith.constant 0 : index
    %180 = vector.load %arg13[%c0_71, %c0_72, %c0_73] : memref<2x1x32xf32, #tpu.memory_space<vmem>>, vector<1x1x32xf32>
    %181 = vector.shape_cast %180 : vector<1x1x32xf32> to vector<1x32xf32>
    %182 = vector.broadcast %181 : vector<1x32xf32> to vector<16x32xf32>
    %183 = arith.addf %179, %182 : vector<16x32xf32>
    %184 = arith.addf %183, %156 : vector<16x32xf32>
    %c0_74 = arith.constant 0 : index
    %c0_75 = arith.constant 0 : index
    %c0_76 = arith.constant 0 : index
    %185 = vector.load %arg14[%c0_74, %c0_75, %c0_76] : memref<2x1x32xf32, #tpu.memory_space<vmem>>, vector<1x1x32xf32>
    %186 = vector.shape_cast %185 : vector<1x1x32xf32> to vector<1x32xf32>
    %c0_77 = arith.constant 0 : index
    %c0_78 = arith.constant 0 : index
    %c0_79 = arith.constant 0 : index
    %187 = vector.load %arg15[%c0_77, %c0_78, %c0_79] : memref<2x1x32xf32, #tpu.memory_space<vmem>>, vector<1x1x32xf32>
    %188 = vector.shape_cast %187 : vector<1x1x32xf32> to vector<1x32xf32>
    %cst_80 = arith.constant dense<0.000000e+00> : vector<16xf32>
    %189 = vector.multi_reduction <add>, %184, %cst_80 [1] : vector<16x32xf32> to vector<16xf32>
    %190 = vector.shape_cast %189 : vector<16xf32> to vector<16x1xf32>
    %cst_81 = arith.constant 3.200000e+01 : f32
    %191 = vector.broadcast %cst_81 : f32 to vector<16x1xf32>
    %192 = arith.divf %190, %191 : vector<16x1xf32>
    %193 = vector.broadcast %192 : vector<16x1xf32> to vector<16x32xf32>
    %194 = arith.subf %184, %193 : vector<16x32xf32>
    %195 = arith.mulf %194, %194 : vector<16x32xf32>
    %cst_82 = arith.constant dense<0.000000e+00> : vector<16xf32>
    %196 = vector.multi_reduction <add>, %195, %cst_82 [1] : vector<16x32xf32> to vector<16xf32>
    %197 = vector.shape_cast %196 : vector<16xf32> to vector<16x1xf32>
    %cst_83 = arith.constant 3.200000e+01 : f32
    %198 = vector.broadcast %cst_83 : f32 to vector<16x1xf32>
    %199 = arith.divf %197, %198 : vector<16x1xf32>
    %200 = vector.broadcast %192 : vector<16x1xf32> to vector<16x32xf32>
    %201 = arith.subf %184, %200 : vector<16x32xf32>
    %cst_84 = arith.constant 9.99999974E-6 : f32
    %202 = vector.broadcast %cst_84 : f32 to vector<16x1xf32>
    %203 = arith.addf %199, %202 : vector<16x1xf32>
    %204 = math.rsqrt %203 : vector<16x1xf32>
    %205 = vector.broadcast %204 : vector<16x1xf32> to vector<16x32xf32>
    %206 = arith.mulf %201, %205 : vector<16x32xf32>
    %207 = vector.broadcast %186 : vector<1x32xf32> to vector<16x32xf32>
    %208 = arith.mulf %206, %207 : vector<16x32xf32>
    %209 = vector.broadcast %188 : vector<1x32xf32> to vector<16x32xf32>
    %210 = arith.addf %208, %209 : vector<16x32xf32>
    %c1 = arith.constant 1 : index
    %c0_85 = arith.constant 0 : index
    %c0_86 = arith.constant 0 : index
    %211 = vector.load %arg4[%c1, %c0_85, %c0_86] : memref<2x32x96xf32, #tpu.memory_space<vmem>>, vector<1x32x96xf32>
    %212 = vector.shape_cast %211 : vector<1x32x96xf32> to vector<32x96xf32>
    %cst_87 = arith.constant dense<0.000000e+00> : vector<16x96xf32>
    %213 = tpu.matmul %210, %212, %cst_87 {dimension_numbers = #tpu.dot_dimension_numbers<[1], [0], [0], [1], [0, 0, 1, 1], [], []>} : vector<16x32xf32>, vector<32x96xf32>, vector<16x96xf32> -> vector<16x96xf32>
    %c1_88 = arith.constant 1 : index
    %c0_89 = arith.constant 0 : index
    %c0_90 = arith.constant 0 : index
    %214 = vector.load %arg5[%c1_88, %c0_89, %c0_90] : memref<2x1x96xf32, #tpu.memory_space<vmem>>, vector<1x1x96xf32>
    %215 = vector.shape_cast %214 : vector<1x1x96xf32> to vector<1x96xf32>
    %216 = vector.broadcast %215 : vector<1x96xf32> to vector<16x96xf32>
    %217 = arith.addf %213, %216 : vector<16x96xf32>
    %218 = vector.extract_strided_slice %217 {offsets = [0, 0], sizes = [16, 32], strides = [1, 1]} : vector<16x96xf32> to vector<16x32xf32>
    %219 = vector.extract_strided_slice %217 {offsets = [0, 32], sizes = [16, 32], strides = [1, 1]} : vector<16x96xf32> to vector<16x32xf32>
    %220 = vector.extract_strided_slice %217 {offsets = [0, 64], sizes = [16, 32], strides = [1, 1]} : vector<16x96xf32> to vector<16x32xf32>
    %221 = vector.extract_strided_slice %218 {offsets = [0, 0], sizes = [8, 32], strides = [1, 1]} : vector<16x32xf32> to vector<8x32xf32>
    %222 = vector.extract_strided_slice %219 {offsets = [0, 0], sizes = [8, 32], strides = [1, 1]} : vector<16x32xf32> to vector<8x32xf32>
    %223 = vector.extract_strided_slice %220 {offsets = [0, 0], sizes = [8, 32], strides = [1, 1]} : vector<16x32xf32> to vector<8x32xf32>
    %224 = vector.extract_strided_slice %25 {offsets = [0, 0], sizes = [1, 8], strides = [1, 1]} : vector<2x8xf32> to vector<1x8xf32>
    %225 = vector.extract_strided_slice %221 {offsets = [0, 0], sizes = [8, 16], strides = [1, 1]} : vector<8x32xf32> to vector<8x16xf32>
    %226 = vector.extract_strided_slice %222 {offsets = [0, 0], sizes = [8, 16], strides = [1, 1]} : vector<8x32xf32> to vector<8x16xf32>
    %227 = vector.extract_strided_slice %223 {offsets = [0, 0], sizes = [8, 16], strides = [1, 1]} : vector<8x32xf32> to vector<8x16xf32>
    %228 = tpu.transpose %226, [1, 0] : vector<8x16xf32> -> vector<16x8xf32>
    %cst_91 = arith.constant dense<0.000000e+00> : vector<8x8xf32>
    %229 = tpu.matmul %225, %228, %cst_91 {dimension_numbers = #tpu.dot_dimension_numbers<[1], [0], [0], [1], [0, 0, 1, 1], [], []>} : vector<8x16xf32>, vector<16x8xf32>, vector<8x8xf32> -> vector<8x8xf32>
    %cst_92 = arith.constant 2.500000e-01 : f32
    %230 = vector.broadcast %cst_92 : f32 to vector<8x8xf32>
    %231 = arith.mulf %229, %230 : vector<8x8xf32>
    %232 = vector.broadcast %224 : vector<1x8xf32> to vector<8x8xf32>
    %233 = arith.addf %231, %232 : vector<8x8xf32>
    %cst_93 = arith.constant dense<0xFF800000> : vector<8xf32>
    %234 = vector.multi_reduction <maximumf>, %233, %cst_93 [1] : vector<8x8xf32> to vector<8xf32>
    %235 = vector.shape_cast %234 : vector<8xf32> to vector<8x1xf32>
    %236 = vector.broadcast %235 : vector<8x1xf32> to vector<8x8xf32>
    %237 = arith.subf %233, %236 : vector<8x8xf32>
    %238 = math.exp %237 : vector<8x8xf32>
    %cst_94 = arith.constant dense<0.000000e+00> : vector<8xf32>
    %239 = vector.multi_reduction <add>, %238, %cst_94 [1] : vector<8x8xf32> to vector<8xf32>
    %240 = vector.shape_cast %239 : vector<8xf32> to vector<8x1xf32>
    %241 = vector.broadcast %240 : vector<8x1xf32> to vector<8x8xf32>
    %242 = arith.divf %238, %241 : vector<8x8xf32>
    %cst_95 = arith.constant dense<0.000000e+00> : vector<8x16xf32>
    %243 = tpu.matmul %242, %227, %cst_95 {dimension_numbers = #tpu.dot_dimension_numbers<[1], [0], [0], [1], [0, 0, 1, 1], [], []>} : vector<8x8xf32>, vector<8x16xf32>, vector<8x16xf32> -> vector<8x16xf32>
    %244 = vector.extract_strided_slice %221 {offsets = [0, 16], sizes = [8, 16], strides = [1, 1]} : vector<8x32xf32> to vector<8x16xf32>
    %245 = vector.extract_strided_slice %222 {offsets = [0, 16], sizes = [8, 16], strides = [1, 1]} : vector<8x32xf32> to vector<8x16xf32>
    %246 = vector.extract_strided_slice %223 {offsets = [0, 16], sizes = [8, 16], strides = [1, 1]} : vector<8x32xf32> to vector<8x16xf32>
    %247 = tpu.transpose %245, [1, 0] : vector<8x16xf32> -> vector<16x8xf32>
    %cst_96 = arith.constant dense<0.000000e+00> : vector<8x8xf32>
    %248 = tpu.matmul %244, %247, %cst_96 {dimension_numbers = #tpu.dot_dimension_numbers<[1], [0], [0], [1], [0, 0, 1, 1], [], []>} : vector<8x16xf32>, vector<16x8xf32>, vector<8x8xf32> -> vector<8x8xf32>
    %cst_97 = arith.constant 2.500000e-01 : f32
    %249 = vector.broadcast %cst_97 : f32 to vector<8x8xf32>
    %250 = arith.mulf %248, %249 : vector<8x8xf32>
    %251 = vector.broadcast %224 : vector<1x8xf32> to vector<8x8xf32>
    %252 = arith.addf %250, %251 : vector<8x8xf32>
    %cst_98 = arith.constant dense<0xFF800000> : vector<8xf32>
    %253 = vector.multi_reduction <maximumf>, %252, %cst_98 [1] : vector<8x8xf32> to vector<8xf32>
    %254 = vector.shape_cast %253 : vector<8xf32> to vector<8x1xf32>
    %255 = vector.broadcast %254 : vector<8x1xf32> to vector<8x8xf32>
    %256 = arith.subf %252, %255 : vector<8x8xf32>
    %257 = math.exp %256 : vector<8x8xf32>
    %cst_99 = arith.constant dense<0.000000e+00> : vector<8xf32>
    %258 = vector.multi_reduction <add>, %257, %cst_99 [1] : vector<8x8xf32> to vector<8xf32>
    %259 = vector.shape_cast %258 : vector<8xf32> to vector<8x1xf32>
    %260 = vector.broadcast %259 : vector<8x1xf32> to vector<8x8xf32>
    %261 = arith.divf %257, %260 : vector<8x8xf32>
    %cst_100 = arith.constant dense<0.000000e+00> : vector<8x16xf32>
    %262 = tpu.matmul %261, %246, %cst_100 {dimension_numbers = #tpu.dot_dimension_numbers<[1], [0], [0], [1], [0, 0, 1, 1], [], []>} : vector<8x8xf32>, vector<8x16xf32>, vector<8x16xf32> -> vector<8x16xf32>
    %263 = tpu.concatenate %243, %262 in 1 : vector<8x16xf32>, vector<8x16xf32> -> vector<8x32xf32>
    %264 = vector.extract_strided_slice %218 {offsets = [8, 0], sizes = [8, 32], strides = [1, 1]} : vector<16x32xf32> to vector<8x32xf32>
    %265 = vector.extract_strided_slice %219 {offsets = [8, 0], sizes = [8, 32], strides = [1, 1]} : vector<16x32xf32> to vector<8x32xf32>
    %266 = vector.extract_strided_slice %220 {offsets = [8, 0], sizes = [8, 32], strides = [1, 1]} : vector<16x32xf32> to vector<8x32xf32>
    %267 = vector.extract_strided_slice %25 {offsets = [1, 0], sizes = [1, 8], strides = [1, 1]} : vector<2x8xf32> to vector<1x8xf32>
    %268 = vector.extract_strided_slice %264 {offsets = [0, 0], sizes = [8, 16], strides = [1, 1]} : vector<8x32xf32> to vector<8x16xf32>
    %269 = vector.extract_strided_slice %265 {offsets = [0, 0], sizes = [8, 16], strides = [1, 1]} : vector<8x32xf32> to vector<8x16xf32>
    %270 = vector.extract_strided_slice %266 {offsets = [0, 0], sizes = [8, 16], strides = [1, 1]} : vector<8x32xf32> to vector<8x16xf32>
    %271 = tpu.transpose %269, [1, 0] : vector<8x16xf32> -> vector<16x8xf32>
    %cst_101 = arith.constant dense<0.000000e+00> : vector<8x8xf32>
    %272 = tpu.matmul %268, %271, %cst_101 {dimension_numbers = #tpu.dot_dimension_numbers<[1], [0], [0], [1], [0, 0, 1, 1], [], []>} : vector<8x16xf32>, vector<16x8xf32>, vector<8x8xf32> -> vector<8x8xf32>
    %cst_102 = arith.constant 2.500000e-01 : f32
    %273 = vector.broadcast %cst_102 : f32 to vector<8x8xf32>
    %274 = arith.mulf %272, %273 : vector<8x8xf32>
    %275 = vector.broadcast %267 : vector<1x8xf32> to vector<8x8xf32>
    %276 = arith.addf %274, %275 : vector<8x8xf32>
    %cst_103 = arith.constant dense<0xFF800000> : vector<8xf32>
    %277 = vector.multi_reduction <maximumf>, %276, %cst_103 [1] : vector<8x8xf32> to vector<8xf32>
    %278 = vector.shape_cast %277 : vector<8xf32> to vector<8x1xf32>
    %279 = vector.broadcast %278 : vector<8x1xf32> to vector<8x8xf32>
    %280 = arith.subf %276, %279 : vector<8x8xf32>
    %281 = math.exp %280 : vector<8x8xf32>
    %cst_104 = arith.constant dense<0.000000e+00> : vector<8xf32>
    %282 = vector.multi_reduction <add>, %281, %cst_104 [1] : vector<8x8xf32> to vector<8xf32>
    %283 = vector.shape_cast %282 : vector<8xf32> to vector<8x1xf32>
    %284 = vector.broadcast %283 : vector<8x1xf32> to vector<8x8xf32>
    %285 = arith.divf %281, %284 : vector<8x8xf32>
    %cst_105 = arith.constant dense<0.000000e+00> : vector<8x16xf32>
    %286 = tpu.matmul %285, %270, %cst_105 {dimension_numbers = #tpu.dot_dimension_numbers<[1], [0], [0], [1], [0, 0, 1, 1], [], []>} : vector<8x8xf32>, vector<8x16xf32>, vector<8x16xf32> -> vector<8x16xf32>
    %287 = vector.extract_strided_slice %264 {offsets = [0, 16], sizes = [8, 16], strides = [1, 1]} : vector<8x32xf32> to vector<8x16xf32>
    %288 = vector.extract_strided_slice %265 {offsets = [0, 16], sizes = [8, 16], strides = [1, 1]} : vector<8x32xf32> to vector<8x16xf32>
    %289 = vector.extract_strided_slice %266 {offsets = [0, 16], sizes = [8, 16], strides = [1, 1]} : vector<8x32xf32> to vector<8x16xf32>
    %290 = tpu.transpose %288, [1, 0] : vector<8x16xf32> -> vector<16x8xf32>
    %cst_106 = arith.constant dense<0.000000e+00> : vector<8x8xf32>
    %291 = tpu.matmul %287, %290, %cst_106 {dimension_numbers = #tpu.dot_dimension_numbers<[1], [0], [0], [1], [0, 0, 1, 1], [], []>} : vector<8x16xf32>, vector<16x8xf32>, vector<8x8xf32> -> vector<8x8xf32>
    %cst_107 = arith.constant 2.500000e-01 : f32
    %292 = vector.broadcast %cst_107 : f32 to vector<8x8xf32>
    %293 = arith.mulf %291, %292 : vector<8x8xf32>
    %294 = vector.broadcast %267 : vector<1x8xf32> to vector<8x8xf32>
    %295 = arith.addf %293, %294 : vector<8x8xf32>
    %cst_108 = arith.constant dense<0xFF800000> : vector<8xf32>
    %296 = vector.multi_reduction <maximumf>, %295, %cst_108 [1] : vector<8x8xf32> to vector<8xf32>
    %297 = vector.shape_cast %296 : vector<8xf32> to vector<8x1xf32>
    %298 = vector.broadcast %297 : vector<8x1xf32> to vector<8x8xf32>
    %299 = arith.subf %295, %298 : vector<8x8xf32>
    %300 = math.exp %299 : vector<8x8xf32>
    %cst_109 = arith.constant dense<0.000000e+00> : vector<8xf32>
    %301 = vector.multi_reduction <add>, %300, %cst_109 [1] : vector<8x8xf32> to vector<8xf32>
    %302 = vector.shape_cast %301 : vector<8xf32> to vector<8x1xf32>
    %303 = vector.broadcast %302 : vector<8x1xf32> to vector<8x8xf32>
    %304 = arith.divf %300, %303 : vector<8x8xf32>
    %cst_110 = arith.constant dense<0.000000e+00> : vector<8x16xf32>
    %305 = tpu.matmul %304, %289, %cst_110 {dimension_numbers = #tpu.dot_dimension_numbers<[1], [0], [0], [1], [0, 0, 1, 1], [], []>} : vector<8x8xf32>, vector<8x16xf32>, vector<8x16xf32> -> vector<8x16xf32>
    %306 = tpu.concatenate %286, %305 in 1 : vector<8x16xf32>, vector<8x16xf32> -> vector<8x32xf32>
    %307 = tpu.concatenate %263, %306 in 0 : vector<8x32xf32>, vector<8x32xf32> -> vector<16x32xf32>
    %c1_111 = arith.constant 1 : index
    %c0_112 = arith.constant 0 : index
    %c0_113 = arith.constant 0 : index
    %308 = vector.load %arg6[%c1_111, %c0_112, %c0_113] : memref<2x32x32xf32, #tpu.memory_space<vmem>>, vector<1x32x32xf32>
    %309 = vector.shape_cast %308 : vector<1x32x32xf32> to vector<32x32xf32>
    %cst_114 = arith.constant dense<0.000000e+00> : vector<16x32xf32>
    %310 = tpu.matmul %307, %309, %cst_114 {dimension_numbers = #tpu.dot_dimension_numbers<[1], [0], [0], [1], [0, 0, 1, 1], [], []>} : vector<16x32xf32>, vector<32x32xf32>, vector<16x32xf32> -> vector<16x32xf32>
    %c1_115 = arith.constant 1 : index
    %c0_116 = arith.constant 0 : index
    %c0_117 = arith.constant 0 : index
    %311 = vector.load %arg7[%c1_115, %c0_116, %c0_117] : memref<2x1x32xf32, #tpu.memory_space<vmem>>, vector<1x1x32xf32>
    %312 = vector.shape_cast %311 : vector<1x1x32xf32> to vector<1x32xf32>
    %313 = vector.broadcast %312 : vector<1x32xf32> to vector<16x32xf32>
    %314 = arith.addf %310, %313 : vector<16x32xf32>
    %315 = arith.addf %314, %210 : vector<16x32xf32>
    %c1_118 = arith.constant 1 : index
    %c0_119 = arith.constant 0 : index
    %c0_120 = arith.constant 0 : index
    %316 = vector.load %arg8[%c1_118, %c0_119, %c0_120] : memref<2x1x32xf32, #tpu.memory_space<vmem>>, vector<1x1x32xf32>
    %317 = vector.shape_cast %316 : vector<1x1x32xf32> to vector<1x32xf32>
    %c1_121 = arith.constant 1 : index
    %c0_122 = arith.constant 0 : index
    %c0_123 = arith.constant 0 : index
    %318 = vector.load %arg9[%c1_121, %c0_122, %c0_123] : memref<2x1x32xf32, #tpu.memory_space<vmem>>, vector<1x1x32xf32>
    %319 = vector.shape_cast %318 : vector<1x1x32xf32> to vector<1x32xf32>
    %cst_124 = arith.constant dense<0.000000e+00> : vector<16xf32>
    %320 = vector.multi_reduction <add>, %315, %cst_124 [1] : vector<16x32xf32> to vector<16xf32>
    %321 = vector.shape_cast %320 : vector<16xf32> to vector<16x1xf32>
    %cst_125 = arith.constant 3.200000e+01 : f32
    %322 = vector.broadcast %cst_125 : f32 to vector<16x1xf32>
    %323 = arith.divf %321, %322 : vector<16x1xf32>
    %324 = vector.broadcast %323 : vector<16x1xf32> to vector<16x32xf32>
    %325 = arith.subf %315, %324 : vector<16x32xf32>
    %326 = arith.mulf %325, %325 : vector<16x32xf32>
    %cst_126 = arith.constant dense<0.000000e+00> : vector<16xf32>
    %327 = vector.multi_reduction <add>, %326, %cst_126 [1] : vector<16x32xf32> to vector<16xf32>
    %328 = vector.shape_cast %327 : vector<16xf32> to vector<16x1xf32>
    %cst_127 = arith.constant 3.200000e+01 : f32
    %329 = vector.broadcast %cst_127 : f32 to vector<16x1xf32>
    %330 = arith.divf %328, %329 : vector<16x1xf32>
    %331 = vector.broadcast %323 : vector<16x1xf32> to vector<16x32xf32>
    %332 = arith.subf %315, %331 : vector<16x32xf32>
    %cst_128 = arith.constant 9.99999974E-6 : f32
    %333 = vector.broadcast %cst_128 : f32 to vector<16x1xf32>
    %334 = arith.addf %330, %333 : vector<16x1xf32>
    %335 = math.rsqrt %334 : vector<16x1xf32>
    %336 = vector.broadcast %335 : vector<16x1xf32> to vector<16x32xf32>
    %337 = arith.mulf %332, %336 : vector<16x32xf32>
    %338 = vector.broadcast %317 : vector<1x32xf32> to vector<16x32xf32>
    %339 = arith.mulf %337, %338 : vector<16x32xf32>
    %340 = vector.broadcast %319 : vector<1x32xf32> to vector<16x32xf32>
    %341 = arith.addf %339, %340 : vector<16x32xf32>
    %c1_129 = arith.constant 1 : index
    %c0_130 = arith.constant 0 : index
    %c0_131 = arith.constant 0 : index
    %342 = vector.load %arg10[%c1_129, %c0_130, %c0_131] : memref<2x32x64xf32, #tpu.memory_space<vmem>>, vector<1x32x64xf32>
    %343 = vector.shape_cast %342 : vector<1x32x64xf32> to vector<32x64xf32>
    %cst_132 = arith.constant dense<0.000000e+00> : vector<16x64xf32>
    %344 = tpu.matmul %341, %343, %cst_132 {dimension_numbers = #tpu.dot_dimension_numbers<[1], [0], [0], [1], [0, 0, 1, 1], [], []>} : vector<16x32xf32>, vector<32x64xf32>, vector<16x64xf32> -> vector<16x64xf32>
    %c1_133 = arith.constant 1 : index
    %c0_134 = arith.constant 0 : index
    %c0_135 = arith.constant 0 : index
    %345 = vector.load %arg11[%c1_133, %c0_134, %c0_135] : memref<2x1x64xf32, #tpu.memory_space<vmem>>, vector<1x1x64xf32>
    %346 = vector.shape_cast %345 : vector<1x1x64xf32> to vector<1x64xf32>
    %347 = vector.broadcast %346 : vector<1x64xf32> to vector<16x64xf32>
    %348 = arith.addf %344, %347 : vector<16x64xf32>
    %349 = arith.mulf %348, %348 : vector<16x64xf32>
    %350 = arith.mulf %348, %349 : vector<16x64xf32>
    %cst_136 = arith.constant 4.471500e-02 : f32
    %351 = vector.broadcast %cst_136 : f32 to vector<16x64xf32>
    %352 = arith.mulf %351, %350 : vector<16x64xf32>
    %353 = arith.addf %348, %352 : vector<16x64xf32>
    %cst_137 = arith.constant 0.797884583 : f32
    %354 = vector.broadcast %cst_137 : f32 to vector<16x64xf32>
    %355 = arith.mulf %354, %353 : vector<16x64xf32>
    %356 = math.tanh %355 : vector<16x64xf32>
    %cst_138 = arith.constant 1.000000e+00 : f32
    %357 = vector.broadcast %cst_138 : f32 to vector<16x64xf32>
    %358 = arith.addf %357, %356 : vector<16x64xf32>
    %cst_139 = arith.constant 5.000000e-01 : f32
    %359 = vector.broadcast %cst_139 : f32 to vector<16x64xf32>
    %360 = arith.mulf %359, %358 : vector<16x64xf32>
    %361 = arith.mulf %348, %360 : vector<16x64xf32>
    %c1_140 = arith.constant 1 : index
    %c0_141 = arith.constant 0 : index
    %c0_142 = arith.constant 0 : index
    %362 = vector.load %arg12[%c1_140, %c0_141, %c0_142] : memref<2x64x32xf32, #tpu.memory_space<vmem>>, vector<1x64x32xf32>
    %363 = vector.shape_cast %362 : vector<1x64x32xf32> to vector<64x32xf32>
    %cst_143 = arith.constant dense<0.000000e+00> : vector<16x32xf32>
    %364 = tpu.matmul %361, %363, %cst_143 {dimension_numbers = #tpu.dot_dimension_numbers<[1], [0], [0], [1], [0, 0, 1, 1], [], []>} : vector<16x64xf32>, vector<64x32xf32>, vector<16x32xf32> -> vector<16x32xf32>
    %c1_144 = arith.constant 1 : index
    %c0_145 = arith.constant 0 : index
    %c0_146 = arith.constant 0 : index
    %365 = vector.load %arg13[%c1_144, %c0_145, %c0_146] : memref<2x1x32xf32, #tpu.memory_space<vmem>>, vector<1x1x32xf32>
    %366 = vector.shape_cast %365 : vector<1x1x32xf32> to vector<1x32xf32>
    %367 = vector.broadcast %366 : vector<1x32xf32> to vector<16x32xf32>
    %368 = arith.addf %364, %367 : vector<16x32xf32>
    %369 = arith.addf %368, %341 : vector<16x32xf32>
    %c1_147 = arith.constant 1 : index
    %c0_148 = arith.constant 0 : index
    %c0_149 = arith.constant 0 : index
    %370 = vector.load %arg14[%c1_147, %c0_148, %c0_149] : memref<2x1x32xf32, #tpu.memory_space<vmem>>, vector<1x1x32xf32>
    %371 = vector.shape_cast %370 : vector<1x1x32xf32> to vector<1x32xf32>
    %c1_150 = arith.constant 1 : index
    %c0_151 = arith.constant 0 : index
    %c0_152 = arith.constant 0 : index
    %372 = vector.load %arg15[%c1_150, %c0_151, %c0_152] : memref<2x1x32xf32, #tpu.memory_space<vmem>>, vector<1x1x32xf32>
    %373 = vector.shape_cast %372 : vector<1x1x32xf32> to vector<1x32xf32>
    %cst_153 = arith.constant dense<0.000000e+00> : vector<16xf32>
    %374 = vector.multi_reduction <add>, %369, %cst_153 [1] : vector<16x32xf32> to vector<16xf32>
    %375 = vector.shape_cast %374 : vector<16xf32> to vector<16x1xf32>
    %cst_154 = arith.constant 3.200000e+01 : f32
    %376 = vector.broadcast %cst_154 : f32 to vector<16x1xf32>
    %377 = arith.divf %375, %376 : vector<16x1xf32>
    %378 = vector.broadcast %377 : vector<16x1xf32> to vector<16x32xf32>
    %379 = arith.subf %369, %378 : vector<16x32xf32>
    %380 = arith.mulf %379, %379 : vector<16x32xf32>
    %cst_155 = arith.constant dense<0.000000e+00> : vector<16xf32>
    %381 = vector.multi_reduction <add>, %380, %cst_155 [1] : vector<16x32xf32> to vector<16xf32>
    %382 = vector.shape_cast %381 : vector<16xf32> to vector<16x1xf32>
    %cst_156 = arith.constant 3.200000e+01 : f32
    %383 = vector.broadcast %cst_156 : f32 to vector<16x1xf32>
    %384 = arith.divf %382, %383 : vector<16x1xf32>
    %385 = vector.broadcast %377 : vector<16x1xf32> to vector<16x32xf32>
    %386 = arith.subf %369, %385 : vector<16x32xf32>
    %cst_157 = arith.constant 9.99999974E-6 : f32
    %387 = vector.broadcast %cst_157 : f32 to vector<16x1xf32>
    %388 = arith.addf %384, %387 : vector<16x1xf32>
    %389 = math.rsqrt %388 : vector<16x1xf32>
    %390 = vector.broadcast %389 : vector<16x1xf32> to vector<16x32xf32>
    %391 = arith.mulf %386, %390 : vector<16x32xf32>
    %392 = vector.broadcast %371 : vector<1x32xf32> to vector<16x32xf32>
    %393 = arith.mulf %391, %392 : vector<16x32xf32>
    %394 = vector.broadcast %373 : vector<1x32xf32> to vector<16x32xf32>
    %395 = arith.addf %393, %394 : vector<16x32xf32>
    %c0_158 = arith.constant 0 : index
    %c0_159 = arith.constant 0 : index
    %396 = vector.load %arg16[%c0_158, %c0_159] : memref<32x8xf32, #tpu.memory_space<vmem>>, vector<32x8xf32>
    %cst_160 = arith.constant dense<0.000000e+00> : vector<16x8xf32>
    %397 = tpu.matmul %395, %396, %cst_160 {dimension_numbers = #tpu.dot_dimension_numbers<[1], [0], [0], [1], [0, 0, 1, 1], [], []>} : vector<16x32xf32>, vector<32x8xf32>, vector<16x8xf32> -> vector<16x8xf32>
    %c0_161 = arith.constant 0 : index
    %c0_162 = arith.constant 0 : index
    %398 = vector.load %arg17[%c0_161, %c0_162] : memref<1x8xf32, #tpu.memory_space<vmem>>, vector<1x8xf32>
    %399 = vector.broadcast %398 : vector<1x8xf32> to vector<16x8xf32>
    %400 = arith.addf %397, %399 : vector<16x8xf32>
    %c0_163 = arith.constant 0 : index
    %c0_164 = arith.constant 0 : index
    %401 = vector.load %arg18[%c0_163, %c0_164] : memref<16x8xf32, #tpu.memory_space<vmem>>, vector<16x8xf32>
    tpu.vector_store %arg18[%c0_163, %c0_164], %400 {strides = array<i32>} : memref<16x8xf32, #tpu.memory_space<vmem>>, vector<16x8xf32>,
    return
  }
}

</mosaic_0001>

<llo_original>
// kernel: xlmr_ner_forward.1
$region0: #{xlmr_ner_forward.1}
  #allocation0 [shape = 'u32[]', space=smem, size = 0x4, offset = 0x4, fixed_abs, tag = 'smem constant byte address 0x4 - core index']
  #allocation1 [shape = 'u32[144,128]{1,0:T(1,128)}', space=vmem, size = 0x12000, scoped, tag = 'internal scratch']
  %s0 = inlined_call_operand.vmem [shape: f32[16,32], index: 0, kind: input, shape index: {}]
  %s1 = inlined_call_operand.vmem [shape: f32[2,8], index: 1, kind: input, shape index: {}]
  %s2 = inlined_call_operand.vmem [shape: f32[1,32], index: 2, kind: input, shape index: {}]
  %s3 = inlined_call_operand.vmem [shape: f32[1,32], index: 3, kind: input, shape index: {}]
  %s4 = inlined_call_operand.vmem [shape: f32[2,32,96], index: 4, kind: input, shape index: {}]
  %s5 = inlined_call_operand.vmem [shape: f32[2,1,96], index: 5, kind: input, shape index: {}]
  %s6 = inlined_call_operand.vmem [shape: f32[2,32,32], index: 6, kind: input, shape index: {}]
  %s7 = inlined_call_operand.vmem [shape: f32[2,1,32], index: 7, kind: input, shape index: {}]
  %s8 = inlined_call_operand.vmem [shape: f32[2,1,32], index: 8, kind: input, shape index: {}]
  %s9 = inlined_call_operand.vmem [shape: f32[2,1,32], index: 9, kind: input, shape index: {}]
  %s10 = inlined_call_operand.vmem [shape: f32[2,32,64], index: 10, kind: input, shape index: {}]
  %s11 = inlined_call_operand.vmem [shape: f32[2,1,64], index: 11, kind: input, shape index: {}]
  %s12 = inlined_call_operand.vmem [shape: f32[2,64,32], index: 12, kind: input, shape index: {}]
  %s13 = inlined_call_operand.vmem [shape: f32[2,1,32], index: 13, kind: input, shape index: {}]
  %s14 = inlined_call_operand.vmem [shape: f32[2,1,32], index: 14, kind: input, shape index: {}]
  %s15 = inlined_call_operand.vmem [shape: f32[2,1,32], index: 15, kind: input, shape index: {}]
  %s16 = inlined_call_operand.vmem [shape: f32[32,8], index: 16, kind: input, shape index: {}]
  %s17 = inlined_call_operand.vmem [shape: f32[1,8], index: 17, kind: input, shape index: {}]
  %s18 = inlined_call_operand.vmem [shape: f32[16,8], index: 18, kind: output, shape index: {}]
  %s19 = sld [smem:[#allocation0]]
  $region82: #{xlmr_ner_forward.1} parent=0
    _
  %s21 = ssub.s32 1, %s19
  %s22 = scalar_select 0, %s21, %s19
  // Predicated region
  $region2: #{xlmr_ner_forward.1} parent=0 // pred_check
    _
  $region3: #{xlmr_ner_forward.1} parent=0 // pred_check_branch
    %24 = sbr.rel (0) target = $region5
  $region4: #{xlmr_ner_forward.1} parent=0 // pred_region
    _
  $region5: #{xlmr_ner_forward.1} parent=0 // pred_fallthru
    _
  // Predicated region
  $region6: #{xlmr_ner_forward.1} parent=0 // pred_check
    _
  $region7: #{xlmr_ner_forward.1} parent=0 // pred_check_branch
    %26 = sbr.rel (0) target = $region9
  $region8: #{xlmr_ner_forward.1} parent=0 // pred_region
    _
  $region9: #{xlmr_ner_forward.1} parent=0 // pred_fallthru
    _
  // Predicated region
  $region10: #{xlmr_ner_forward.1} parent=0 // pred_check
    _
  $region11: #{xlmr_ner_forward.1} parent=0 // pred_check_branch
    %28 = sbr.rel (0) target = $region13
  $region12: #{xlmr_ner_forward.1} parent=0 // pred_region
    _
  $region13: #{xlmr_ner_forward.1} parent=0 // pred_fallthru
    _
  // Predicated region
  $region14: #{xlmr_ner_forward.1} parent=0 // pred_check
    _
  $region15: #{xlmr_ner_forward.1} parent=0 // pred_check_branch
    %30 = sbr.rel (0) target = $region17
  $region16: #{xlmr_ner_forward.1} parent=0 // pred_region
    _
  $region17: #{xlmr_ner_forward.1} parent=0 // pred_fallthru
    _
  // Predicated region
  $region18: #{xlmr_ner_forward.1} parent=0 // pred_check
    _
  $region19: #{xlmr_ner_forward.1} parent=0 // pred_check_branch
    %32 = sbr.rel (0) target = $region21
  $region20: #{xlmr_ner_forward.1} parent=0 // pred_region
    _
  $region21: #{xlmr_ner_forward.1} parent=0 // pred_fallthru
    _
  // Predicated region
  $region22: #{xlmr_ner_forward.1} parent=0 // pred_check
    _
  $region23: #{xlmr_ner_forward.1} parent=0 // pred_check_branch
    %34 = sbr.rel (0) target = $region25
  $region24: #{xlmr_ner_forward.1} parent=0 // pred_region
    _
  $region25: #{xlmr_ner_forward.1} parent=0 // pred_fallthru
    _
  // Predicated region
  $region26: #{xlmr_ner_forward.1} parent=0 // pred_check
    _
  $region27: #{xlmr_ner_forward.1} parent=0 // pred_check_branch
    %36 = sbr.rel (0) target = $region29
  $region28: #{xlmr_ner_forward.1} parent=0 // pred_region
    _
  $region29: #{xlmr_ner_forward.1} parent=0 // pred_fallthru
    _
  // Predicated region
  $region30: #{xlmr_ner_forward.1} parent=0 // pred_check
    _
  $region31: #{xlmr_ner_forward.1} parent=0 // pred_check_branch
    %38 = sbr.rel (0) target = $region33
  $region32: #{xlmr_ner_forward.1} parent=0 // pred_region
    _
  $region33: #{xlmr_ner_forward.1} parent=0 // pred_fallthru
    _
  // Predicated region
  $region34: #{xlmr_ner_forward.1} parent=0 // pred_check
    _
  $region35: #{xlmr_ner_forward.1} parent=0 // pred_check_branch
    %40 = sbr.rel (0) target = $region37
  $region36: #{xlmr_ner_forward.1} parent=0 // pred_region
    _
  $region37: #{xlmr_ner_forward.1} parent=0 // pred_fallthru
    _
  // Predicated region
  $region38: #{xlmr_ner_forward.1} parent=0 // pred_check
    _
  $region39: #{xlmr_ner_forward.1} parent=0 // pred_check_branch
    %42 = sbr.rel (0) target = $region41
  $region40: #{xlmr_ner_forward.1} parent=0 // pred_region
    _
  $region41: #{xlmr_ner_forward.1} parent=0 // pred_fallthru
    _
  // Predicated region
  $region42: #{xlmr_ner_forward.1} parent=0 // pred_check
    _
  $region43: #{xlmr_ner_forward.1} parent=0 // pred_check_branch
    %44 = sbr.rel (0) target = $region45
  $region44: #{xlmr_ner_forward.1} parent=0 // pred_region
    _
  $region45: #{xlmr_ner_forward.1} parent=0 // pred_fallthru
    _
  // Predicated region
  $region46: #{xlmr_ner_forward.1} parent=0 // pred_check
    _
  $region47: #{xlmr_ner_forward.1} parent=0 // pred_check_branch
    %46 = sbr.rel (0) target = $region49
  $region48: #{xlmr_ner_forward.1} parent=0 // pred_region
    _
  $region49: #{xlmr_ner_forward.1} parent=0 // pred_fallthru
    _
  // Predicated region
  $region50: #{xlmr_ner_forward.1} parent=0 // pred_check
    _
  $region51: #{xlmr_ner_forward.1} parent=0 // pred_check_branch
    %48 = sbr.rel (0) target = $region53
  $region52: #{xlmr_ner_forward.1} parent=0 // pred_region
    _
  $region53: #{xlmr_ner_forward.1} parent=0 // pred_fallthru
    _
  // Predicated region
  $region54: #{xlmr_ner_forward.1} parent=0 // pred_check
    _
  $region55: #{xlmr_ner_forward.1} parent=0 // pred_check_branch
    %50 = sbr.rel (0) target = $region57
  $region56: #{xlmr_ner_forward.1} parent=0 // pred_region
    _
  $region57: #{xlmr_ner_forward.1} parent=0 // pred_fallthru
    _
  // Predicated region
  $region58: #{xlmr_ner_forward.1} parent=0 // pred_check
    _
  $region59: #{xlmr_ner_forward.1} parent=0 // pred_check_branch
    %52 = sbr.rel (0) target = $region61
  $region60: #{xlmr_ner_forward.1} parent=0 // pred_region
    _
  $region61: #{xlmr_ner_forward.1} parent=0 // pred_fallthru
    _
  // Predicated region
  $region62: #{xlmr_ner_forward.1} parent=0 // pred_check
    _
  $region63: #{xlmr_ner_forward.1} parent=0 // pred_check_branch
    %54 = sbr.rel (0) target = $region65
  $region64: #{xlmr_ner_forward.1} parent=0 // pred_region
    _
  $region65: #{xlmr_ner_forward.1} parent=0 // pred_fallthru
    _
  // Predicated region
  $region66: #{xlmr_ner_forward.1} parent=0 // pred_check
    _
  $region67: #{xlmr_ner_forward.1} parent=0 // pred_check_branch
    %56 = sbr.rel (0) target = $region69
  $region68: #{xlmr_ner_forward.1} parent=0 // pred_region
    _
  $region69: #{xlmr_ner_forward.1} parent=0 // pred_fallthru
    _
  // Predicated region
  $region70: #{xlmr_ner_forward.1} parent=0 // pred_check
    _
  $region71: #{xlmr_ner_forward.1} parent=0 // pred_check_branch
    %58 = sbr.rel (0) target = $region73
  $region72: #{xlmr_ner_forward.1} parent=0 // pred_region
    _
  $region73: #{xlmr_ner_forward.1} parent=0 // pred_fallthru
    _
  %v59 = vld [vmem:[%s0] sm:$0xff]
  %v60 = vld [vmem:[%s0 + $0x8] sm:$0xff]
  %v61 = vld [vmem:[%s2] sm:$0x1]
  %v62 = vld [vmem:[%s3] sm:$0x1]
  %vm63 = vcmask 261120
  %v64 = vsel %vm63, %v59, 0.0
  %65 = vadd.xlane.f32.xlu0 %v64
  %v66 = vpop.xlane.xlu0 %65
  %v67 = vsel %vm63, %v60, 0.0
  %68 = vadd.xlane.f32.xlu0 %v67
  %v69 = vpop.xlane.xlu0 %68
  %v70 = vrcp.pop 32.0
  %v71 = vmul.f32 %v66, %v70
  %v72 = vmul.f32 %v69, %v70
  %v73 = vsub.f32 %v59, %v71
  %v74 = vsub.f32 %v60, %v72
  %v75 = vmul.f32 %v73, %v73
  %v76 = vmul.f32 %v74, %v74
  %v77 = vsel %vm63, %v75, 0.0
  %78 = vadd.xlane.f32.xlu0 %v77
  %v79 = vpop.xlane.xlu0 %78
  %v80 = vsel %vm63, %v76, 0.0
  %81 = vadd.xlane.f32.xlu0 %v80
  %v82 = vpop.xlane.xlu0 %81
  %v83 = vmul.f32 %v79, %v70
  %v84 = vmul.f32 %v82, %v70
  %v85 = vadd.f32 %v83, 1e-05
  %v86 = vadd.f32 %v84, 1e-05
  %v87 = vrsqrt.pop %v85
  %v88 = vrsqrt.pop %v86
  %v89 = vmul.f32 %v73, %v87
  %v90 = vmul.f32 %v74, %v88
  %v92 = vlaneseq
  %v93 = vshrl.u32 %v92, 7
  %v94 = vsub.s32 0, %v93
  %v95 = vrot.slane %v61, %v94
  %v97 = vmul.f32 %v89, %v95
  %v98 = vmul.f32 %v90, %v95
  %v100 = vlaneseq
  %v101 = vshrl.u32 %v100, 7
  %v102 = vsub.s32 0, %v101
  %v103 = vrot.slane %v62, %v102
  %v105 = vadd.f32 %v97, %v103
  %v106 = vadd.f32 %v98, %v103
  %v107 = vld [vmem:[%s1] sm:$0x3]
  %v108 = vld [vmem:[%s4] sm:$0xff]
  %v109 = vld [vmem:[%s4 + $0x8] sm:$0xff]
  %v110 = vld [vmem:[%s4 + $0x10] sm:$0xff]
  %v111 = vld [vmem:[%s4 + $0x18] sm:$0xff]
  %v112 = vld [vmem:[%s5] sm:$0x1]
  %v114 = vlaneseq
  %v115 = vshrl.u32 %v114, 7
  %v116 = vsub.s32 0, %v115
  %v117 = vrot.slane %v112, %v116
  %v120 = vsel %vm63, %v105, 0
  %v123 = vsel %vm63, %v106, 0
  %125 = vmatprep.subr.mxu0 0.0
  %126 = vmatpush1.msra.mxu0 %v108
  %127 = vmatprep.subr.mxu0 0.0
  %128 = vmatpush1.msra.mxu0 %v109
  %129 = vmatprep.subr.mxu0 0.0
  %130 = vmatpush1.msra.mxu0 %v110
  %131 = vmatprep.subr.mxu0 0.0
  %132 = vmatpush1.msra.mxu0 %v111
  %133 = vmatprep.subr.mxu0 0.0
  %134 = vmatpush1.msra.mxu0 0.0
  %135 = vmatprep.subr.mxu0 0.0
  %136 = vmatpush1.msra.mxu0 0.0
  %137 = vmatprep.subr.mxu0 0.0
  %138 = vmatpush1.msra.mxu0 0.0
  %139 = vmatprep.subr.mxu0 0.0
  %140 = vmatpush1.msra.mxu0 0.0
  %141 = vmatprep.subr.mxu0 0.0
  %142 = vmatpush1.msra.mxu0 0.0
  %143 = vmatprep.subr.mxu0 0.0
  %144 = vmatpush1.msra.mxu0 0.0
  %145 = vmatprep.subr.mxu0 0.0
  %146 = vmatpush1.msra.mxu0 0.0
  %147 = vmatprep.subr.mxu0 0.0
  %148 = vmatpush1.msra.mxu0 0.0
  %149 = vmatprep.subr.mxu0 0.0
  %150 = vmatpush1.msra.mxu0 0.0
  %151 = vmatprep.subr.mxu0 0.0
  %152 = vmatpush1.msra.mxu0 0.0
  %153 = vmatprep.subr.mxu0 0.0
  %154 = vmatpush1.msra.mxu0 0.0
  %155 = vmatprep.subr.mxu0 0.0
  %156 = vmatpush1.msra.mxu0 0.0
  %157 = vmatprep.subr.mxu0 0.0
  %158 = vmatpush1.msra.mxu0 0.0
  %159 = vmatprep.subr.mxu0 0.0
  %160 = vmatpush1.msra.mxu0 0.0
  %161 = vmatprep.subr.mxu0 0.0
  %162 = vmatpush1.msra.mxu0 0.0
  %163 = vmatprep.subr.mxu0 0.0
  %164 = vmatpush1.msra.mxu0 0.0
  %165 = vmatprep.subr.mxu0 0.0
  %166 = vmatpush1.msra.mxu0 0.0
  %167 = vmatprep.subr.mxu0 0.0
  %168 = vmatpush1.msra.mxu0 0.0
  %169 = vmatprep.subr.mxu0 0.0
  %170 = vmatpush1.msra.mxu0 0.0
  %171 = vmatprep.subr.mxu0 0.0
  %172 = vmatpush1.msra.mxu0 0.0
  %173 = vmatprep.subr.mxu0 0.0
  %174 = vmatpush1.msra.mxu0 0.0
  %175 = vmatprep.subr.mxu0 0.0
  %176 = vmatpush1.msra.mxu0 0.0
  %177 = vmatprep.subr.mxu0 0.0
  %178 = vmatpush1.msra.mxu0 0.0
  %179 = vmatprep.subr.mxu0 0.0
  %180 = vmatpush1.msra.mxu0 0.0
  %181 = vmatprep.subr.mxu0 0.0
  %182 = vmatpush1.msra.mxu0 0.0
  %183 = vmatprep.subr.mxu0 0.0
  %184 = vmatpush1.msra.mxu0 0.0
  %185 = vmatprep.subr.mxu0 0.0
  %186 = vmatpush1.msra.mxu0 0.0
  %187 = vmatprep.subr.mxu0 0.0
  %188 = vmatpush1.msra.mxu0 0.0
  %189 = vmatprep.mubr.f32.mxu0 0.0
  %190 = vmatmul.mubr.f32.gmra.mrb[0].mxu0 %v120
  %v191 = vpop.f32.mrb[0].mxu0
  %v192 = vadd.f32 %v117, %v191
  %v193 = vpop.f32.mrb[0].mxu0
  %194 = vmatprep.mubr.f32.mxu0 0.0
  %195 = vmatmul.mubr.f32.gmra.mrb[0].mxu0 %v123
  %v196 = vpop.f32.mrb[0].mxu0
  %v197 = vadd.f32 %v117, %v196
  %v198 = vpop.f32.mrb[0].mxu0
  %199 = vdwg.mxu0
  %201 = vrot.lane.b32.xlu0 %v192, 96
  %v202 = vpop.permute.xlu0 %201
  %vm203 = vcmask 130048
  %v204 = vsel %vm203, %v192, 0
  %v206 = vsel %vm203, %v202, 0
  %208 = vmatprep.subr.mxu0 0.0
  %209 = vmatpush1.xpose.msra.mxu0 %v206
  %210 = vmatprep.subr.mxu0 0.0
  %211 = vmatpush1.xpose.msra.mxu0 0.0
  %212 = vmatprep.subr.mxu0 0.0
  %213 = vmatpush1.xpose.msra.mxu0 0.0
  %214 = vmatprep.subr.mxu0 0.0
  %215 = vmatpush1.xpose.msra.mxu0 0.0
  %216 = vmatprep.subr.mxu0 0.0
  %217 = vmatpush1.xpose.msra.mxu0 0.0
  %218 = vmatprep.subr.mxu0 0.0
  %219 = vmatpush1.xpose.msra.mxu0 0.0
  %220 = vmatprep.subr.mxu0 0.0
  %221 = vmatpush1.xpose.msra.mxu0 0.0
  %222 = vmatprep.subr.mxu0 0.0
  %223 = vmatpush1.xpose.msra.mxu0 0.0
  %224 = vmatprep.subr.mxu0 0.0
  %225 = vmatpush1.xpose.msra.mxu0 0.0
  %226 = vmatprep.subr.mxu0 0.0
  %227 = vmatpush1.xpose.msra.mxu0 0.0
  %228 = vmatprep.subr.mxu0 0.0
  %229 = vmatpush1.xpose.msra.mxu0 0.0
  %230 = vmatprep.subr.mxu0 0.0
  %231 = vmatpush1.xpose.msra.mxu0 0.0
  %232 = vmatprep.subr.mxu0 0.0
  %233 = vmatpush1.xpose.msra.mxu0 0.0
  %234 = vmatprep.subr.mxu0 0.0
  %235 = vmatpush1.xpose.msra.mxu0 0.0
  %236 = vmatprep.subr.mxu0 0.0
  %237 = vmatpush1.xpose.msra.mxu0 0.0
  %238 = vmatprep.subr.mxu0 0.0
  %239 = vmatpush1.xpose.msra.mxu0 0.0
  %240 = vmatprep.subr.mxu0 0.0
  %241 = vmatpush1.xpose.msra.mxu0 0.0
  %242 = vmatprep.subr.mxu0 0.0
  %243 = vmatpush1.xpose.msra.mxu0 0.0
  %244 = vmatprep.subr.mxu0 0.0
  %245 = vmatpush1.xpose.msra.mxu0 0.0
  %246 = vmatprep.subr.mxu0 0.0
  %247 = vmatpush1.xpose.msra.mxu0 0.0
  %248 = vmatprep.subr.mxu0 0.0
  %249 = vmatpush1.xpose.msra.mxu0 0.0
  %250 = vmatprep.subr.mxu0 0.0
  %251 = vmatpush1.xpose.msra.mxu0 0.0
  %252 = vmatprep.subr.mxu0 0.0
  %253 = vmatpush1.xpose.msra.mxu0 0.0
  %254 = vmatprep.subr.mxu0 0.0
  %255 = vmatpush1.xpose.msra.mxu0 0.0
  %256 = vmatprep.subr.mxu0 0.0
  %257 = vmatpush1.xpose.msra.mxu0 0.0
  %258 = vmatprep.subr.mxu0 0.0
  %259 = vmatpush1.xpose.msra.mxu0 0.0
  %260 = vmatprep.subr.mxu0 0.0
  %261 = vmatpush1.xpose.msra.mxu0 0.0
  %262 = vmatprep.subr.mxu0 0.0
  %263 = vmatpush1.xpose.msra.mxu0 0.0
  %264 = vmatprep.subr.mxu0 0.0
  %265 = vmatpush1.xpose.msra.mxu0 0.0
  %266 = vmatprep.subr.mxu0 0.0
  %267 = vmatpush1.xpose.msra.mxu0 0.0
  %268 = vmatprep.subr.mxu0 0.0
  %269 = vmatpush1.xpose.msra.mxu0 0.0
  %270 = vmatprep.subr.mxu0 0.0
  %271 = vmatpush1.xpose.msra.mxu0 0.0
  %272 = vmatprep.mubr.f32.mxu0 0.0
  %273 = vmatmul.mubr.f32.gmra.mrb[0].mxu0 %v204
  %v274 = vpop.f32.mrb[0].mxu0
  %v275 = vadd.f32 0.0, %v274
  %v276 = vpop.f32.mrb[0].mxu0
  %277 = vdwg.mxu0
  %v278 = vmul.f32 %v275, 0.25
  %v279 = vlaneseq
  %v280 = vshrl.u32 %v279, 7
  %v281 = vsub.s32 0, %v280
  %v282 = vrot.slane %v107, %v281
  %v283 = vadd.f32 %v278, %v282
  %vm284 = vcmask 64512
  %v285 = vsel %vm284, %v283, -inf
  %286 = vmax.xlane.f32.xlu0 %v285
  %v287 = vpop.xlane.xlu0 %286
  %v288 = vsub.f32 %v283, %v287
  %v289 = vmul.f32 %v288, 1.442695
  %v290 = vpow.pop %v289
  %v291 = vsel %vm284, %v290, 0.0
  %292 = vadd.xlane.f32.xlu0 %v291
  %v293 = vpop.xlane.xlu0 %292
  %v294 = vrcp.pop %v293
  %v295 = vmul.f32 %v290, %v294
  %296 = vrot.lane.b32.xlu0 %v192, 64
  %v297 = vpop.permute.xlu0 %296
  %v300 = vsel %vm284, %v295, 0
  %302 = vmatprep.subr.mxu0 0.0
  %303 = vmatpush1.msra.mxu0 %v297
  %304 = vmatprep.subr.mxu0 0.0
  %305 = vmatpush1.msra.mxu0 0.0
  %306 = vmatprep.subr.mxu0 0.0
  %307 = vmatpush1.msra.mxu0 0.0
  %308 = vmatprep.subr.mxu0 0.0
  %309 = vmatpush1.msra.mxu0 0.0
  %310 = vmatprep.subr.mxu0 0.0
  %311 = vmatpush1.msra.mxu0 0.0
  %312 = vmatprep.subr.mxu0 0.0
  %313 = vmatpush1.msra.mxu0 0.0
  %314 = vmatprep.subr.mxu0 0.0
  %315 = vmatpush1.msra.mxu0 0.0
  %316 = vmatprep.subr.mxu0 0.0
  %317 = vmatpush1.msra.mxu0 0.0
  %318 = vmatprep.subr.mxu0 0.0
  %319 = vmatpush1.msra.mxu0 0.0
  %320 = vmatprep.subr.mxu0 0.0
  %321 = vmatpush1.msra.mxu0 0.0
  %322 = vmatprep.subr.mxu0 0.0
  %323 = vmatpush1.msra.mxu0 0.0
  %324 = vmatprep.subr.mxu0 0.0
  %325 = vmatpush1.msra.mxu0 0.0
  %326 = vmatprep.subr.mxu0 0.0
  %327 = vmatpush1.msra.mxu0 0.0
  %328 = vmatprep.subr.mxu0 0.0
  %329 = vmatpush1.msra.mxu0 0.0
  %330 = vmatprep.subr.mxu0 0.0
  %331 = vmatpush1.msra.mxu0 0.0
  %332 = vmatprep.subr.mxu0 0.0
  %333 = vmatpush1.msra.mxu0 0.0
  %334 = vmatprep.subr.mxu0 0.0
  %335 = vmatpush1.msra.mxu0 0.0
  %336 = vmatprep.subr.mxu0 0.0
  %337 = vmatpush1.msra.mxu0 0.0
  %338 = vmatprep.subr.mxu0 0.0
  %339 = vmatpush1.msra.mxu0 0.0
  %340 = vmatprep.subr.mxu0 0.0
  %341 = vmatpush1.msra.mxu0 0.0
  %342 = vmatprep.subr.mxu0 0.0
  %343 = vmatpush1.msra.mxu0 0.0
  %344 = vmatprep.subr.mxu0 0.0
  %345 = vmatpush1.msra.mxu0 0.0
  %346 = vmatprep.subr.mxu0 0.0
  %347 = vmatpush1.msra.mxu0 0.0
  %348 = vmatprep.subr.mxu0 0.0
  %349 = vmatpush1.msra.mxu0 0.0
  %350 = vmatprep.subr.mxu0 0.0
  %351 = vmatpush1.msra.mxu0 0.0
  %352 = vmatprep.subr.mxu0 0.0
  %353 = vmatpush1.msra.mxu0 0.0
  %354 = vmatprep.subr.mxu0 0.0
  %355 = vmatpush1.msra.mxu0 0.0
  %356 = vmatprep.subr.mxu0 0.0
  %357 = vmatpush1.msra.mxu0 0.0
  %358 = vmatprep.subr.mxu0 0.0
  %359 = vmatpush1.msra.mxu0 0.0
  %360 = vmatprep.subr.mxu0 0.0
  %361 = vmatpush1.msra.mxu0 0.0
  %362 = vmatprep.subr.mxu0 0.0
  %363 = vmatpush1.msra.mxu0 0.0
  %364 = vmatprep.subr.mxu0 0.0
  %365 = vmatpush1.msra.mxu0 0.0
  %366 = vmatprep.mubr.f32.mxu0 0.0
  %367 = vmatmul.mubr.f32.gmra.mrb[0].mxu0 %v300
  %v368 = vpop.f32.mrb[0].mxu0
  %v369 = vadd.f32 0.0, %v368
  %v370 = vpop.f32.mrb[0].mxu0
  %371 = vdwg.mxu0
  %372 = vrot.lane.b32.xlu0 %v192, 112
  %v373 = vpop.permute.xlu0 %372
  %374 = vrot.lane.b32.xlu0 %v192, 80
  %v375 = vpop.permute.xlu0 %374
  %v376 = vsel %vm203, %v373, 0
  %v378 = vsel %vm203, %v375, 0
  %380 = vmatprep.subr.mxu0 0.0
  %381 = vmatpush1.xpose.msra.mxu0 %v378
  %382 = vmatprep.subr.mxu0 0.0
  %383 = vmatpush1.xpose.msra.mxu0 0.0
  %384 = vmatprep.subr.mxu0 0.0
  %385 = vmatpush1.xpose.msra.mxu0 0.0
  %386 = vmatprep.subr.mxu0 0.0
  %387 = vmatpush1.xpose.msra.mxu0 0.0
  %388 = vmatprep.subr.mxu0 0.0
  %389 = vmatpush1.xpose.msra.mxu0 0.0
  %390 = vmatprep.subr.mxu0 0.0
  %391 = vmatpush1.xpose.msra.mxu0 0.0
  %392 = vmatprep.subr.mxu0 0.0
  %393 = vmatpush1.xpose.msra.mxu0 0.0
  %394 = vmatprep.subr.mxu0 0.0
  %395 = vmatpush1.xpose.msra.mxu0 0.0
  %396 = vmatprep.subr.mxu0 0.0
  %397 = vmatpush1.xpose.msra.mxu0 0.0
  %398 = vmatprep.subr.mxu0 0.0
  %399 = vmatpush1.xpose.msra.mxu0 0.0
  %400 = vmatprep.subr.mxu0 0.0
  %401 = vmatpush1.xpose.msra.mxu0 0.0
  %402 = vmatprep.subr.mxu0 0.0
  %403 = vmatpush1.xpose.msra.mxu0 0.0
  %404 = vmatprep.subr.mxu0 0.0
  %405 = vmatpush1.xpose.msra.mxu0 0.0
  %406 = vmatprep.subr.mxu0 0.0
  %407 = vmatpush1.xpose.msra.mxu0 0.0
  %408 = vmatprep.subr.mxu0 0.0
  %409 = vmatpush1.xpose.msra.mxu0 0.0
  %410 = vmatprep.subr.mxu0 0.0
  %411 = vmatpush1.xpose.msra.mxu0 0.0
  %412 = vmatprep.subr.mxu0 0.0
  %413 = vmatpush1.xpose.msra.mxu0 0.0
  %414 = vmatprep.subr.mxu0 0.0
  %415 = vmatpush1.xpose.msra.mxu0 0.0
  %416 = vmatprep.subr.mxu0 0.0
  %417 = vmatpush1.xpose.msra.mxu0 0.0
  %418 = vmatprep.subr.mxu0 0.0
  %419 = vmatpush1.xpose.msra.mxu0 0.0
  %420 = vmatprep.subr.mxu0 0.0
  %421 = vmatpush1.xpose.msra.mxu0 0.0
  %422 = vmatprep.subr.mxu0 0.0
  %423 = vmatpush1.xpose.msra.mxu0 0.0
  %424 = vmatprep.subr.mxu0 0.0
  %425 = vmatpush1.xpose.msra.mxu0 0.0
  %426 = vmatprep.subr.mxu0 0.0
  %427 = vmatpush1.xpose.msra.mxu0 0.0
  %428 = vmatprep.subr.mxu0 0.0
  %429 = vmatpush1.xpose.msra.mxu0 0.0
  %430 = vmatprep.subr.mxu0 0.0
  %431 = vmatpush1.xpose.msra.mxu0 0.0
  %432 = vmatprep.subr.mxu0 0.0
  %433 = vmatpush1.xpose.msra.mxu0 0.0
  %434 = vmatprep.subr.mxu0 0.0
  %435 = vmatpush1.xpose.msra.mxu0 0.0
  %436 = vmatprep.subr.mxu0 0.0
  %437 = vmatpush1.xpose.msra.mxu0 0.0
  %438 = vmatprep.subr.mxu0 0.0
  %439 = vmatpush1.xpose.msra.mxu0 0.0
  %440 = vmatprep.subr.mxu0 0.0
  %441 = vmatpush1.xpose.msra.mxu0 0.0
  %442 = vmatprep.subr.mxu0 0.0
  %443 = vmatpush1.xpose.msra.mxu0 0.0
  %444 = vmatprep.mubr.f32.mxu0 0.0
  %445 = vmatmul.mubr.f32.gmra.mrb[0].mxu0 %v376
  %v446 = vpop.f32.mrb[0].mxu0
  %v447 = vadd.f32 0.0, %v446
  %v448 = vpop.f32.mrb[0].mxu0
  %449 = vdwg.mxu0
  %v450 = vmul.f32 %v447, 0.25
  %v451 = vadd.f32 %v450, %v282
  %v452 = vsel %vm284, %v451, -inf
  %453 = vmax.xlane.f32.xlu0 %v452
  %v454 = vpop.xlane.xlu0 %453
  %v455 = vsub.f32 %v451, %v454
  %v456 = vmul.f32 %v455, 1.442695
  %v457 = vpow.pop %v456
  %v458 = vsel %vm284, %v457, 0.0
  %459 = vadd.xlane.f32.xlu0 %v458
  %v460 = vpop.xlane.xlu0 %459
  %v461 = vrcp.pop %v460
  %v462 = vmul.f32 %v457, %v461
  %463 = vrot.lane.b32.xlu0 %v192, 48
  %v464 = vpop.permute.xlu0 %463
  %v467 = vsel %vm284, %v462, 0
  %469 = vmatprep.subr.mxu0 0.0
  %470 = vmatpush1.msra.mxu0 %v464
  %471 = vmatprep.subr.mxu0 0.0
  %472 = vmatpush1.msra.mxu0 0.0
  %473 = vmatprep.subr.mxu0 0.0
  %474 = vmatpush1.msra.mxu0 0.0
  %475 = vmatprep.subr.mxu0 0.0
  %476 = vmatpush1.msra.mxu0 0.0
  %477 = vmatprep.subr.mxu0 0.0
  %478 = vmatpush1.msra.mxu0 0.0
  %479 = vmatprep.subr.mxu0 0.0
  %480 = vmatpush1.msra.mxu0 0.0
  %481 = vmatprep.subr.mxu0 0.0
  %482 = vmatpush1.msra.mxu0 0.0
  %483 = vmatprep.subr.mxu0 0.0
  %484 = vmatpush1.msra.mxu0 0.0
  %485 = vmatprep.subr.mxu0 0.0
  %486 = vmatpush1.msra.mxu0 0.0
  %487 = vmatprep.subr.mxu0 0.0
  %488 = vmatpush1.msra.mxu0 0.0
  %489 = vmatprep.subr.mxu0 0.0
  %490 = vmatpush1.msra.mxu0 0.0
  %491 = vmatprep.subr.mxu0 0.0
  %492 = vmatpush1.msra.mxu0 0.0
  %493 = vmatprep.subr.mxu0 0.0
  %494 = vmatpush1.msra.mxu0 0.0
  %495 = vmatprep.subr.mxu0 0.0
  %496 = vmatpush1.msra.mxu0 0.0
  %497 = vmatprep.subr.mxu0 0.0
  %498 = vmatpush1.msra.mxu0 0.0
  %499 = vmatprep.subr.mxu0 0.0
  %500 = vmatpush1.msra.mxu0 0.0
  %501 = vmatprep.subr.mxu0 0.0
  %502 = vmatpush1.msra.mxu0 0.0
  %503 = vmatprep.subr.mxu0 0.0
  %504 = vmatpush1.msra.mxu0 0.0
  %505 = vmatprep.subr.mxu0 0.0
  %506 = vmatpush1.msra.mxu0 0.0
  %507 = vmatprep.subr.mxu0 0.0
  %508 = vmatpush1.msra.mxu0 0.0
  %509 = vmatprep.subr.mxu0 0.0
  %510 = vmatpush1.msra.mxu0 0.0
  %511 = vmatprep.subr.mxu0 0.0
  %512 = vmatpush1.msra.mxu0 0.0
  %513 = vmatprep.subr.mxu0 0.0
  %514 = vmatpush1.msra.mxu0 0.0
  %515 = vmatprep.subr.mxu0 0.0
  %516 = vmatpush1.msra.mxu0 0.0
  %517 = vmatprep.subr.mxu0 0.0
  %518 = vmatpush1.msra.mxu0 0.0
  %519 = vmatprep.subr.mxu0 0.0
  %520 = vmatpush1.msra.mxu0 0.0
  %521 = vmatprep.subr.mxu0 0.0
  %522 = vmatpush1.msra.mxu0 0.0
  %523 = vmatprep.subr.mxu0 0.0
  %524 = vmatpush1.msra.mxu0 0.0
  %525 = vmatprep.subr.mxu0 0.0
  %526 = vmatpush1.msra.mxu0 0.0
  %527 = vmatprep.subr.mxu0 0.0
  %528 = vmatpush1.msra.mxu0 0.0
  %529 = vmatprep.subr.mxu0 0.0
  %530 = vmatpush1.msra.mxu0 0.0
  %531 = vmatprep.subr.mxu0 0.0
  %532 = vmatpush1.msra.mxu0 0.0
  %533 = vmatprep.mubr.f32.mxu0 0.0
  %534 = vmatmul.mubr.f32.gmra.mrb[0].mxu0 %v467
  %v535 = vpop.f32.mrb[0].mxu0
  %v536 = vadd.f32 0.0, %v535
  %v537 = vpop.f32.mrb[0].mxu0
  %538 = vdwg.mxu0
  %540 = vrot.lane.b32.xlu0 %v536, 16
  %v541 = vpop.permute.xlu0 %540
  %v543 = vsel %vm203, %v369, %v541
  %545 = vrot.lane.b32.xlu0 %v197, 96
  %v546 = vpop.permute.xlu0 %545
  %v547 = vsel %vm203, %v197, 0
  %v549 = vsel %vm203, %v546, 0
  %551 = vmatprep.subr.mxu0 0.0
  %552 = vmatpush1.xpose.msra.mxu0 %v549
  %553 = vmatprep.subr.mxu0 0.0
  %554 = vmatpush1.xpose.msra.mxu0 0.0
  %555 = vmatprep.subr.mxu0 0.0
  %556 = vmatpush1.xpose.msra.mxu0 0.0
  %557 = vmatprep.subr.mxu0 0.0
  %558 = vmatpush1.xpose.msra.mxu0 0.0
  %559 = vmatprep.subr.mxu0 0.0
  %560 = vmatpush1.xpose.msra.mxu0 0.0
  %561 = vmatprep.subr.mxu0 0.0
  %562 = vmatpush1.xpose.msra.mxu0 0.0
  %563 = vmatprep.subr.mxu0 0.0
  %564 = vmatpush1.xpose.msra.mxu0 0.0
  %565 = vmatprep.subr.mxu0 0.0
  %566 = vmatpush1.xpose.msra.mxu0 0.0
  %567 = vmatprep.subr.mxu0 0.0
  %568 = vmatpush1.xpose.msra.mxu0 0.0
  %569 = vmatprep.subr.mxu0 0.0
  %570 = vmatpush1.xpose.msra.mxu0 0.0
  %571 = vmatprep.subr.mxu0 0.0
  %572 = vmatpush1.xpose.msra.mxu0 0.0
  %573 = vmatprep.subr.mxu0 0.0
  %574 = vmatpush1.xpose.msra.mxu0 0.0
  %575 = vmatprep.subr.mxu0 0.0
  %576 = vmatpush1.xpose.msra.mxu0 0.0
  %577 = vmatprep.subr.mxu0 0.0
  %578 = vmatpush1.xpose.msra.mxu0 0.0
  %579 = vmatprep.subr.mxu0 0.0
  %580 = vmatpush1.xpose.msra.mxu0 0.0
  %581 = vmatprep.subr.mxu0 0.0
  %582 = vmatpush1.xpose.msra.mxu0 0.0
  %583 = vmatprep.subr.mxu0 0.0
  %584 = vmatpush1.xpose.msra.mxu0 0.0
  %585 = vmatprep.subr.mxu0 0.0
  %586 = vmatpush1.xpose.msra.mxu0 0.0
  %587 = vmatprep.subr.mxu0 0.0
  %588 = vmatpush1.xpose.msra.mxu0 0.0
  %589 = vmatprep.subr.mxu0 0.0
  %590 = vmatpush1.xpose.msra.mxu0 0.0
  %591 = vmatprep.subr.mxu0 0.0
  %592 = vmatpush1.xpose.msra.mxu0 0.0
  %593 = vmatprep.subr.mxu0 0.0
  %594 = vmatpush1.xpose.msra.mxu0 0.0
  %595 = vmatprep.subr.mxu0 0.0
  %596 = vmatpush1.xpose.msra.mxu0 0.0
  %597 = vmatprep.subr.mxu0 0.0
  %598 = vmatpush1.xpose.msra.mxu0 0.0
  %599 = vmatprep.subr.mxu0 0.0
  %600 = vmatpush1.xpose.msra.mxu0 0.0
  %601 = vmatprep.subr.mxu0 0.0
  %602 = vmatpush1.xpose.msra.mxu0 0.0
  %603 = vmatprep.subr.mxu0 0.0
  %604 = vmatpush1.xpose.msra.mxu0 0.0
  %605 = vmatprep.subr.mxu0 0.0
  %606 = vmatpush1.xpose.msra.mxu0 0.0
  %607 = vmatprep.subr.mxu0 0.0
  %608 = vmatpush1.xpose.msra.mxu0 0.0
  %609 = vmatprep.subr.mxu0 0.0
  %610 = vmatpush1.xpose.msra.mxu0 0.0
  %611 = vmatprep.subr.mxu0 0.0
  %612 = vmatpush1.xpose.msra.mxu0 0.0
  %613 = vmatprep.subr.mxu0 0.0
  %614 = vmatpush1.xpose.msra.mxu0 0.0
  %615 = vmatprep.mubr.f32.mxu0 0.0
  %616 = vmatmul.mubr.f32.gmra.mrb[0].mxu0 %v547
  %v617 = vpop.f32.mrb[0].mxu0
  %v618 = vadd.f32 0.0, %v617
  %v619 = vpop.f32.mrb[0].mxu0
  %620 = vdwg.mxu0
  %v621 = vmul.f32 %v618, 0.25
  %v622 = vlaneseq
  %v623 = vshrl.u32 %v622, 7
  %v624 = vsub.s32 1, %v623
  %v625 = vrot.slane %v107, %v624
  %v626 = vadd.f32 %v621, %v625
  %v627 = vsel %vm284, %v626, -inf
  %628 = vmax.xlane.f32.xlu0 %v627
  %v629 = vpop.xlane.xlu0 %628
  %v630 = vsub.f32 %v626, %v629
  %v631 = vmul.f32 %v630, 1.442695
  %v632 = vpow.pop %v631
  %v633 = vsel %vm284, %v632, 0.0
  %634 = vadd.xlane.f32.xlu0 %v633
  %v635 = vpop.xlane.xlu0 %634
  %v636 = vrcp.pop %v635
  %v637 = vmul.f32 %v632, %v636
  %638 = vrot.lane.b32.xlu0 %v197, 64
  %v639 = vpop.permute.xlu0 %638
  %v642 = vsel %vm284, %v637, 0
  %644 = vmatprep.subr.mxu0 0.0
  %645 = vmatpush1.msra.mxu0 %v639
  %646 = vmatprep.subr.mxu0 0.0
  %647 = vmatpush1.msra.mxu0 0.0
  %648 = vmatprep.subr.mxu0 0.0
  %649 = vmatpush1.msra.mxu0 0.0
  %650 = vmatprep.subr.mxu0 0.0
  %651 = vmatpush1.msra.mxu0 0.0
  %652 = vmatprep.subr.mxu0 0.0
  %653 = vmatpush1.msra.mxu0 0.0
  %654 = vmatprep.subr.mxu0 0.0
  %655 = vmatpush1.msra.mxu0 0.0
  %656 = vmatprep.subr.mxu0 0.0
  %657 = vmatpush1.msra.mxu0 0.0
  %658 = vmatprep.subr.mxu0 0.0
  %659 = vmatpush1.msra.mxu0 0.0
  %660 = vmatprep.subr.mxu0 0.0
  %661 = vmatpush1.msra.mxu0 0.0
  %662 = vmatprep.subr.mxu0 0.0
  %663 = vmatpush1.msra.mxu0 0.0
  %664 = vmatprep.subr.mxu0 0.0
  %665 = vmatpush1.msra.mxu0 0.0
  %666 = vmatprep.subr.mxu0 0.0
  %667 = vmatpush1.msra.mxu0 0.0
  %668 = vmatprep.subr.mxu0 0.0
  %669 = vmatpush1.msra.mxu0 0.0
  %670 = vmatprep.subr.mxu0 0.0
  %671 = vmatpush1.msra.mxu0 0.0
  %672 = vmatprep.subr.mxu0 0.0
  %673 = vmatpush1.msra.mxu0 0.0
  %674 = vmatprep.subr.mxu0 0.0
  %675 = vmatpush1.msra.mxu0 0.0
  %676 = vmatprep.subr.mxu0 0.0
  %677 = vmatpush1.msra.mxu0 0.0
  %678 = vmatprep.subr.mxu0 0.0
  %679 = vmatpush1.msra.mxu0 0.0
  %680 = vmatprep.subr.mxu0 0.0
  %681 = vmatpush1.msra.mxu0 0.0
  %682 = vmatprep.subr.mxu0 0.0
  %683 = vmatpush1.msra.mxu0 0.0
  %684 = vmatprep.subr.mxu0 0.0
  %685 = vmatpush1.msra.mxu0 0.0
  %686 = vmatprep.subr.mxu0 0.0
  %687 = vmatpush1.msra.mxu0 0.0
  %688 = vmatprep.subr.mxu0 0.0
  %689 = vmatpush1.msra.mxu0 0.0
  %690 = vmatprep.subr.mxu0 0.0
  %691 = vmatpush1.msra.mxu0 0.0
  %692 = vmatprep.subr.mxu0 0.0
  %693 = vmatpush1.msra.mxu0 0.0
  %694 = vmatprep.subr.mxu0 0.0
  %695 = vmatpush1.msra.mxu0 0.0
  %696 = vmatprep.subr.mxu0 0.0
  %697 = vmatpush1.msra.mxu0 0.0
  %698 = vmatprep.subr.mxu0 0.0
  %699 = vmatpush1.msra.mxu0 0.0
  %700 = vmatprep.subr.mxu0 0.0
  %701 = vmatpush1.msra.mxu0 0.0
  %702 = vmatprep.subr.mxu0 0.0
  %703 = vmatpush1.msra.mxu0 0.0
  %704 = vmatprep.subr.mxu0 0.0
  %705 = vmatpush1.msra.mxu0 0.0
  %706 = vmatprep.subr.mxu0 0.0
  %707 = vmatpush1.msra.mxu0 0.0
  %708 = vmatprep.mubr.f32.mxu0 0.0
  %709 = vmatmul.mubr.f32.gmra.mrb[0].mxu0 %v642
  %v710 = vpop.f32.mrb[0].mxu0
  %v711 = vadd.f32 0.0, %v710
  %v712 = vpop.f32.mrb[0].mxu0
  %713 = vdwg.mxu0
  %714 = vrot.lane.b32.xlu0 %v197, 112
  %v715 = vpop.permute.xlu0 %714
  %716 = vrot.lane.b32.xlu0 %v197, 80
  %v717 = vpop.permute.xlu0 %716
  %v718 = vsel %vm203, %v715, 0
  %v720 = vsel %vm203, %v717, 0
  %722 = vmatprep.subr.mxu0 0.0
  %723 = vmatpush1.xpose.msra.mxu0 %v720
  %724 = vmatprep.subr.mxu0 0.0
  %725 = vmatpush1.xpose.msra.mxu0 0.0
  %726 = vmatprep.subr.mxu0 0.0
  %727 = vmatpush1.xpose.msra.mxu0 0.0
  %728 = vmatprep.subr.mxu0 0.0
  %729 = vmatpush1.xpose.msra.mxu0 0.0
  %730 = vmatprep.subr.mxu0 0.0
  %731 = vmatpush1.xpose.msra.mxu0 0.0
  %732 = vmatprep.subr.mxu0 0.0
  %733 = vmatpush1.xpose.msra.mxu0 0.0
  %734 = vmatprep.subr.mxu0 0.0
  %735 = vmatpush1.xpose.msra.mxu0 0.0
  %736 = vmatprep.subr.mxu0 0.0
  %737 = vmatpush1.xpose.msra.mxu0 0.0
  %738 = vmatprep.subr.mxu0 0.0
  %739 = vmatpush1.xpose.msra.mxu0 0.0
  %740 = vmatprep.subr.mxu0 0.0
  %741 = vmatpush1.xpose.msra.mxu0 0.0
  %742 = vmatprep.subr.mxu0 0.0
  %743 = vmatpush1.xpose.msra.mxu0 0.0
  %744 = vmatprep.subr.mxu0 0.0
  %745 = vmatpush1.xpose.msra.mxu0 0.0
  %746 = vmatprep.subr.mxu0 0.0
  %747 = vmatpush1.xpose.msra.mxu0 0.0
  %748 = vmatprep.subr.mxu0 0.0
  %749 = vmatpush1.xpose.msra.mxu0 0.0
  %750 = vmatprep.subr.mxu0 0.0
  %751 = vmatpush1.xpose.msra.mxu0 0.0
  %752 = vmatprep.subr.mxu0 0.0
  %753 = vmatpush1.xpose.msra.mxu0 0.0
  %754 = vmatprep.subr.mxu0 0.0
  %755 = vmatpush1.xpose.msra.mxu0 0.0
  %756 = vmatprep.subr.mxu0 0.0
  %757 = vmatpush1.xpose.msra.mxu0 0.0
  %758 = vmatprep.subr.mxu0 0.0
  %759 = vmatpush1.xpose.msra.mxu0 0.0
  %760 = vmatprep.subr.mxu0 0.0
  %761 = vmatpush1.xpose.msra.mxu0 0.0
  %762 = vmatprep.subr.mxu0 0.0
  %763 = vmatpush1.xpose.msra.mxu0 0.0
  %764 = vmatprep.subr.mxu0 0.0
  %765 = vmatpush1.xpose.msra.mxu0 0.0
  %766 = vmatprep.subr.mxu0 0.0
  %767 = vmatpush1.xpose.msra.mxu0 0.0
  %768 = vmatprep.subr.mxu0 0.0
  %769 = vmatpush1.xpose.msra.mxu0 0.0
  %770 = vmatprep.subr.mxu0 0.0
  %771 = vmatpush1.xpose.msra.mxu0 0.0
  %772 = vmatprep.subr.mxu0 0.0
  %773 = vmatpush1.xpose.msra.mxu0 0.0
  %774 = vmatprep.subr.mxu0 0.0
  %775 = vmatpush1.xpose.msra.mxu0 0.0
  %776 = vmatprep.subr.mxu0 0.0
  %777 = vmatpush1.xpose.msra.mxu0 0.0
  %778 = vmatprep.subr.mxu0 0.0
  %779 = vmatpush1.xpose.msra.mxu0 0.0
  %780 = vmatprep.subr.mxu0 0.0
  %781 = vmatpush1.xpose.msra.mxu0 0.0
  %782 = vmatprep.subr.mxu0 0.0
  %783 = vmatpush1.xpose.msra.mxu0 0.0
  %784 = vmatprep.subr.mxu0 0.0
  %785 = vmatpush1.xpose.msra.mxu0 0.0
  %786 = vmatprep.mubr.f32.mxu0 0.0
  %787 = vmatmul.mubr.f32.gmra.mrb[0].mxu0 %v718
  %v788 = vpop.f32.mrb[0].mxu0
  %v789 = vadd.f32 0.0, %v788
  %v790 = vpop.f32.mrb[0].mxu0
  %791 = vdwg.mxu0
  %v792 = vmul.f32 %v789, 0.25
  %v793 = vadd.f32 %v792, %v625
  %v794 = vsel %vm284, %v793, -inf
  %795 = vmax.xlane.f32.xlu0 %v794
  %v796 = vpop.xlane.xlu0 %795
  %v797 = vsub.f32 %v793, %v796
  %v798 = vmul.f32 %v797, 1.442695
  %v799 = vpow.pop %v798
  %v800 = vsel %vm284, %v799, 0.0
  %801 = vadd.xlane.f32.xlu0 %v800
  %v802 = vpop.xlane.xlu0 %801
  %v803 = vrcp.pop %v802
  %v804 = vmul.f32 %v799, %v803
  %805 = vrot.lane.b32.xlu0 %v197, 48
  %v806 = vpop.permute.xlu0 %805
  %v809 = vsel %vm284, %v804, 0
  %811 = vmatprep.subr.mxu0 0.0
  %812 = vmatpush1.msra.mxu0 %v806
  %813 = vmatprep.subr.mxu0 0.0
  %814 = vmatpush1.msra.mxu0 0.0
  %815 = vmatprep.subr.mxu0 0.0
  %816 = vmatpush1.msra.mxu0 0.0
  %817 = vmatprep.subr.mxu0 0.0
  %818 = vmatpush1.msra.mxu0 0.0
  %819 = vmatprep.subr.mxu0 0.0
  %820 = vmatpush1.msra.mxu0 0.0
  %821 = vmatprep.subr.mxu0 0.0
  %822 = vmatpush1.msra.mxu0 0.0
  %823 = vmatprep.subr.mxu0 0.0
  %824 = vmatpush1.msra.mxu0 0.0
  %825 = vmatprep.subr.mxu0 0.0
  %826 = vmatpush1.msra.mxu0 0.0
  %827 = vmatprep.subr.mxu0 0.0
  %828 = vmatpush1.msra.mxu0 0.0
  %829 = vmatprep.subr.mxu0 0.0
  %830 = vmatpush1.msra.mxu0 0.0
  %831 = vmatprep.subr.mxu0 0.0
  %832 = vmatpush1.msra.mxu0 0.0
  %833 = vmatprep.subr.mxu0 0.0
  %834 = vmatpush1.msra.mxu0 0.0
  %835 = vmatprep.subr.mxu0 0.0
  %836 = vmatpush1.msra.mxu0 0.0
  %837 = vmatprep.subr.mxu0 0.0
  %838 = vmatpush1.msra.mxu0 0.0
  %839 = vmatprep.subr.mxu0 0.0
  %840 = vmatpush1.msra.mxu0 0.0
  %841 = vmatprep.subr.mxu0 0.0
  %842 = vmatpush1.msra.mxu0 0.0
  %843 = vmatprep.subr.mxu0 0.0
  %844 = vmatpush1.msra.mxu0 0.0
  %845 = vmatprep.subr.mxu0 0.0
  %846 = vmatpush1.msra.mxu0 0.0
  %847 = vmatprep.subr.mxu0 0.0
  %848 = vmatpush1.msra.mxu0 0.0
  %849 = vmatprep.subr.mxu0 0.0
  %850 = vmatpush1.msra.mxu0 0.0
  %851 = vmatprep.subr.mxu0 0.0
  %852 = vmatpush1.msra.mxu0 0.0
  %853 = vmatprep.subr.mxu0 0.0
  %854 = vmatpush1.msra.mxu0 0.0
  %855 = vmatprep.subr.mxu0 0.0
  %856 = vmatpush1.msra.mxu0 0.0
  %857 = vmatprep.subr.mxu0 0.0
  %858 = vmatpush1.msra.mxu0 0.0
  %859 = vmatprep.subr.mxu0 0.0
  %860 = vmatpush1.msra.mxu0 0.0
  %861 = vmatprep.subr.mxu0 0.0
  %862 = vmatpush1.msra.mxu0 0.0
  %863 = vmatprep.subr.mxu0 0.0
  %864 = vmatpush1.msra.mxu0 0.0
  %865 = vmatprep.subr.mxu0 0.0
  %866 = vmatpush1.msra.mxu0 0.0
  %867 = vmatprep.subr.mxu0 0.0
  %868 = vmatpush1.msra.mxu0 0.0
  %869 = vmatprep.subr.mxu0 0.0
  %870 = vmatpush1.msra.mxu0 0.0
  %871 = vmatprep.subr.mxu0 0.0
  %872 = vmatpush1.msra.mxu0 0.0
  %873 = vmatprep.subr.mxu0 0.0
  %874 = vmatpush1.msra.mxu0 0.0
  %875 = vmatprep.mubr.f32.mxu0 0.0
  %876 = vmatmul.mubr.f32.gmra.mrb[0].mxu0 %v809
  %v877 = vpop.f32.mrb[0].mxu0
  %v878 = vadd.f32 0.0, %v877
  %v879 = vpop.f32.mrb[0].mxu0
  %880 = vdwg.mxu0
  %882 = vrot.lane.b32.xlu0 %v878, 16
  %v883 = vpop.permute.xlu0 %882
  %v885 = vsel %vm203, %v711, %v883
  %v886 = vld [vmem:[%s6] sm:$0xff]
  %v887 = vld [vmem:[%s6 + $0x8] sm:$0xff]
  %v888 = vld [vmem:[%s6 + $0x10] sm:$0xff]
  %v889 = vld [vmem:[%s6 + $0x18] sm:$0xff]
  %v890 = vld [vmem:[%s7] sm:$0x1]
  %v892 = vlaneseq
  %v893 = vshrl.u32 %v892, 7
  %v894 = vsub.s32 0, %v893
  %v895 = vrot.slane %v890, %v894
  %v898 = vsel %vm63, %v543, 0
  %v901 = vsel %vm63, %v885, 0
  %903 = vmatprep.subr.mxu0 0.0
  %904 = vmatpush1.msra.mxu0 %v886
  %905 = vmatprep.subr.mxu0 0.0
  %906 = vmatpush1.msra.mxu0 %v887
  %907 = vmatprep.subr.mxu0 0.0
  %908 = vmatpush1.msra.mxu0 %v888
  %909 = vmatprep.subr.mxu0 0.0
  %910 = vmatpush1.msra.mxu0 %v889
  %911 = vmatprep.subr.mxu0 0.0
  %912 = vmatpush1.msra.mxu0 0.0
  %913 = vmatprep.subr.mxu0 0.0
  %914 = vmatpush1.msra.mxu0 0.0
  %915 = vmatprep.subr.mxu0 0.0
  %916 = vmatpush1.msra.mxu0 0.0
  %917 = vmatprep.subr.mxu0 0.0
  %918 = vmatpush1.msra.mxu0 0.0
  %919 = vmatprep.subr.mxu0 0.0
  %920 = vmatpush1.msra.mxu0 0.0
  %921 = vmatprep.subr.mxu0 0.0
  %922 = vmatpush1.msra.mxu0 0.0
  %923 = vmatprep.subr.mxu0 0.0
  %924 = vmatpush1.msra.mxu0 0.0
  %925 = vmatprep.subr.mxu0 0.0
  %926 = vmatpush1.msra.mxu0 0.0
  %927 = vmatprep.subr.mxu0 0.0
  %928 = vmatpush1.msra.mxu0 0.0
  %929 = vmatprep.subr.mxu0 0.0
  %930 = vmatpush1.msra.mxu0 0.0
  %931 = vmatprep.subr.mxu0 0.0
  %932 = vmatpush1.msra.mxu0 0.0
  %933 = vmatprep.subr.mxu0 0.0
  %934 = vmatpush1.msra.mxu0 0.0
  %935 = vmatprep.subr.mxu0 0.0
  %936 = vmatpush1.msra.mxu0 0.0
  %937 = vmatprep.subr.mxu0 0.0
  %938 = vmatpush1.msra.mxu0 0.0
  %939 = vmatprep.subr.mxu0 0.0
  %940 = vmatpush1.msra.mxu0 0.0
  %941 = vmatprep.subr.mxu0 0.0
  %942 = vmatpush1.msra.mxu0 0.0
  %943 = vmatprep.subr.mxu0 0.0
  %944 = vmatpush1.msra.mxu0 0.0
  %945 = vmatprep.subr.mxu0 0.0
  %946 = vmatpush1.msra.mxu0 0.0
  %947 = vmatprep.subr.mxu0 0.0
  %948 = vmatpush1.msra.mxu0 0.0
  %949 = vmatprep.subr.mxu0 0.0
  %950 = vmatpush1.msra.mxu0 0.0
  %951 = vmatprep.subr.mxu0 0.0
  %952 = vmatpush1.msra.mxu0 0.0
  %953 = vmatprep.subr.mxu0 0.0
  %954 = vmatpush1.msra.mxu0 0.0
  %955 = vmatprep.subr.mxu0 0.0
  %956 = vmatpush1.msra.mxu0 0.0
  %957 = vmatprep.subr.mxu0 0.0
  %958 = vmatpush1.msra.mxu0 0.0
  %959 = vmatprep.subr.mxu0 0.0
  %960 = vmatpush1.msra.mxu0 0.0
  %961 = vmatprep.subr.mxu0 0.0
  %962 = vmatpush1.msra.mxu0 0.0
  %963 = vmatprep.subr.mxu0 0.0
  %964 = vmatpush1.msra.mxu0 0.0
  %965 = vmatprep.subr.mxu0 0.0
  %966 = vmatpush1.msra.mxu0 0.0
  %967 = vmatprep.mubr.f32.mxu0 0.0
  %968 = vmatmul.mubr.f32.gmra.mrb[0].mxu0 %v898
  %v969 = vpop.f32.mrb[0].mxu0
  %v970 = vadd.f32 %v895, %v969
  %v971 = vpop.f32.mrb[0].mxu0
  %972 = vmatprep.mubr.f32.mxu0 0.0
  %973 = vmatmul.mubr.f32.gmra.mrb[0].mxu0 %v901
  %v974 = vpop.f32.mrb[0].mxu0
  %v975 = vadd.f32 %v895, %v974
  %v976 = vpop.f32.mrb[0].mxu0
  %977 = vdwg.mxu0
  %v978 = vadd.f32 %v970, %v105
  %v979 = vadd.f32 %v975, %v106
  %v980 = vld [vmem:[%s8] sm:$0x1]
  %v981 = vld [vmem:[%s9] sm:$0x1]
  %v982 = vsel %vm63, %v978, 0.0
  %983 = vadd.xlane.f32.xlu0 %v982
  %v984 = vpop.xlane.xlu0 %983
  %v985 = vsel %vm63, %v979, 0.0
  %986 = vadd.xlane.f32.xlu0 %v985
  %v987 = vpop.xlane.xlu0 %986
  %v988 = vmul.f32 %v984, %v70
  %v989 = vmul.f32 %v987, %v70
  %v990 = vsub.f32 %v978, %v988
  %v991 = vsub.f32 %v979, %v989
  %v992 = vmul.f32 %v990, %v990
  %v993 = vmul.f32 %v991, %v991
  %v994 = vsel %vm63, %v992, 0.0
  %995 = vadd.xlane.f32.xlu0 %v994
  %v996 = vpop.xlane.xlu0 %995
  %v997 = vsel %vm63, %v993, 0.0
  %998 = vadd.xlane.f32.xlu0 %v997
  %v999 = vpop.xlane.xlu0 %998
  %v1000 = vmul.f32 %v996, %v70
  %v1001 = vmul.f32 %v999, %v70
  %v1002 = vadd.f32 %v1000, 1e-05
  %v1003 = vadd.f32 %v1001, 1e-05
  %v1004 = vrsqrt.pop %v1002
  %v1005 = vrsqrt.pop %v1003
  %v1006 = vmul.f32 %v990, %v1004
  %v1007 = vmul.f32 %v991, %v1005
  %v1009 = vlaneseq
  %v1010 = vshrl.u32 %v1009, 7
  %v1011 = vsub.s32 0, %v1010
  %v1012 = vrot.slane %v980, %v1011
  %v1014 = vmul.f32 %v1006, %v1012
  %v1015 = vmul.f32 %v1007, %v1012
  %v1017 = vlaneseq
  %v1018 = vshrl.u32 %v1017, 7
  %v1019 = vsub.s32 0, %v1018
  %v1020 = vrot.slane %v981, %v1019
  %v1022 = vadd.f32 %v1014, %v1020
  %v1023 = vadd.f32 %v1015, %v1020
  %v1024 = vld [vmem:[%s10] sm:$0xff]
  %v1025 = vld [vmem:[%s10 + $0x8] sm:$0xff]
  %v1026 = vld [vmem:[%s10 + $0x10] sm:$0xff]
  %v1027 = vld [vmem:[%s10 + $0x18] sm:$0xff]
  %v1028 = vld [vmem:[%s11] sm:$0x1]
  %v1030 = vlaneseq
  %v1031 = vshrl.u32 %v1030, 7
  %v1032 = vsub.s32 0, %v1031
  %v1033 = vrot.slane %v1028, %v1032
  %v1036 = vsel %vm63, %v1022, 0
  %v1039 = vsel %vm63, %v1023, 0
  %1041 = vmatprep.subr.mxu0 0.0
  %1042 = vmatpush1.msra.mxu0 %v1024
  %1043 = vmatprep.subr.mxu0 0.0
  %1044 = vmatpush1.msra.mxu0 %v1025
  %1045 = vmatprep.subr.mxu0 0.0
  %1046 = vmatpush1.msra.mxu0 %v1026
  %1047 = vmatprep.subr.mxu0 0.0
  %1048 = vmatpush1.msra.mxu0 %v1027
  %1049 = vmatprep.subr.mxu0 0.0
  %1050 = vmatpush1.msra.mxu0 0.0
  %1051 = vmatprep.subr.mxu0 0.0
  %1052 = vmatpush1.msra.mxu0 0.0
  %1053 = vmatprep.subr.mxu0 0.0
  %1054 = vmatpush1.msra.mxu0 0.0
  %1055 = vmatprep.subr.mxu0 0.0
  %1056 = vmatpush1.msra.mxu0 0.0
  %1057 = vmatprep.subr.mxu0 0.0
  %1058 = vmatpush1.msra.mxu0 0.0
  %1059 = vmatprep.subr.mxu0 0.0
  %1060 = vmatpush1.msra.mxu0 0.0
  %1061 = vmatprep.subr.mxu0 0.0
  %1062 = vmatpush1.msra.mxu0 0.0
  %1063 = vmatprep.subr.mxu0 0.0
  %1064 = vmatpush1.msra.mxu0 0.0
  %1065 = vmatprep.subr.mxu0 0.0
  %1066 = vmatpush1.msra.mxu0 0.0
  %1067 = vmatprep.subr.mxu0 0.0
  %1068 = vmatpush1.msra.mxu0 0.0
  %1069 = vmatprep.subr.mxu0 0.0
  %1070 = vmatpush1.msra.mxu0 0.0
  %1071 = vmatprep.subr.mxu0 0.0
  %1072 = vmatpush1.msra.mxu0 0.0
  %1073 = vmatprep.subr.mxu0 0.0
  %1074 = vmatpush1.msra.mxu0 0.0
  %1075 = vmatprep.subr.mxu0 0.0
  %1076 = vmatpush1.msra.mxu0 0.0
  %1077 = vmatprep.subr.mxu0 0.0
  %1078 = vmatpush1.msra.mxu0 0.0
  %1079 = vmatprep.subr.mxu0 0.0
  %1080 = vmatpush1.msra.mxu0 0.0
  %1081 = vmatprep.subr.mxu0 0.0
  %1082 = vmatpush1.msra.mxu0 0.0
  %1083 = vmatprep.subr.mxu0 0.0
  %1084 = vmatpush1.msra.mxu0 0.0
  %1085 = vmatprep.subr.mxu0 0.0
  %1086 = vmatpush1.msra.mxu0 0.0
  %1087 = vmatprep.subr.mxu0 0.0
  %1088 = vmatpush1.msra.mxu0 0.0
  %1089 = vmatprep.subr.mxu0 0.0
  %1090 = vmatpush1.msra.mxu0 0.0
  %1091 = vmatprep.subr.mxu0 0.0
  %1092 = vmatpush1.msra.mxu0 0.0
  %1093 = vmatprep.subr.mxu0 0.0
  %1094 = vmatpush1.msra.mxu0 0.0
  %1095 = vmatprep.subr.mxu0 0.0
  %1096 = vmatpush1.msra.mxu0 0.0
  %1097 = vmatprep.subr.mxu0 0.0
  %1098 = vmatpush1.msra.mxu0 0.0
  %1099 = vmatprep.subr.mxu0 0.0
  %1100 = vmatpush1.msra.mxu0 0.0
  %1101 = vmatprep.subr.mxu0 0.0
  %1102 = vmatpush1.msra.mxu0 0.0
  %1103 = vmatprep.subr.mxu0 0.0
  %1104 = vmatpush1.msra.mxu0 0.0
  %1105 = vmatprep.mubr.f32.mxu0 0.0
  %1106 = vmatmul.mubr.f32.gmra.mrb[0].mxu0 %v1036
  %v1107 = vpop.f32.mrb[0].mxu0
  %v1108 = vadd.f32 %v1033, %v1107
  %v1109 = vpop.f32.mrb[0].mxu0
  %1110 = vmatprep.mubr.f32.mxu0 0.0
  %1111 = vmatmul.mubr.f32.gmra.mrb[0].mxu0 %v1039
  %v1112 = vpop.f32.mrb[0].mxu0
  %v1113 = vadd.f32 %v1033, %v1112
  %v1114 = vpop.f32.mrb[0].mxu0
  %1115 = vdwg.mxu0
  %v1116 = vmul.f32 %v1108, %v1108
  %v1117 = vmul.f32 %v1113, %v1113
  %v1118 = vmul.f32 %v1108, %v1116
  %v1119 = vmul.f32 %v1113, %v1117
  %v1120 = vmul.f32 %v1118, 0.044715
  %v1121 = vmul.f32 %v1119, 0.044715
  %v1122 = vadd.f32 %v1108, %v1120
  %v1123 = vadd.f32 %v1113, %v1121
  %v1124 = vmul.f32 %v1122, 0.7978846
  %v1125 = vmul.f32 %v1123, 0.7978846
  %v1126 = vtanh.pop %v1124
  %v1127 = vtanh.pop %v1125
  %v1128 = vadd.f32 %v1126, 1.0
  %v1129 = vadd.f32 %v1127, 1.0
  %v1130 = vmul.f32 %v1128, 0.5
  %v1131 = vmul.f32 %v1129, 0.5
  %v1132 = vmul.f32 %v1108, %v1130
  %v1133 = vmul.f32 %v1113, %v1131
  %v1134 = vld [vmem:[%s12] sm:$0xff]
  %v1135 = vld [vmem:[%s12 + $0x8] sm:$0xff]
  %v1136 = vld [vmem:[%s12 + $0x10] sm:$0xff]
  %v1137 = vld [vmem:[%s12 + $0x18] sm:$0xff]
  %v1138 = vld [vmem:[%s12 + $0x20] sm:$0xff]
  %v1139 = vld [vmem:[%s12 + $0x28] sm:$0xff]
  %v1140 = vld [vmem:[%s12 + $0x30] sm:$0xff]
  %v1141 = vld [vmem:[%s12 + $0x38] sm:$0xff]
  %v1142 = vld [vmem:[%s13] sm:$0x1]
  %v1144 = vlaneseq
  %v1145 = vshrl.u32 %v1144, 7
  %v1146 = vsub.s32 0, %v1145
  %v1147 = vrot.slane %v1142, %v1146
  %vm1149 = vcmask 523264
  %v1151 = vsel %vm1149, %v1132, 0
  %v1154 = vsel %vm1149, %v1133, 0
  %1156 = vmatprep.subr.mxu0 0.0
  %1157 = vmatpush1.msra.mxu0 %v1134
  %1158 = vmatprep.subr.mxu0 0.0
  %1159 = vmatpush1.msra.mxu0 %v1135
  %1160 = vmatprep.subr.mxu0 0.0
  %1161 = vmatpush1.msra.mxu0 %v1136
  %1162 = vmatprep.subr.mxu0 0.0
  %1163 = vmatpush1.msra.mxu0 %v1137
  %1164 = vmatprep.subr.mxu0 0.0
  %1165 = vmatpush1.msra.mxu0 %v1138
  %1166 = vmatprep.subr.mxu0 0.0
  %1167 = vmatpush1.msra.mxu0 %v1139
  %1168 = vmatprep.subr.mxu0 0.0
  %1169 = vmatpush1.msra.mxu0 %v1140
  %1170 = vmatprep.subr.mxu0 0.0
  %1171 = vmatpush1.msra.mxu0 %v1141
  %1172 = vmatprep.subr.mxu0 0.0
  %1173 = vmatpush1.msra.mxu0 0.0
  %1174 = vmatprep.subr.mxu0 0.0
  %1175 = vmatpush1.msra.mxu0 0.0
  %1176 = vmatprep.subr.mxu0 0.0
  %1177 = vmatpush1.msra.mxu0 0.0
  %1178 = vmatprep.subr.mxu0 0.0
  %1179 = vmatpush1.msra.mxu0 0.0
  %1180 = vmatprep.subr.mxu0 0.0
  %1181 = vmatpush1.msra.mxu0 0.0
  %1182 = vmatprep.subr.mxu0 0.0
  %1183 = vmatpush1.msra.mxu0 0.0
  %1184 = vmatprep.subr.mxu0 0.0
  %1185 = vmatpush1.msra.mxu0 0.0
  %1186 = vmatprep.subr.mxu0 0.0
  %1187 = vmatpush1.msra.mxu0 0.0
  %1188 = vmatprep.subr.mxu0 0.0
  %1189 = vmatpush1.msra.mxu0 0.0
  %1190 = vmatprep.subr.mxu0 0.0
  %1191 = vmatpush1.msra.mxu0 0.0
  %1192 = vmatprep.subr.mxu0 0.0
  %1193 = vmatpush1.msra.mxu0 0.0
  %1194 = vmatprep.subr.mxu0 0.0
  %1195 = vmatpush1.msra.mxu0 0.0
  %1196 = vmatprep.subr.mxu0 0.0
  %1197 = vmatpush1.msra.mxu0 0.0
  %1198 = vmatprep.subr.mxu0 0.0
  %1199 = vmatpush1.msra.mxu0 0.0
  %1200 = vmatprep.subr.mxu0 0.0
  %1201 = vmatpush1.msra.mxu0 0.0
  %1202 = vmatprep.subr.mxu0 0.0
  %1203 = vmatpush1.msra.mxu0 0.0
  %1204 = vmatprep.subr.mxu0 0.0
  %1205 = vmatpush1.msra.mxu0 0.0
  %1206 = vmatprep.subr.mxu0 0.0
  %1207 = vmatpush1.msra.mxu0 0.0
  %1208 = vmatprep.subr.mxu0 0.0
  %1209 = vmatpush1.msra.mxu0 0.0
  %1210 = vmatprep.subr.mxu0 0.0
  %1211 = vmatpush1.msra.mxu0 0.0
  %1212 = vmatprep.subr.mxu0 0.0
  %1213 = vmatpush1.msra.mxu0 0.0
  %1214 = vmatprep.subr.mxu0 0.0
  %1215 = vmatpush1.msra.mxu0 0.0
  %1216 = vmatprep.subr.mxu0 0.0
  %1217 = vmatpush1.msra.mxu0 0.0
  %1218 = vmatprep.subr.mxu0 0.0
  %1219 = vmatpush1.msra.mxu0 0.0
  %1220 = vmatprep.mubr.f32.mxu0 0.0
  %1221 = vmatmul.mubr.f32.gmra.mrb[0].mxu0 %v1151
  %v1222 = vpop.f32.mrb[0].mxu0
  %v1223 = vadd.f32 %v1147, %v1222
  %v1224 = vpop.f32.mrb[0].mxu0
  %1225 = vmatprep.mubr.f32.mxu0 0.0
  %1226 = vmatmul.mubr.f32.gmra.mrb[0].mxu0 %v1154
  %v1227 = vpop.f32.mrb[0].mxu0
  %v1228 = vadd.f32 %v1147, %v1227
  %v1229 = vpop.f32.mrb[0].mxu0
  %1230 = vdwg.mxu0
  %v1231 = vadd.f32 %v1223, %v1022
  %v1232 = vadd.f32 %v1228, %v1023
  %v1233 = vld [vmem:[%s14] sm:$0x1]
  %v1234 = vld [vmem:[%s15] sm:$0x1]
  %v1235 = vsel %vm63, %v1231, 0.0
  %1236 = vadd.xlane.f32.xlu0 %v1235
  %v1237 = vpop.xlane.xlu0 %1236
  %v1238 = vsel %vm63, %v1232, 0.0
  %1239 = vadd.xlane.f32.xlu0 %v1238
  %v1240 = vpop.xlane.xlu0 %1239
  %v1241 = vmul.f32 %v1237, %v70
  %v1242 = vmul.f32 %v1240, %v70
  %v1243 = vsub.f32 %v1231, %v1241
  %v1244 = vsub.f32 %v1232, %v1242
  %v1245 = vmul.f32 %v1243, %v1243
  %v1246 = vmul.f32 %v1244, %v1244
  %v1247 = vsel %vm63, %v1245, 0.0
  %1248 = vadd.xlane.f32.xlu0 %v1247
  %v1249 = vpop.xlane.xlu0 %1248
  %v1250 = vsel %vm63, %v1246, 0.0
  %1251 = vadd.xlane.f32.xlu0 %v1250
  %v1252 = vpop.xlane.xlu0 %1251
  %v1253 = vmul.f32 %v1249, %v70
  %v1254 = vmul.f32 %v1252, %v70
  %v1255 = vadd.f32 %v1253, 1e-05
  %v1256 = vadd.f32 %v1254, 1e-05
  %v1257 = vrsqrt.pop %v1255
  %v1258 = vrsqrt.pop %v1256
  %v1259 = vmul.f32 %v1243, %v1257
  %v1260 = vmul.f32 %v1244, %v1258
  %v1262 = vlaneseq
  %v1263 = vshrl.u32 %v1262, 7
  %v1264 = vsub.s32 0, %v1263
  %v1265 = vrot.slane %v1233, %v1264
  %v1267 = vmul.f32 %v1259, %v1265
  %v1268 = vmul.f32 %v1260, %v1265
  %v1270 = vlaneseq
  %v1271 = vshrl.u32 %v1270, 7
  %v1272 = vsub.s32 0, %v1271
  %v1273 = vrot.slane %v1234, %v1272
  %v1275 = vadd.f32 %v1267, %v1273
  %v1276 = vadd.f32 %v1268, %v1273
  %s1277 = scalar_lea.vmem %s4, 32
  %v1278 = vld [vmem:[%s1277] sm:$0xff]
  %v1279 = vld [vmem:[%s1277 + $0x8] sm:$0xff]
  %v1280 = vld [vmem:[%s1277 + $0x10] sm:$0xff]
  %v1281 = vld [vmem:[%s1277 + $0x18] sm:$0xff]
  %s1282 = scalar_lea.vmem %s5, 1
  %v1283 = vld [vmem:[%s1282] sm:$0x1]
  %v1285 = vlaneseq
  %v1286 = vshrl.u32 %v1285, 7
  %v1287 = vsub.s32 0, %v1286
  %v1288 = vrot.slane %v1283, %v1287
  %v1291 = vsel %vm63, %v1275, 0
  %v1294 = vsel %vm63, %v1276, 0
  %1296 = vmatprep.subr.mxu0 0.0
  %1297 = vmatpush1.msra.mxu0 %v1278
  %1298 = vmatprep.subr.mxu0 0.0
  %1299 = vmatpush1.msra.mxu0 %v1279
  %1300 = vmatprep.subr.mxu0 0.0
  %1301 = vmatpush1.msra.mxu0 %v1280
  %1302 = vmatprep.subr.mxu0 0.0
  %1303 = vmatpush1.msra.mxu0 %v1281
  %1304 = vmatprep.subr.mxu0 0.0
  %1305 = vmatpush1.msra.mxu0 0.0
  %1306 = vmatprep.subr.mxu0 0.0
  %1307 = vmatpush1.msra.mxu0 0.0
  %1308 = vmatprep.subr.mxu0 0.0
  %1309 = vmatpush1.msra.mxu0 0.0
  %1310 = vmatprep.subr.mxu0 0.0
  %1311 = vmatpush1.msra.mxu0 0.0
  %1312 = vmatprep.subr.mxu0 0.0
  %1313 = vmatpush1.msra.mxu0 0.0
  %1314 = vmatprep.subr.mxu0 0.0
  %1315 = vmatpush1.msra.mxu0 0.0
  %1316 = vmatprep.subr.mxu0 0.0
  %1317 = vmatpush1.msra.mxu0 0.0
  %1318 = vmatprep.subr.mxu0 0.0
  %1319 = vmatpush1.msra.mxu0 0.0
  %1320 = vmatprep.subr.mxu0 0.0
  %1321 = vmatpush1.msra.mxu0 0.0
  %1322 = vmatprep.subr.mxu0 0.0
  %1323 = vmatpush1.msra.mxu0 0.0
  %1324 = vmatprep.subr.mxu0 0.0
  %1325 = vmatpush1.msra.mxu0 0.0
  %1326 = vmatprep.subr.mxu0 0.0
  %1327 = vmatpush1.msra.mxu0 0.0
  %1328 = vmatprep.subr.mxu0 0.0
  %1329 = vmatpush1.msra.mxu0 0.0
  %1330 = vmatprep.subr.mxu0 0.0
  %1331 = vmatpush1.msra.mxu0 0.0
  %1332 = vmatprep.subr.mxu0 0.0
  %1333 = vmatpush1.msra.mxu0 0.0
  %1334 = vmatprep.subr.mxu0 0.0
  %1335 = vmatpush1.msra.mxu0 0.0
  %1336 = vmatprep.subr.mxu0 0.0
  %1337 = vmatpush1.msra.mxu0 0.0
  %1338 = vmatprep.subr.mxu0 0.0
  %1339 = vmatpush1.msra.mxu0 0.0
  %1340 = vmatprep.subr.mxu0 0.0
  %1341 = vmatpush1.msra.mxu0 0.0
  %1342 = vmatprep.subr.mxu0 0.0
  %1343 = vmatpush1.msra.mxu0 0.0
  %1344 = vmatprep.subr.mxu0 0.0
  %1345 = vmatpush1.msra.mxu0 0.0
  %1346 = vmatprep.subr.mxu0 0.0
  %1347 = vmatpush1.msra.mxu0 0.0
  %1348 = vmatprep.subr.mxu0 0.0
  %1349 = vmatpush1.msra.mxu0 0.0
  %1350 = vmatprep.subr.mxu0 0.0
  %1351 = vmatpush1.msra.mxu0 0.0
  %1352 = vmatprep.subr.mxu0 0.0
  %1353 = vmatpush1.msra.mxu0 0.0
  %1354 = vmatprep.subr.mxu0 0.0
  %1355 = vmatpush1.msra.mxu0 0.0
  %1356 = vmatprep.subr.mxu0 0.0
  %1357 = vmatpush1.msra.mxu0 0.0
  %1358 = vmatprep.subr.mxu0 0.0
  %1359 = vmatpush1.msra.mxu0 0.0
  %1360 = vmatprep.mubr.f32.mxu0 0.0
  %1361 = vmatmul.mubr.f32.gmra.mrb[0].mxu0 %v1291
  %v1362 = vpop.f32.mrb[0].mxu0
  %v1363 = vadd.f32 %v1288, %v1362
  %v1364 = vpop.f32.mrb[0].mxu0
  %1365 = vmatprep.mubr.f32.mxu0 0.0
  %1366 = vmatmul.mubr.f32.gmra.mrb[0].mxu0 %v1294
  %v1367 = vpop.f32.mrb[0].mxu0
  %v1368 = vadd.f32 %v1288, %v1367
  %v1369 = vpop.f32.mrb[0].mxu0
  %1370 = vdwg.mxu0
  %1372 = vrot.lane.b32.xlu0 %v1363, 96
  %v1373 = vpop.permute.xlu0 %1372
  %v1374 = vsel %vm203, %v1363, 0
  %v1376 = vsel %vm203, %v1373, 0
  %1378 = vmatprep.subr.mxu0 0.0
  %1379 = vmatpush1.xpose.msra.mxu0 %v1376
  %1380 = vmatprep.subr.mxu0 0.0
  %1381 = vmatpush1.xpose.msra.mxu0 0.0
  %1382 = vmatprep.subr.mxu0 0.0
  %1383 = vmatpush1.xpose.msra.mxu0 0.0
  %1384 = vmatprep.subr.mxu0 0.0
  %1385 = vmatpush1.xpose.msra.mxu0 0.0
  %1386 = vmatprep.subr.mxu0 0.0
  %1387 = vmatpush1.xpose.msra.mxu0 0.0
  %1388 = vmatprep.subr.mxu0 0.0
  %1389 = vmatpush1.xpose.msra.mxu0 0.0
  %1390 = vmatprep.subr.mxu0 0.0
  %1391 = vmatpush1.xpose.msra.mxu0 0.0
  %1392 = vmatprep.subr.mxu0 0.0
  %1393 = vmatpush1.xpose.msra.mxu0 0.0
  %1394 = vmatprep.subr.mxu0 0.0
  %1395 = vmatpush1.xpose.msra.mxu0 0.0
  %1396 = vmatprep.subr.mxu0 0.0
  %1397 = vmatpush1.xpose.msra.mxu0 0.0
  %1398 = vmatprep.subr.mxu0 0.0
  %1399 = vmatpush1.xpose.msra.mxu0 0.0
  %1400 = vmatprep.subr.mxu0 0.0
  %1401 = vmatpush1.xpose.msra.mxu0 0.0
  %1402 = vmatprep.subr.mxu0 0.0
  %1403 = vmatpush1.xpose.msra.mxu0 0.0
  %1404 = vmatprep.subr.mxu0 0.0
  %1405 = vmatpush1.xpose.msra.mxu0 0.0
  %1406 = vmatprep.subr.mxu0 0.0
  %1407 = vmatpush1.xpose.msra.mxu0 0.0
  %1408 = vmatprep.subr.mxu0 0.0
  %1409 = vmatpush1.xpose.msra.mxu0 0.0
  %1410 = vmatprep.subr.mxu0 0.0
  %1411 = vmatpush1.xpose.msra.mxu0 0.0
  %1412 = vmatprep.subr.mxu0 0.0
  %1413 = vmatpush1.xpose.msra.mxu0 0.0
  %1414 = vmatprep.subr.mxu0 0.0
  %1415 = vmatpush1.xpose.msra.mxu0 0.0
  %1416 = vmatprep.subr.mxu0 0.0
  %1417 = vmatpush1.xpose.msra.mxu0 0.0
  %1418 = vmatprep.subr.mxu0 0.0
  %1419 = vmatpush1.xpose.msra.mxu0 0.0
  %1420 = vmatprep.subr.mxu0 0.0
  %1421 = vmatpush1.xpose.msra.mxu0 0.0
  %1422 = vmatprep.subr.mxu0 0.0
  %1423 = vmatpush1.xpose.msra.mxu0 0.0
  %1424 = vmatprep.subr.mxu0 0.0
  %1425 = vmatpush1.xpose.msra.mxu0 0.0
  %1426 = vmatprep.subr.mxu0 0.0
  %1427 = vmatpush1.xpose.msra.mxu0 0.0
  %1428 = vmatprep.subr.mxu0 0.0
  %1429 = vmatpush1.xpose.msra.mxu0 0.0
  %1430 = vmatprep.subr.mxu0 0.0
  %1431 = vmatpush1.xpose.msra.mxu0 0.0
  %1432 = vmatprep.subr.mxu0 0.0
  %1433 = vmatpush1.xpose.msra.mxu0 0.0
  %1434 = vmatprep.subr.mxu0 0.0
  %1435 = vmatpush1.xpose.msra.mxu0 0.0
  %1436 = vmatprep.subr.mxu0 0.0
  %1437 = vmatpush1.xpose.msra.mxu0 0.0
  %1438 = vmatprep.subr.mxu0 0.0
  %1439 = vmatpush1.xpose.msra.mxu0 0.0
  %1440 = vmatprep.subr.mxu0 0.0
  %1441 = vmatpush1.xpose.msra.mxu0 0.0
  %1442 = vmatprep.mubr.f32.mxu0 0.0
  %1443 = vmatmul.mubr.f32.gmra.mrb[0].mxu0 %v1374
  %v1444 = vpop.f32.mrb[0].mxu0
  %v1445 = vadd.f32 0.0, %v1444
  %v1446 = vpop.f32.mrb[0].mxu0
  %1447 = vdwg.mxu0
  %v1448 = vmul.f32 %v1445, 0.25
  %v1449 = vadd.f32 %v1448, %v282
  %v1450 = vsel %vm284, %v1449, -inf
  %1451 = vmax.xlane.f32.xlu0 %v1450
  %v1452 = vpop.xlane.xlu0 %1451
  %v1453 = vsub.f32 %v1449, %v1452
  %v1454 = vmul.f32 %v1453, 1.442695
  %v1455 = vpow.pop %v1454
  %v1456 = vsel %vm284, %v1455, 0.0
  %1457 = vadd.xlane.f32.xlu0 %v1456
  %v1458 = vpop.xlane.xlu0 %1457
  %v1459 = vrcp.pop %v1458
  %v1460 = vmul.f32 %v1455, %v1459
  %1461 = vrot.lane.b32.xlu0 %v1363, 64
  %v1462 = vpop.permute.xlu0 %1461
  %v1465 = vsel %vm284, %v1460, 0
  %1467 = vmatprep.subr.mxu0 0.0
  %1468 = vmatpush1.msra.mxu0 %v1462
  %1469 = vmatprep.subr.mxu0 0.0
  %1470 = vmatpush1.msra.mxu0 0.0
  %1471 = vmatprep.subr.mxu0 0.0
  %1472 = vmatpush1.msra.mxu0 0.0
  %1473 = vmatprep.subr.mxu0 0.0
  %1474 = vmatpush1.msra.mxu0 0.0
  %1475 = vmatprep.subr.mxu0 0.0
  %1476 = vmatpush1.msra.mxu0 0.0
  %1477 = vmatprep.subr.mxu0 0.0
  %1478 = vmatpush1.msra.mxu0 0.0
  %1479 = vmatprep.subr.mxu0 0.0
  %1480 = vmatpush1.msra.mxu0 0.0
  %1481 = vmatprep.subr.mxu0 0.0
  %1482 = vmatpush1.msra.mxu0 0.0
  %1483 = vmatprep.subr.mxu0 0.0
  %1484 = vmatpush1.msra.mxu0 0.0
  %1485 = vmatprep.subr.mxu0 0.0
  %1486 = vmatpush1.msra.mxu0 0.0
  %1487 = vmatprep.subr.mxu0 0.0
  %1488 = vmatpush1.msra.mxu0 0.0
  %1489 = vmatprep.subr.mxu0 0.0
  %1490 = vmatpush1.msra.mxu0 0.0
  %1491 = vmatprep.subr.mxu0 0.0
  %1492 = vmatpush1.msra.mxu0 0.0
  %1493 = vmatprep.subr.mxu0 0.0
  %1494 = vmatpush1.msra.mxu0 0.0
  %1495 = vmatprep.subr.mxu0 0.0
  %1496 = vmatpush1.msra.mxu0 0.0
  %1497 = vmatprep.subr.mxu0 0.0
  %1498 = vmatpush1.msra.mxu0 0.0
  %1499 = vmatprep.subr.mxu0 0.0
  %1500 = vmatpush1.msra.mxu0 0.0
  %1501 = vmatprep.subr.mxu0 0.0
  %1502 = vmatpush1.msra.mxu0 0.0
  %1503 = vmatprep.subr.mxu0 0.0
  %1504 = vmatpush1.msra.mxu0 0.0
  %1505 = vmatprep.subr.mxu0 0.0
  %1506 = vmatpush1.msra.mxu0 0.0
  %1507 = vmatprep.subr.mxu0 0.0
  %1508 = vmatpush1.msra.mxu0 0.0
  %1509 = vmatprep.subr.mxu0 0.0
  %1510 = vmatpush1.msra.mxu0 0.0
  %1511 = vmatprep.subr.mxu0 0.0
  %1512 = vmatpush1.msra.mxu0 0.0
  %1513 = vmatprep.subr.mxu0 0.0
  %1514 = vmatpush1.msra.mxu0 0.0
  %1515 = vmatprep.subr.mxu0 0.0
  %1516 = vmatpush1.msra.mxu0 0.0
  %1517 = vmatprep.subr.mxu0 0.0
  %1518 = vmatpush1.msra.mxu0 0.0
  %1519 = vmatprep.subr.mxu0 0.0
  %1520 = vmatpush1.msra.mxu0 0.0
  %1521 = vmatprep.subr.mxu0 0.0
  %1522 = vmatpush1.msra.mxu0 0.0
  %1523 = vmatprep.subr.mxu0 0.0
  %1524 = vmatpush1.msra.mxu0 0.0
  %1525 = vmatprep.subr.mxu0 0.0
  %1526 = vmatpush1.msra.mxu0 0.0
  %1527 = vmatprep.subr.mxu0 0.0
  %1528 = vmatpush1.msra.mxu0 0.0
  %1529 = vmatprep.subr.mxu0 0.0
  %1530 = vmatpush1.msra.mxu0 0.0
  %1531 = vmatprep.mubr.f32.mxu0 0.0
  %1532 = vmatmul.mubr.f32.gmra.mrb[0].mxu0 %v1465
  %v1533 = vpop.f32.mrb[0].mxu0
  %v1534 = vadd.f32 0.0, %v1533
  %v1535 = vpop.f32.mrb[0].mxu0
  %1536 = vdwg.mxu0
  %1537 = vrot.lane.b32.xlu0 %v1363, 112
  %v1538 = vpop.permute.xlu0 %1537
  %1539 = vrot.lane.b32.xlu0 %v1363, 80
  %v1540 = vpop.permute.xlu0 %1539
  %v1541 = vsel %vm203, %v1538, 0
  %v1543 = vsel %vm203, %v1540, 0
  %1545 = vmatprep.subr.mxu0 0.0
  %1546 = vmatpush1.xpose.msra.mxu0 %v1543
  %1547 = vmatprep.subr.mxu0 0.0
  %1548 = vmatpush1.xpose.msra.mxu0 0.0
  %1549 = vmatprep.subr.mxu0 0.0
  %1550 = vmatpush1.xpose.msra.mxu0 0.0
  %1551 = vmatprep.subr.mxu0 0.0
  %1552 = vmatpush1.xpose.msra.mxu0 0.0
  %1553 = vmatprep.subr.mxu0 0.0
  %1554 = vmatpush1.xpose.msra.mxu0 0.0
  %1555 = vmatprep.subr.mxu0 0.0
  %1556 = vmatpush1.xpose.msra.mxu0 0.0
  %1557 = vmatprep.subr.mxu0 0.0
  %1558 = vmatpush1.xpose.msra.mxu0 0.0
  %1559 = vmatprep.subr.mxu0 0.0
  %1560 = vmatpush1.xpose.msra.mxu0 0.0
  %1561 = vmatprep.subr.mxu0 0.0
  %1562 = vmatpush1.xpose.msra.mxu0 0.0
  %1563 = vmatprep.subr.mxu0 0.0
  %1564 = vmatpush1.xpose.msra.mxu0 0.0
  %1565 = vmatprep.subr.mxu0 0.0
  %1566 = vmatpush1.xpose.msra.mxu0 0.0
  %1567 = vmatprep.subr.mxu0 0.0
  %1568 = vmatpush1.xpose.msra.mxu0 0.0
  %1569 = vmatprep.subr.mxu0 0.0
  %1570 = vmatpush1.xpose.msra.mxu0 0.0
  %1571 = vmatprep.subr.mxu0 0.0
  %1572 = vmatpush1.xpose.msra.mxu0 0.0
  %1573 = vmatprep.subr.mxu0 0.0
  %1574 = vmatpush1.xpose.msra.mxu0 0.0
  %1575 = vmatprep.subr.mxu0 0.0
  %1576 = vmatpush1.xpose.msra.mxu0 0.0
  %1577 = vmatprep.subr.mxu0 0.0
  %1578 = vmatpush1.xpose.msra.mxu0 0.0
  %1579 = vmatprep.subr.mxu0 0.0
  %1580 = vmatpush1.xpose.msra.mxu0 0.0
  %1581 = vmatprep.subr.mxu0 0.0
  %1582 = vmatpush1.xpose.msra.mxu0 0.0
  %1583 = vmatprep.subr.mxu0 0.0
  %1584 = vmatpush1.xpose.msra.mxu0 0.0
  %1585 = vmatprep.subr.mxu0 0.0
  %1586 = vmatpush1.xpose.msra.mxu0 0.0
  %1587 = vmatprep.subr.mxu0 0.0
  %1588 = vmatpush1.xpose.msra.mxu0 0.0
  %1589 = vmatprep.subr.mxu0 0.0
  %1590 = vmatpush1.xpose.msra.mxu0 0.0
  %1591 = vmatprep.subr.mxu0 0.0
  %1592 = vmatpush1.xpose.msra.mxu0 0.0
  %1593 = vmatprep.subr.mxu0 0.0
  %1594 = vmatpush1.xpose.msra.mxu0 0.0
  %1595 = vmatprep.subr.mxu0 0.0
  %1596 = vmatpush1.xpose.msra.mxu0 0.0
  %1597 = vmatprep.subr.mxu0 0.0
  %1598 = vmatpush1.xpose.msra.mxu0 0.0
  %1599 = vmatprep.subr.mxu0 0.0
  %1600 = vmatpush1.xpose.msra.mxu0 0.0
  %1601 = vmatprep.subr.mxu0 0.0
  %1602 = vmatpush1.xpose.msra.mxu0 0.0
  %1603 = vmatprep.subr.mxu0 0.0
  %1604 = vmatpush1.xpose.msra.mxu0 0.0
  %1605 = vmatprep.subr.mxu0 0.0
  %1606 = vmatpush1.xpose.msra.mxu0 0.0
  %1607 = vmatprep.subr.mxu0 0.0
  %1608 = vmatpush1.xpose.msra.mxu0 0.0
  %1609 = vmatprep.mubr.f32.mxu0 0.0
  %1610 = vmatmul.mubr.f32.gmra.mrb[0].mxu0 %v1541
  %v1611 = vpop.f32.mrb[0].mxu0
  %v1612 = vadd.f32 0.0, %v1611
  %v1613 = vpop.f32.mrb[0].mxu0
  %1614 = vdwg.mxu0
  %v1615 = vmul.f32 %v1612, 0.25
  %v1616 = vadd.f32 %v1615, %v282
  %v1617 = vsel %vm284, %v1616, -inf
  %1618 = vmax.xlane.f32.xlu0 %v1617
  %v1619 = vpop.xlane.xlu0 %1618
  %v1620 = vsub.f32 %v1616, %v1619
  %v1621 = vmul.f32 %v1620, 1.442695
  %v1622 = vpow.pop %v1621
  %v1623 = vsel %vm284, %v1622, 0.0
  %1624 = vadd.xlane.f32.xlu0 %v1623
  %v1625 = vpop.xlane.xlu0 %1624
  %v1626 = vrcp.pop %v1625
  %v1627 = vmul.f32 %v1622, %v1626
  %1628 = vrot.lane.b32.xlu0 %v1363, 48
  %v1629 = vpop.permute.xlu0 %1628
  %v1632 = vsel %vm284, %v1627, 0
  %1634 = vmatprep.subr.mxu0 0.0
  %1635 = vmatpush1.msra.mxu0 %v1629
  %1636 = vmatprep.subr.mxu0 0.0
  %1637 = vmatpush1.msra.mxu0 0.0
  %1638 = vmatprep.subr.mxu0 0.0
  %1639 = vmatpush1.msra.mxu0 0.0
  %1640 = vmatprep.subr.mxu0 0.0
  %1641 = vmatpush1.msra.mxu0 0.0
  %1642 = vmatprep.subr.mxu0 0.0
  %1643 = vmatpush1.msra.mxu0 0.0
  %1644 = vmatprep.subr.mxu0 0.0
  %1645 = vmatpush1.msra.mxu0 0.0
  %1646 = vmatprep.subr.mxu0 0.0
  %1647 = vmatpush1.msra.mxu0 0.0
  %1648 = vmatprep.subr.mxu0 0.0
  %1649 = vmatpush1.msra.mxu0 0.0
  %1650 = vmatprep.subr.mxu0 0.0
  %1651 = vmatpush1.msra.mxu0 0.0
  %1652 = vmatprep.subr.mxu0 0.0
  %1653 = vmatpush1.msra.mxu0 0.0
  %1654 = vmatprep.subr.mxu0 0.0
  %1655 = vmatpush1.msra.mxu0 0.0
  %1656 = vmatprep.subr.mxu0 0.0
  %1657 = vmatpush1.msra.mxu0 0.0
  %1658 = vmatprep.subr.mxu0 0.0
  %1659 = vmatpush1.msra.mxu0 0.0
  %1660 = vmatprep.subr.mxu0 0.0
  %1661 = vmatpush1.msra.mxu0 0.0
  %1662 = vmatprep.subr.mxu0 0.0
  %1663 = vmatpush1.msra.mxu0 0.0
  %1664 = vmatprep.subr.mxu0 0.0
  %1665 = vmatpush1.msra.mxu0 0.0
  %1666 = vmatprep.subr.mxu0 0.0
  %1667 = vmatpush1.msra.mxu0 0.0
  %1668 = vmatprep.subr.mxu0 0.0
  %1669 = vmatpush1.msra.mxu0 0.0
  %1670 = vmatprep.subr.mxu0 0.0
  %1671 = vmatpush1.msra.mxu0 0.0
  %1672 = vmatprep.subr.mxu0 0.0
  %1673 = vmatpush1.msra.mxu0 0.0
  %1674 = vmatprep.subr.mxu0 0.0
  %1675 = vmatpush1.msra.mxu0 0.0
  %1676 = vmatprep.subr.mxu0 0.0
  %1677 = vmatpush1.msra.mxu0 0.0
  %1678 = vmatprep.subr.mxu0 0.0
  %1679 = vmatpush1.msra.mxu0 0.0
  %1680 = vmatprep.subr.mxu0 0.0
  %1681 = vmatpush1.msra.mxu0 0.0
  %1682 = vmatprep.subr.mxu0 0.0
  %1683 = vmatpush1.msra.mxu0 0.0
  %1684 = vmatprep.subr.mxu0 0.0
  %1685 = vmatpush1.msra.mxu0 0.0
  %1686 = vmatprep.subr.mxu0 0.0
  %1687 = vmatpush1.msra.mxu0 0.0
  %1688 = vmatprep.subr.mxu0 0.0
  %1689 = vmatpush1.msra.mxu0 0.0
  %1690 = vmatprep.subr.mxu0 0.0
  %1691 = vmatpush1.msra.mxu0 0.0
  %1692 = vmatprep.subr.mxu0 0.0
  %1693 = vmatpush1.msra.mxu0 0.0
  %1694 = vmatprep.subr.mxu0 0.0
  %1695 = vmatpush1.msra.mxu0 0.0
  %1696 = vmatprep.subr.mxu0 0.0
  %1697 = vmatpush1.msra.mxu0 0.0
  %1698 = vmatprep.mubr.f32.mxu0 0.0
  %1699 = vmatmul.mubr.f32.gmra.mrb[0].mxu0 %v1632
  %v1700 = vpop.f32.mrb[0].mxu0
  %v1701 = vadd.f32 0.0, %v1700
  %v1702 = vpop.f32.mrb[0].mxu0
  %1703 = vdwg.mxu0
  %1705 = vrot.lane.b32.xlu0 %v1701, 16
  %v1706 = vpop.permute.xlu0 %1705
  %v1708 = vsel %vm203, %v1534, %v1706
  %1710 = vrot.lane.b32.xlu0 %v1368, 96
  %v1711 = vpop.permute.xlu0 %1710
  %v1712 = vsel %vm203, %v1368, 0
  %v1714 = vsel %vm203, %v1711, 0
  %1716 = vmatprep.subr.mxu0 0.0
  %1717 = vmatpush1.xpose.msra.mxu0 %v1714
  %1718 = vmatprep.subr.mxu0 0.0
  %1719 = vmatpush1.xpose.msra.mxu0 0.0
  %1720 = vmatprep.subr.mxu0 0.0
  %1721 = vmatpush1.xpose.msra.mxu0 0.0
  %1722 = vmatprep.subr.mxu0 0.0
  %1723 = vmatpush1.xpose.msra.mxu0 0.0
  %1724 = vmatprep.subr.mxu0 0.0
  %1725 = vmatpush1.xpose.msra.mxu0 0.0
  %1726 = vmatprep.subr.mxu0 0.0
  %1727 = vmatpush1.xpose.msra.mxu0 0.0
  %1728 = vmatprep.subr.mxu0 0.0
  %1729 = vmatpush1.xpose.msra.mxu0 0.0
  %1730 = vmatprep.subr.mxu0 0.0
  %1731 = vmatpush1.xpose.msra.mxu0 0.0
  %1732 = vmatprep.subr.mxu0 0.0
  %1733 = vmatpush1.xpose.msra.mxu0 0.0
  %1734 = vmatprep.subr.mxu0 0.0
  %1735 = vmatpush1.xpose.msra.mxu0 0.0
  %1736 = vmatprep.subr.mxu0 0.0
  %1737 = vmatpush1.xpose.msra.mxu0 0.0
  %1738 = vmatprep.subr.mxu0 0.0
  %1739 = vmatpush1.xpose.msra.mxu0 0.0
  %1740 = vmatprep.subr.mxu0 0.0
  %1741 = vmatpush1.xpose.msra.mxu0 0.0
  %1742 = vmatprep.subr.mxu0 0.0
  %1743 = vmatpush1.xpose.msra.mxu0 0.0
  %1744 = vmatprep.subr.mxu0 0.0
  %1745 = vmatpush1.xpose.msra.mxu0 0.0
  %1746 = vmatprep.subr.mxu0 0.0
  %1747 = vmatpush1.xpose.msra.mxu0 0.0
  %1748 = vmatprep.subr.mxu0 0.0
  %1749 = vmatpush1.xpose.msra.mxu0 0.0
  %1750 = vmatprep.subr.mxu0 0.0
  %1751 = vmatpush1.xpose.msra.mxu0 0.0
  %1752 = vmatprep.subr.mxu0 0.0
  %1753 = vmatpush1.xpose.msra.mxu0 0.0
  %1754 = vmatprep.subr.mxu0 0.0
  %1755 = vmatpush1.xpose.msra.mxu0 0.0
  %1756 = vmatprep.subr.mxu0 0.0
  %1757 = vmatpush1.xpose.msra.mxu0 0.0
  %1758 = vmatprep.subr.mxu0 0.0
  %1759 = vmatpush1.xpose.msra.mxu0 0.0
  %1760 = vmatprep.subr.mxu0 0.0
  %1761 = vmatpush1.xpose.msra.mxu0 0.0
  %1762 = vmatprep.subr.mxu0 0.0
  %1763 = vmatpush1.xpose.msra.mxu0 0.0
  %1764 = vmatprep.subr.mxu0 0.0
  %1765 = vmatpush1.xpose.msra.mxu0 0.0
  %1766 = vmatprep.subr.mxu0 0.0
  %1767 = vmatpush1.xpose.msra.mxu0 0.0
  %1768 = vmatprep.subr.mxu0 0.0
  %1769 = vmatpush1.xpose.msra.mxu0 0.0
  %1770 = vmatprep.subr.mxu0 0.0
  %1771 = vmatpush1.xpose.msra.mxu0 0.0
  %1772 = vmatprep.subr.mxu0 0.0
  %1773 = vmatpush1.xpose.msra.mxu0 0.0
  %1774 = vmatprep.subr.mxu0 0.0
  %1775 = vmatpush1.xpose.msra.mxu0 0.0
  %1776 = vmatprep.subr.mxu0 0.0
  %1777 = vmatpush1.xpose.msra.mxu0 0.0
  %1778 = vmatprep.subr.mxu0 0.0
  %1779 = vmatpush1.xpose.msra.mxu0 0.0
  %1780 = vmatprep.mubr.f32.mxu0 0.0
  %1781 = vmatmul.mubr.f32.gmra.mrb[0].mxu0 %v1712
  %v1782 = vpop.f32.mrb[0].mxu0
  %v1783 = vadd.f32 0.0, %v1782
  %v1784 = vpop.f32.mrb[0].mxu0
  %1785 = vdwg.mxu0
  %v1786 = vmul.f32 %v1783, 0.25
  %v1787 = vadd.f32 %v1786, %v625
  %v1788 = vsel %vm284, %v1787, -inf
  %1789 = vmax.xlane.f32.xlu0 %v1788
  %v1790 = vpop.xlane.xlu0 %1789
  %v1791 = vsub.f32 %v1787, %v1790
  %v1792 = vmul.f32 %v1791, 1.442695
  %v1793 = vpow.pop %v1792
  %v1794 = vsel %vm284, %v1793, 0.0
  %1795 = vadd.xlane.f32.xlu0 %v1794
  %v1796 = vpop.xlane.xlu0 %1795
  %v1797 = vrcp.pop %v1796
  %v1798 = vmul.f32 %v1793, %v1797
  %1799 = vrot.lane.b32.xlu0 %v1368, 64
  %v1800 = vpop.permute.xlu0 %1799
  %v1803 = vsel %vm284, %v1798, 0
  %1805 = vmatprep.subr.mxu0 0.0
  %1806 = vmatpush1.msra.mxu0 %v1800
  %1807 = vmatprep.subr.mxu0 0.0
  %1808 = vmatpush1.msra.mxu0 0.0
  %1809 = vmatprep.subr.mxu0 0.0
  %1810 = vmatpush1.msra.mxu0 0.0
  %1811 = vmatprep.subr.mxu0 0.0
  %1812 = vmatpush1.msra.mxu0 0.0
  %1813 = vmatprep.subr.mxu0 0.0
  %1814 = vmatpush1.msra.mxu0 0.0
  %1815 = vmatprep.subr.mxu0 0.0
  %1816 = vmatpush1.msra.mxu0 0.0
  %1817 = vmatprep.subr.mxu0 0.0
  %1818 = vmatpush1.msra.mxu0 0.0
  %1819 = vmatprep.subr.mxu0 0.0
  %1820 = vmatpush1.msra.mxu0 0.0
  %1821 = vmatprep.subr.mxu0 0.0
  %1822 = vmatpush1.msra.mxu0 0.0
  %1823 = vmatprep.subr.mxu0 0.0
  %1824 = vmatpush1.msra.mxu0 0.0
  %1825 = vmatprep.subr.mxu0 0.0
  %1826 = vmatpush1.msra.mxu0 0.0
  %1827 = vmatprep.subr.mxu0 0.0
  %1828 = vmatpush1.msra.mxu0 0.0
  %1829 = vmatprep.subr.mxu0 0.0
  %1830 = vmatpush1.msra.mxu0 0.0
  %1831 = vmatprep.subr.mxu0 0.0
  %1832 = vmatpush1.msra.mxu0 0.0
  %1833 = vmatprep.subr.mxu0 0.0
  %1834 = vmatpush1.msra.mxu0 0.0
  %1835 = vmatprep.subr.mxu0 0.0
  %1836 = vmatpush1.msra.mxu0 0.0
  %1837 = vmatprep.subr.mxu0 0.0
  %1838 = vmatpush1.msra.mxu0 0.0
  %1839 = vmatprep.subr.mxu0 0.0
  %1840 = vmatpush1.msra.mxu0 0.0
  %1841 = vmatprep.subr.mxu0 0.0
  %1842 = vmatpush1.msra.mxu0 0.0
  %1843 = vmatprep.subr.mxu0 0.0
  %1844 = vmatpush1.msra.mxu0 0.0
  %1845 = vmatprep.subr.mxu0 0.0
  %1846 = vmatpush1.msra.mxu0 0.0
  %1847 = vmatprep.subr.mxu0 0.0
  %1848 = vmatpush1.msra.mxu0 0.0
  %1849 = vmatprep.subr.mxu0 0.0
  %1850 = vmatpush1.msra.mxu0 0.0
  %1851 = vmatprep.subr.mxu0 0.0
  %1852 = vmatpush1.msra.mxu0 0.0
  %1853 = vmatprep.subr.mxu0 0.0
  %1854 = vmatpush1.msra.mxu0 0.0
  %1855 = vmatprep.subr.mxu0 0.0
  %1856 = vmatpush1.msra.mxu0 0.0
  %1857 = vmatprep.subr.mxu0 0.0
  %1858 = vmatpush1.msra.mxu0 0.0
  %1859 = vmatprep.subr.mxu0 0.0
  %1860 = vmatpush1.msra.mxu0 0.0
  %1861 = vmatprep.subr.mxu0 0.0
  %1862 = vmatpush1.msra.mxu0 0.0
  %1863 = vmatprep.subr.mxu0 0.0
  %1864 = vmatpush1.msra.mxu0 0.0
  %1865 = vmatprep.subr.mxu0 0.0
  %1866 = vmatpush1.msra.mxu0 0.0
  %1867 = vmatprep.subr.mxu0 0.0
  %1868 = vmatpush1.msra.mxu0 0.0
  %1869 = vmatprep.mubr.f32.mxu0 0.0
  %1870 = vmatmul.mubr.f32.gmra.mrb[0].mxu0 %v1803
  %v1871 = vpop.f32.mrb[0].mxu0
  %v1872 = vadd.f32 0.0, %v1871
  %v1873 = vpop.f32.mrb[0].mxu0
  %1874 = vdwg.mxu0
  %1875 = vrot.lane.b32.xlu0 %v1368, 112
  %v1876 = vpop.permute.xlu0 %1875
  %1877 = vrot.lane.b32.xlu0 %v1368, 80
  %v1878 = vpop.permute.xlu0 %1877
  %v1879 = vsel %vm203, %v1876, 0
  %v1881 = vsel %vm203, %v1878, 0
  %1883 = vmatprep.subr.mxu0 0.0
  %1884 = vmatpush1.xpose.msra.mxu0 %v1881
  %1885 = vmatprep.subr.mxu0 0.0
  %1886 = vmatpush1.xpose.msra.mxu0 0.0
  %1887 = vmatprep.subr.mxu0 0.0
  %1888 = vmatpush1.xpose.msra.mxu0 0.0
  %1889 = vmatprep.subr.mxu0 0.0
  %1890 = vmatpush1.xpose.msra.mxu0 0.0
  %1891 = vmatprep.subr.mxu0 0.0
  %1892 = vmatpush1.xpose.msra.mxu0 0.0
  %1893 = vmatprep.subr.mxu0 0.0
  %1894 = vmatpush1.xpose.msra.mxu0 0.0
  %1895 = vmatprep.subr.mxu0 0.0
  %1896 = vmatpush1.xpose.msra.mxu0 0.0
  %1897 = vmatprep.subr.mxu0 0.0
  %1898 = vmatpush1.xpose.msra.mxu0 0.0
  %1899 = vmatprep.subr.mxu0 0.0
  %1900 = vmatpush1.xpose.msra.mxu0 0.0
  %1901 = vmatprep.subr.mxu0 0.0
  %1902 = vmatpush1.xpose.msra.mxu0 0.0
  %1903 = vmatprep.subr.mxu0 0.0
  %1904 = vmatpush1.xpose.msra.mxu0 0.0
  %1905 = vmatprep.subr.mxu0 0.0
  %1906 = vmatpush1.xpose.msra.mxu0 0.0
  %1907 = vmatprep.subr.mxu0 0.0
  %1908 = vmatpush1.xpose.msra.mxu0 0.0
  %1909 = vmatprep.subr.mxu0 0.0
  %1910 = vmatpush1.xpose.msra.mxu0 0.0
  %1911 = vmatprep.subr.mxu0 0.0
  %1912 = vmatpush1.xpose.msra.mxu0 0.0
  %1913 = vmatprep.subr.mxu0 0.0
  %1914 = vmatpush1.xpose.msra.mxu0 0.0
  %1915 = vmatprep.subr.mxu0 0.0
  %1916 = vmatpush1.xpose.msra.mxu0 0.0
  %1917 = vmatprep.subr.mxu0 0.0
  %1918 = vmatpush1.xpose.msra.mxu0 0.0
  %1919 = vmatprep.subr.mxu0 0.0
  %1920 = vmatpush1.xpose.msra.mxu0 0.0
  %1921 = vmatprep.subr.mxu0 0.0
  %1922 = vmatpush1.xpose.msra.mxu0 0.0
  %1923 = vmatprep.subr.mxu0 0.0
  %1924 = vmatpush1.xpose.msra.mxu0 0.0
  %1925 = vmatprep.subr.mxu0 0.0
  %1926 = vmatpush1.xpose.msra.mxu0 0.0
  %1927 = vmatprep.subr.mxu0 0.0
  %1928 = vmatpush1.xpose.msra.mxu0 0.0
  %1929 = vmatprep.subr.mxu0 0.0
  %1930 = vmatpush1.xpose.msra.mxu0 0.0
  %1931 = vmatprep.subr.mxu0 0.0
  %1932 = vmatpush1.xpose.msra.mxu0 0.0
  %1933 = vmatprep.subr.mxu0 0.0
  %1934 = vmatpush1.xpose.msra.mxu0 0.0
  %1935 = vmatprep.subr.mxu0 0.0
  %1936 = vmatpush1.xpose.msra.mxu0 0.0
  %1937 = vmatprep.subr.mxu0 0.0
  %1938 = vmatpush1.xpose.msra.mxu0 0.0
  %1939 = vmatprep.subr.mxu0 0.0
  %1940 = vmatpush1.xpose.msra.mxu0 0.0
  %1941 = vmatprep.subr.mxu0 0.0
  %1942 = vmatpush1.xpose.msra.mxu0 0.0
  %1943 = vmatprep.subr.mxu0 0.0
  %1944 = vmatpush1.xpose.msra.mxu0 0.0
  %1945 = vmatprep.subr.mxu0 0.0
  %1946 = vmatpush1.xpose.msra.mxu0 0.0
  %1947 = vmatprep.mubr.f32.mxu0 0.0
  %1948 = vmatmul.mubr.f32.gmra.mrb[0].mxu0 %v1879
  %v1949 = vpop.f32.mrb[0].mxu0
  %v1950 = vadd.f32 0.0, %v1949
  %v1951 = vpop.f32.mrb[0].mxu0
  %1952 = vdwg.mxu0
  %v1953 = vmul.f32 %v1950, 0.25
  %v1954 = vadd.f32 %v1953, %v625
  %v1955 = vsel %vm284, %v1954, -inf
  %1956 = vmax.xlane.f32.xlu0 %v1955
  %v1957 = vpop.xlane.xlu0 %1956
  %v1958 = vsub.f32 %v1954, %v1957
  %v1959 = vmul.f32 %v1958, 1.442695
  %v1960 = vpow.pop %v1959
  %v1961 = vsel %vm284, %v1960, 0.0
  %1962 = vadd.xlane.f32.xlu0 %v1961
  %v1963 = vpop.xlane.xlu0 %1962
  %v1964 = vrcp.pop %v1963
  %v1965 = vmul.f32 %v1960, %v1964
  %1966 = vrot.lane.b32.xlu0 %v1368, 48
  %v1967 = vpop.permute.xlu0 %1966
  %v1970 = vsel %vm284, %v1965, 0
  %1972 = vmatprep.subr.mxu0 0.0
  %1973 = vmatpush1.msra.mxu0 %v1967
  %1974 = vmatprep.subr.mxu0 0.0
  %1975 = vmatpush1.msra.mxu0 0.0
  %1976 = vmatprep.subr.mxu0 0.0
  %1977 = vmatpush1.msra.mxu0 0.0
  %1978 = vmatprep.subr.mxu0 0.0
  %1979 = vmatpush1.msra.mxu0 0.0
  %1980 = vmatprep.subr.mxu0 0.0
  %1981 = vmatpush1.msra.mxu0 0.0
  %1982 = vmatprep.subr.mxu0 0.0
  %1983 = vmatpush1.msra.mxu0 0.0
  %1984 = vmatprep.subr.mxu0 0.0
  %1985 = vmatpush1.msra.mxu0 0.0
  %1986 = vmatprep.subr.mxu0 0.0
  %1987 = vmatpush1.msra.mxu0 0.0
  %1988 = vmatprep.subr.mxu0 0.0
  %1989 = vmatpush1.msra.mxu0 0.0
  %1990 = vmatprep.subr.mxu0 0.0
  %1991 = vmatpush1.msra.mxu0 0.0
  %1992 = vmatprep.subr.mxu0 0.0
  %1993 = vmatpush1.msra.mxu0 0.0
  %1994 = vmatprep.subr.mxu0 0.0
  %1995 = vmatpush1.msra.mxu0 0.0
  %1996 = vmatprep.subr.mxu0 0.0
  %1997 = vmatpush1.msra.mxu0 0.0
  %1998 = vmatprep.subr.mxu0 0.0
  %1999 = vmatpush1.msra.mxu0 0.0
  %2000 = vmatprep.subr.mxu0 0.0
  %2001 = vmatpush1.msra.mxu0 0.0
  %2002 = vmatprep.subr.mxu0 0.0
  %2003 = vmatpush1.msra.mxu0 0.0
  %2004 = vmatprep.subr.mxu0 0.0
  %2005 = vmatpush1.msra.mxu0 0.0
  %2006 = vmatprep.subr.mxu0 0.0
  %2007 = vmatpush1.msra.mxu0 0.0
  %2008 = vmatprep.subr.mxu0 0.0
  %2009 = vmatpush1.msra.mxu0 0.0
  %2010 = vmatprep.subr.mxu0 0.0
  %2011 = vmatpush1.msra.mxu0 0.0
  %2012 = vmatprep.subr.mxu0 0.0
  %2013 = vmatpush1.msra.mxu0 0.0
  %2014 = vmatprep.subr.mxu0 0.0
  %2015 = vmatpush1.msra.mxu0 0.0
  %2016 = vmatprep.subr.mxu0 0.0
  %2017 = vmatpush1.msra.mxu0 0.0
  %2018 = vmatprep.subr.mxu0 0.0
  %2019 = vmatpush1.msra.mxu0 0.0
  %2020 = vmatprep.subr.mxu0 0.0
  %2021 = vmatpush1.msra.mxu0 0.0
  %2022 = vmatprep.subr.mxu0 0.0
  %2023 = vmatpush1.msra.mxu0 0.0
  %2024 = vmatprep.subr.mxu0 0.0
  %2025 = vmatpush1.msra.mxu0 0.0
  %2026 = vmatprep.subr.mxu0 0.0
  %2027 = vmatpush1.msra.mxu0 0.0
  %2028 = vmatprep.subr.mxu0 0.0
  %2029 = vmatpush1.msra.mxu0 0.0
  %2030 = vmatprep.subr.mxu0 0.0
  %2031 = vmatpush1.msra.mxu0 0.0
  %2032 = vmatprep.subr.mxu0 0.0
  %2033 = vmatpush1.msra.mxu0 0.0
  %2034 = vmatprep.subr.mxu0 0.0
  %2035 = vmatpush1.msra.mxu0 0.0
  %2036 = vmatprep.mubr.f32.mxu0 0.0
  %2037 = vmatmul.mubr.f32.gmra.mrb[0].mxu0 %v1970
  %v2038 = vpop.f32.mrb[0].mxu0
  %v2039 = vadd.f32 0.0, %v2038
  %v2040 = vpop.f32.mrb[0].mxu0
  %2041 = vdwg.mxu0
  %2043 = vrot.lane.b32.xlu0 %v2039, 16
  %v2044 = vpop.permute.xlu0 %2043
  %v2046 = vsel %vm203, %v1872, %v2044
  %s2047 = scalar_lea.vmem %s6, 32
  %v2048 = vld [vmem:[%s2047] sm:$0xff]
  %v2049 = vld [vmem:[%s2047 + $0x8] sm:$0xff]
  %v2050 = vld [vmem:[%s2047 + $0x10] sm:$0xff]
  %v2051 = vld [vmem:[%s2047 + $0x18] sm:$0xff]
  %s2052 = scalar_lea.vmem %s7, 1
  %v2053 = vld [vmem:[%s2052] sm:$0x1]
  %v2055 = vlaneseq
  %v2056 = vshrl.u32 %v2055, 7
  %v2057 = vsub.s32 0, %v2056
  %v2058 = vrot.slane %v2053, %v2057
  %v2061 = vsel %vm63, %v1708, 0
  %v2064 = vsel %vm63, %v2046, 0
  %2066 = vmatprep.subr.mxu0 0.0
  %2067 = vmatpush1.msra.mxu0 %v2048
  %2068 = vmatprep.subr.mxu0 0.0
  %2069 = vmatpush1.msra.mxu0 %v2049
  %2070 = vmatprep.subr.mxu0 0.0
  %2071 = vmatpush1.msra.mxu0 %v2050
  %2072 = vmatprep.subr.mxu0 0.0
  %2073 = vmatpush1.msra.mxu0 %v2051
  %2074 = vmatprep.subr.mxu0 0.0
  %2075 = vmatpush1.msra.mxu0 0.0
  %2076 = vmatprep.subr.mxu0 0.0
  %2077 = vmatpush1.msra.mxu0 0.0
  %2078 = vmatprep.subr.mxu0 0.0
  %2079 = vmatpush1.msra.mxu0 0.0
  %2080 = vmatprep.subr.mxu0 0.0
  %2081 = vmatpush1.msra.mxu0 0.0
  %2082 = vmatprep.subr.mxu0 0.0
  %2083 = vmatpush1.msra.mxu0 0.0
  %2084 = vmatprep.subr.mxu0 0.0
  %2085 = vmatpush1.msra.mxu0 0.0
  %2086 = vmatprep.subr.mxu0 0.0
  %2087 = vmatpush1.msra.mxu0 0.0
  %2088 = vmatprep.subr.mxu0 0.0
  %2089 = vmatpush1.msra.mxu0 0.0
  %2090 = vmatprep.subr.mxu0 0.0
  %2091 = vmatpush1.msra.mxu0 0.0
  %2092 = vmatprep.subr.mxu0 0.0
  %2093 = vmatpush1.msra.mxu0 0.0
  %2094 = vmatprep.subr.mxu0 0.0
  %2095 = vmatpush1.msra.mxu0 0.0
  %2096 = vmatprep.subr.mxu0 0.0
  %2097 = vmatpush1.msra.mxu0 0.0
  %2098 = vmatprep.subr.mxu0 0.0
  %2099 = vmatpush1.msra.mxu0 0.0
  %2100 = vmatprep.subr.mxu0 0.0
  %2101 = vmatpush1.msra.mxu0 0.0
  %2102 = vmatprep.subr.mxu0 0.0
  %2103 = vmatpush1.msra.mxu0 0.0
  %2104 = vmatprep.subr.mxu0 0.0
  %2105 = vmatpush1.msra.mxu0 0.0
  %2106 = vmatprep.subr.mxu0 0.0
  %2107 = vmatpush1.msra.mxu0 0.0
  %2108 = vmatprep.subr.mxu0 0.0
  %2109 = vmatpush1.msra.mxu0 0.0
  %2110 = vmatprep.subr.mxu0 0.0
  %2111 = vmatpush1.msra.mxu0 0.0
  %2112 = vmatprep.subr.mxu0 0.0
  %2113 = vmatpush1.msra.mxu0 0.0
  %2114 = vmatprep.subr.mxu0 0.0
  %2115 = vmatpush1.msra.mxu0 0.0
  %2116 = vmatprep.subr.mxu0 0.0
  %2117 = vmatpush1.msra.mxu0 0.0
  %2118 = vmatprep.subr.mxu0 0.0
  %2119 = vmatpush1.msra.mxu0 0.0
  %2120 = vmatprep.subr.mxu0 0.0
  %2121 = vmatpush1.msra.mxu0 0.0
  %2122 = vmatprep.subr.mxu0 0.0
  %2123 = vmatpush1.msra.mxu0 0.0
  %2124 = vmatprep.subr.mxu0 0.0
  %2125 = vmatpush1.msra.mxu0 0.0
  %2126 = vmatprep.subr.mxu0 0.0
  %2127 = vmatpush1.msra.mxu0 0.0
  %2128 = vmatprep.subr.mxu0 0.0
  %2129 = vmatpush1.msra.mxu0 0.0
  %2130 = vmatprep.mubr.f32.mxu0 0.0
  %2131 = vmatmul.mubr.f32.gmra.mrb[0].mxu0 %v2061
  %v2132 = vpop.f32.mrb[0].mxu0
  %v2133 = vadd.f32 %v2058, %v2132
  %v2134 = vpop.f32.mrb[0].mxu0
  %2135 = vmatprep.mubr.f32.mxu0 0.0
  %2136 = vmatmul.mubr.f32.gmra.mrb[0].mxu0 %v2064
  %v2137 = vpop.f32.mrb[0].mxu0
  %v2138 = vadd.f32 %v2058, %v2137
  %v2139 = vpop.f32.mrb[0].mxu0
  %2140 = vdwg.mxu0
  %v2141 = vadd.f32 %v2133, %v1275
  %v2142 = vadd.f32 %v2138, %v1276
  %s2143 = scalar_lea.vmem %s8, 1
  %v2144 = vld [vmem:[%s2143] sm:$0x1]
  %s2145 = scalar_lea.vmem %s9, 1
  %v2146 = vld [vmem:[%s2145] sm:$0x1]
  %v2147 = vsel %vm63, %v2141, 0.0
  %2148 = vadd.xlane.f32.xlu0 %v2147
  %v2149 = vpop.xlane.xlu0 %2148
  %v2150 = vsel %vm63, %v2142, 0.0
  %2151 = vadd.xlane.f32.xlu0 %v2150
  %v2152 = vpop.xlane.xlu0 %2151
  %v2153 = vmul.f32 %v2149, %v70
  %v2154 = vmul.f32 %v2152, %v70
  %v2155 = vsub.f32 %v2141, %v2153
  %v2156 = vsub.f32 %v2142, %v2154
  %v2157 = vmul.f32 %v2155, %v2155
  %v2158 = vmul.f32 %v2156, %v2156
  %v2159 = vsel %vm63, %v2157, 0.0
  %2160 = vadd.xlane.f32.xlu0 %v2159
  %v2161 = vpop.xlane.xlu0 %2160
  %v2162 = vsel %vm63, %v2158, 0.0
  %2163 = vadd.xlane.f32.xlu0 %v2162
  %v2164 = vpop.xlane.xlu0 %2163
  %v2165 = vmul.f32 %v2161, %v70
  %v2166 = vmul.f32 %v2164, %v70
  %v2167 = vadd.f32 %v2165, 1e-05
  %v2168 = vadd.f32 %v2166, 1e-05
  %v2169 = vrsqrt.pop %v2167
  %v2170 = vrsqrt.pop %v2168
  %v2171 = vmul.f32 %v2155, %v2169
  %v2172 = vmul.f32 %v2156, %v2170
  %v2174 = vlaneseq
  %v2175 = vshrl.u32 %v2174, 7
  %v2176 = vsub.s32 0, %v2175
  %v2177 = vrot.slane %v2144, %v2176
  %v2179 = vmul.f32 %v2171, %v2177
  %v2180 = vmul.f32 %v2172, %v2177
  %v2182 = vlaneseq
  %v2183 = vshrl.u32 %v2182, 7
  %v2184 = vsub.s32 0, %v2183
  %v2185 = vrot.slane %v2146, %v2184
  %v2187 = vadd.f32 %v2179, %v2185
  %v2188 = vadd.f32 %v2180, %v2185
  %s2189 = scalar_lea.vmem %s10, 32
  %v2190 = vld [vmem:[%s2189] sm:$0xff]
  %v2191 = vld [vmem:[%s2189 + $0x8] sm:$0xff]
  %v2192 = vld [vmem:[%s2189 + $0x10] sm:$0xff]
  %v2193 = vld [vmem:[%s2189 + $0x18] sm:$0xff]
  %s2194 = scalar_lea.vmem %s11, 1
  %v2195 = vld [vmem:[%s2194] sm:$0x1]
  %v2197 = vlaneseq
  %v2198 = vshrl.u32 %v2197, 7
  %v2199 = vsub.s32 0, %v2198
  %v2200 = vrot.slane %v2195, %v2199
  %v2203 = vsel %vm63, %v2187, 0
  %v2206 = vsel %vm63, %v2188, 0
  %2208 = vmatprep.subr.mxu0 0.0
  %2209 = vmatpush1.msra.mxu0 %v2190
  %2210 = vmatprep.subr.mxu0 0.0
  %2211 = vmatpush1.msra.mxu0 %v2191
  %2212 = vmatprep.subr.mxu0 0.0
  %2213 = vmatpush1.msra.mxu0 %v2192
  %2214 = vmatprep.subr.mxu0 0.0
  %2215 = vmatpush1.msra.mxu0 %v2193
  %2216 = vmatprep.subr.mxu0 0.0
  %2217 = vmatpush1.msra.mxu0 0.0
  %2218 = vmatprep.subr.mxu0 0.0
  %2219 = vmatpush1.msra.mxu0 0.0
  %2220 = vmatprep.subr.mxu0 0.0
  %2221 = vmatpush1.msra.mxu0 0.0
  %2222 = vmatprep.subr.mxu0 0.0
  %2223 = vmatpush1.msra.mxu0 0.0
  %2224 = vmatprep.subr.mxu0 0.0
  %2225 = vmatpush1.msra.mxu0 0.0
  %2226 = vmatprep.subr.mxu0 0.0
  %2227 = vmatpush1.msra.mxu0 0.0
  %2228 = vmatprep.subr.mxu0 0.0
  %2229 = vmatpush1.msra.mxu0 0.0
  %2230 = vmatprep.subr.mxu0 0.0
  %2231 = vmatpush1.msra.mxu0 0.0
  %2232 = vmatprep.subr.mxu0 0.0
  %2233 = vmatpush1.msra.mxu0 0.0
  %2234 = vmatprep.subr.mxu0 0.0
  %2235 = vmatpush1.msra.mxu0 0.0
  %2236 = vmatprep.subr.mxu0 0.0
  %2237 = vmatpush1.msra.mxu0 0.0
  %2238 = vmatprep.subr.mxu0 0.0
  %2239 = vmatpush1.msra.mxu0 0.0
  %2240 = vmatprep.subr.mxu0 0.0
  %2241 = vmatpush1.msra.mxu0 0.0
  %2242 = vmatprep.subr.mxu0 0.0
  %2243 = vmatpush1.msra.mxu0 0.0
  %2244 = vmatprep.subr.mxu0 0.0
  %2245 = vmatpush1.msra.mxu0 0.0
  %2246 = vmatprep.subr.mxu0 0.0
  %2247 = vmatpush1.msra.mxu0 0.0
  %2248 = vmatprep.subr.mxu0 0.0
  %2249 = vmatpush1.msra.mxu0 0.0
  %2250 = vmatprep.subr.mxu0 0.0
  %2251 = vmatpush1.msra.mxu0 0.0
  %2252 = vmatprep.subr.mxu0 0.0
  %2253 = vmatpush1.msra.mxu0 0.0
  %2254 = vmatprep.subr.mxu0 0.0
  %2255 = vmatpush1.msra.mxu0 0.0
  %2256 = vmatprep.subr.mxu0 0.0
  %2257 = vmatpush1.msra.mxu0 0.0
  %2258 = vmatprep.subr.mxu0 0.0
  %2259 = vmatpush1.msra.mxu0 0.0
  %2260 = vmatprep.subr.mxu0 0.0
  %2261 = vmatpush1.msra.mxu0 0.0
  %2262 = vmatprep.subr.mxu0 0.0
  %2263 = vmatpush1.msra.mxu0 0.0
  %2264 = vmatprep.subr.mxu0 0.0
  %2265 = vmatpush1.msra.mxu0 0.0
  %2266 = vmatprep.subr.mxu0 0.0
  %2267 = vmatpush1.msra.mxu0 0.0
  %2268 = vmatprep.subr.mxu0 0.0
  %2269 = vmatpush1.msra.mxu0 0.0
  %2270 = vmatprep.subr.mxu0 0.0
  %2271 = vmatpush1.msra.mxu0 0.0
  %2272 = vmatprep.mubr.f32.mxu0 0.0
  %2273 = vmatmul.mubr.f32.gmra.mrb[0].mxu0 %v2203
  %v2274 = vpop.f32.mrb[0].mxu0
  %v2275 = vadd.f32 %v2200, %v2274
  %v2276 = vpop.f32.mrb[0].mxu0
  %2277 = vmatprep.mubr.f32.mxu0 0.0
  %2278 = vmatmul.mubr.f32.gmra.mrb[0].mxu0 %v2206
  %v2279 = vpop.f32.mrb[0].mxu0
  %v2280 = vadd.f32 %v2200, %v2279
  %v2281 = vpop.f32.mrb[0].mxu0
  %2282 = vdwg.mxu0
  %v2283 = vmul.f32 %v2275, %v2275
  %v2284 = vmul.f32 %v2280, %v2280
  %v2285 = vmul.f32 %v2275, %v2283
  %v2286 = vmul.f32 %v2280, %v2284
  %v2287 = vmul.f32 %v2285, 0.044715
  %v2288 = vmul.f32 %v2286, 0.044715
  %v2289 = vadd.f32 %v2275, %v2287
  %v2290 = vadd.f32 %v2280, %v2288
  %v2291 = vmul.f32 %v2289, 0.7978846
  %v2292 = vmul.f32 %v2290, 0.7978846
  %v2293 = vtanh.pop %v2291
  %v2294 = vtanh.pop %v2292
  %v2295 = vadd.f32 %v2293, 1.0
  %v2296 = vadd.f32 %v2294, 1.0
  %v2297 = vmul.f32 %v2295, 0.5
  %v2298 = vmul.f32 %v2296, 0.5
  %v2299 = vmul.f32 %v2275, %v2297
  %v2300 = vmul.f32 %v2280, %v2298
  %s2301 = scalar_lea.vmem %s12, 64
  %v2302 = vld [vmem:[%s2301] sm:$0xff]
  %v2303 = vld [vmem:[%s2301 + $0x8] sm:$0xff]
  %v2304 = vld [vmem:[%s2301 + $0x10] sm:$0xff]
  %v2305 = vld [vmem:[%s2301 + $0x18] sm:$0xff]
  %v2306 = vld [vmem:[%s2301 + $0x20] sm:$0xff]
  %v2307 = vld [vmem:[%s2301 + $0x28] sm:$0xff]
  %v2308 = vld [vmem:[%s2301 + $0x30] sm:$0xff]
  %v2309 = vld [vmem:[%s2301 + $0x38] sm:$0xff]
  %s2310 = scalar_lea.vmem %s13, 1
  %v2311 = vld [vmem:[%s2310] sm:$0x1]
  %v2313 = vlaneseq
  %v2314 = vshrl.u32 %v2313, 7
  %v2315 = vsub.s32 0, %v2314
  %v2316 = vrot.slane %v2311, %v2315
  %v2319 = vsel %vm1149, %v2299, 0
  %v2322 = vsel %vm1149, %v2300, 0
  %2324 = vmatprep.subr.mxu0 0.0
  %2325 = vmatpush1.msra.mxu0 %v2302
  %2326 = vmatprep.subr.mxu0 0.0
  %2327 = vmatpush1.msra.mxu0 %v2303
  %2328 = vmatprep.subr.mxu0 0.0
  %2329 = vmatpush1.msra.mxu0 %v2304
  %2330 = vmatprep.subr.mxu0 0.0
  %2331 = vmatpush1.msra.mxu0 %v2305
  %2332 = vmatprep.subr.mxu0 0.0
  %2333 = vmatpush1.msra.mxu0 %v2306
  %2334 = vmatprep.subr.mxu0 0.0
  %2335 = vmatpush1.msra.mxu0 %v2307
  %2336 = vmatprep.subr.mxu0 0.0
  %2337 = vmatpush1.msra.mxu0 %v2308
  %2338 = vmatprep.subr.mxu0 0.0
  %2339 = vmatpush1.msra.mxu0 %v2309
  %2340 = vmatprep.subr.mxu0 0.0
  %2341 = vmatpush1.msra.mxu0 0.0
  %2342 = vmatprep.subr.mxu0 0.0
  %2343 = vmatpush1.msra.mxu0 0.0
  %2344 = vmatprep.subr.mxu0 0.0
  %2345 = vmatpush1.msra.mxu0 0.0
  %2346 = vmatprep.subr.mxu0 0.0
  %2347 = vmatpush1.msra.mxu0 0.0
  %2348 = vmatprep.subr.mxu0 0.0
  %2349 = vmatpush1.msra.mxu0 0.0
  %2350 = vmatprep.subr.mxu0 0.0
  %2351 = vmatpush1.msra.mxu0 0.0
  %2352 = vmatprep.subr.mxu0 0.0
  %2353 = vmatpush1.msra.mxu0 0.0
  %2354 = vmatprep.subr.mxu0 0.0
  %2355 = vmatpush1.msra.mxu0 0.0
  %2356 = vmatprep.subr.mxu0 0.0
  %2357 = vmatpush1.msra.mxu0 0.0
  %2358 = vmatprep.subr.mxu0 0.0
  %2359 = vmatpush1.msra.mxu0 0.0
  %2360 = vmatprep.subr.mxu0 0.0
  %2361 = vmatpush1.msra.mxu0 0.0
  %2362 = vmatprep.subr.mxu0 0.0
  %2363 = vmatpush1.msra.mxu0 0.0
  %2364 = vmatprep.subr.mxu0 0.0
  %2365 = vmatpush1.msra.mxu0 0.0
  %2366 = vmatprep.subr.mxu0 0.0
  %2367 = vmatpush1.msra.mxu0 0.0
  %2368 = vmatprep.subr.mxu0 0.0
  %2369 = vmatpush1.msra.mxu0 0.0
  %2370 = vmatprep.subr.mxu0 0.0
  %2371 = vmatpush1.msra.mxu0 0.0
  %2372 = vmatprep.subr.mxu0 0.0
  %2373 = vmatpush1.msra.mxu0 0.0
  %2374 = vmatprep.subr.mxu0 0.0
  %2375 = vmatpush1.msra.mxu0 0.0
  %2376 = vmatprep.subr.mxu0 0.0
  %2377 = vmatpush1.msra.mxu0 0.0
  %2378 = vmatprep.subr.mxu0 0.0
  %2379 = vmatpush1.msra.mxu0 0.0
  %2380 = vmatprep.subr.mxu0 0.0
  %2381 = vmatpush1.msra.mxu0 0.0
  %2382 = vmatprep.subr.mxu0 0.0
  %2383 = vmatpush1.msra.mxu0 0.0
  %2384 = vmatprep.subr.mxu0 0.0
  %2385 = vmatpush1.msra.mxu0 0.0
  %2386 = vmatprep.subr.mxu0 0.0
  %2387 = vmatpush1.msra.mxu0 0.0
  %2388 = vmatprep.mubr.f32.mxu0 0.0
  %2389 = vmatmul.mubr.f32.gmra.mrb[0].mxu0 %v2319
  %v2390 = vpop.f32.mrb[0].mxu0
  %v2391 = vadd.f32 %v2316, %v2390
  %v2392 = vpop.f32.mrb[0].mxu0
  %2393 = vmatprep.mubr.f32.mxu0 0.0
  %2394 = vmatmul.mubr.f32.gmra.mrb[0].mxu0 %v2322
  %v2395 = vpop.f32.mrb[0].mxu0
  %v2396 = vadd.f32 %v2316, %v2395
  %v2397 = vpop.f32.mrb[0].mxu0
  %2398 = vdwg.mxu0
  %v2399 = vadd.f32 %v2391, %v2187
  %v2400 = vadd.f32 %v2396, %v2188
  %s2401 = scalar_lea.vmem %s14, 1
  %v2402 = vld [vmem:[%s2401] sm:$0x1]
  %s2403 = scalar_lea.vmem %s15, 1
  %v2404 = vld [vmem:[%s2403] sm:$0x1]
  %v2405 = vsel %vm63, %v2399, 0.0
  %2406 = vadd.xlane.f32.xlu0 %v2405
  %v2407 = vpop.xlane.xlu0 %2406
  %v2408 = vsel %vm63, %v2400, 0.0
  %2409 = vadd.xlane.f32.xlu0 %v2408
  %v2410 = vpop.xlane.xlu0 %2409
  %v2411 = vmul.f32 %v2407, %v70
  %v2412 = vmul.f32 %v2410, %v70
  %v2413 = vsub.f32 %v2399, %v2411
  %v2414 = vsub.f32 %v2400, %v2412
  %v2415 = vmul.f32 %v2413, %v2413
  %v2416 = vmul.f32 %v2414, %v2414
  %v2417 = vsel %vm63, %v2415, 0.0
  %2418 = vadd.xlane.f32.xlu0 %v2417
  %v2419 = vpop.xlane.xlu0 %2418
  %v2420 = vsel %vm63, %v2416, 0.0
  %2421 = vadd.xlane.f32.xlu0 %v2420
  %v2422 = vpop.xlane.xlu0 %2421
  %v2423 = vmul.f32 %v2419, %v70
  %v2424 = vmul.f32 %v2422, %v70
  %v2425 = vadd.f32 %v2423, 1e-05
  %v2426 = vadd.f32 %v2424, 1e-05
  %v2427 = vrsqrt.pop %v2425
  %v2428 = vrsqrt.pop %v2426
  %v2429 = vmul.f32 %v2413, %v2427
  %v2430 = vmul.f32 %v2414, %v2428
  %v2432 = vlaneseq
  %v2433 = vshrl.u32 %v2432, 7
  %v2434 = vsub.s32 0, %v2433
  %v2435 = vrot.slane %v2402, %v2434
  %v2437 = vmul.f32 %v2429, %v2435
  %v2438 = vmul.f32 %v2430, %v2435
  %v2440 = vlaneseq
  %v2441 = vshrl.u32 %v2440, 7
  %v2442 = vsub.s32 0, %v2441
  %v2443 = vrot.slane %v2404, %v2442
  %v2445 = vadd.f32 %v2437, %v2443
  %v2446 = vadd.f32 %v2438, %v2443
  %v2447 = vld [vmem:[%s16] sm:$0xff]
  %v2448 = vld [vmem:[%s16 + $0x8] sm:$0xff]
  %v2449 = vld [vmem:[%s16 + $0x10] sm:$0xff]
  %v2450 = vld [vmem:[%s16 + $0x18] sm:$0xff]
  %v2451 = vld [vmem:[%s17] sm:$0x1]
  %v2453 = vlaneseq
  %v2454 = vshrl.u32 %v2453, 7
  %v2455 = vsub.s32 0, %v2454
  %v2456 = vrot.slane %v2451, %v2455
  %v2459 = vsel %vm63, %v2445, 0
  %v2462 = vsel %vm63, %v2446, 0
  %2464 = vmatprep.subr.mxu0 0.0
  %2465 = vmatpush1.msra.mxu0 %v2447
  %2466 = vmatprep.subr.mxu0 0.0
  %2467 = vmatpush1.msra.mxu0 %v2448
  %2468 = vmatprep.subr.mxu0 0.0
  %2469 = vmatpush1.msra.mxu0 %v2449
  %2470 = vmatprep.subr.mxu0 0.0
  %2471 = vmatpush1.msra.mxu0 %v2450
  %2472 = vmatprep.subr.mxu0 0.0
  %2473 = vmatpush1.msra.mxu0 0.0
  %2474 = vmatprep.subr.mxu0 0.0
  %2475 = vmatpush1.msra.mxu0 0.0
  %2476 = vmatprep.subr.mxu0 0.0
  %2477 = vmatpush1.msra.mxu0 0.0
  %2478 = vmatprep.subr.mxu0 0.0
  %2479 = vmatpush1.msra.mxu0 0.0
  %2480 = vmatprep.subr.mxu0 0.0
  %2481 = vmatpush1.msra.mxu0 0.0
  %2482 = vmatprep.subr.mxu0 0.0
  %2483 = vmatpush1.msra.mxu0 0.0
  %2484 = vmatprep.subr.mxu0 0.0
  %2485 = vmatpush1.msra.mxu0 0.0
  %2486 = vmatprep.subr.mxu0 0.0
  %2487 = vmatpush1.msra.mxu0 0.0
  %2488 = vmatprep.subr.mxu0 0.0
  %2489 = vmatpush1.msra.mxu0 0.0
  %2490 = vmatprep.subr.mxu0 0.0
  %2491 = vmatpush1.msra.mxu0 0.0
  %2492 = vmatprep.subr.mxu0 0.0
  %2493 = vmatpush1.msra.mxu0 0.0
  %2494 = vmatprep.subr.mxu0 0.0
  %2495 = vmatpush1.msra.mxu0 0.0
  %2496 = vmatprep.subr.mxu0 0.0
  %2497 = vmatpush1.msra.mxu0 0.0
  %2498 = vmatprep.subr.mxu0 0.0
  %2499 = vmatpush1.msra.mxu0 0.0
  %2500 = vmatprep.subr.mxu0 0.0
  %2501 = vmatpush1.msra.mxu0 0.0
  %2502 = vmatprep.subr.mxu0 0.0
  %2503 = vmatpush1.msra.mxu0 0.0
  %2504 = vmatprep.subr.mxu0 0.0
  %2505 = vmatpush1.msra.mxu0 0.0
  %2506 = vmatprep.subr.mxu0 0.0
  %2507 = vmatpush1.msra.mxu0 0.0
  %2508 = vmatprep.subr.mxu0 0.0
  %2509 = vmatpush1.msra.mxu0 0.0
  %2510 = vmatprep.subr.mxu0 0.0
  %2511 = vmatpush1.msra.mxu0 0.0
  %2512 = vmatprep.subr.mxu0 0.0
  %2513 = vmatpush1.msra.mxu0 0.0
  %2514 = vmatprep.subr.mxu0 0.0
  %2515 = vmatpush1.msra.mxu0 0.0
  %2516 = vmatprep.subr.mxu0 0.0
  %2517 = vmatpush1.msra.mxu0 0.0
  %2518 = vmatprep.subr.mxu0 0.0
  %2519 = vmatpush1.msra.mxu0 0.0
  %2520 = vmatprep.subr.mxu0 0.0
  %2521 = vmatpush1.msra.mxu0 0.0
  %2522 = vmatprep.subr.mxu0 0.0
  %2523 = vmatpush1.msra.mxu0 0.0
  %2524 = vmatprep.subr.mxu0 0.0
  %2525 = vmatpush1.msra.mxu0 0.0
  %2526 = vmatprep.subr.mxu0 0.0
  %2527 = vmatpush1.msra.mxu0 0.0
  %2528 = vmatprep.mubr.f32.mxu0 0.0
  %2529 = vmatmul.mubr.f32.gmra.mrb[0].mxu0 %v2459
  %v2530 = vpop.f32.mrb[0].mxu0
  %v2531 = vadd.f32 %v2456, %v2530
  %v2532 = vpop.f32.mrb[0].mxu0
  %2533 = vmatprep.mubr.f32.mxu0 0.0
  %2534 = vmatmul.mubr.f32.gmra.mrb[0].mxu0 %v2462
  %v2535 = vpop.f32.mrb[0].mxu0
  %v2536 = vadd.f32 %v2456, %v2535
  %v2537 = vpop.f32.mrb[0].mxu0
  %2538 = vdwg.mxu0
  %2539 = vst.msk [vmem:[%s18] sm:$0xff] %vm284, %v2531
  %2540 = vst.msk [vmem:[%s18 + $0x8] sm:$0xff] %vm284, %v2536
  // Predicated region
  $region74: #{xlmr_ner_forward.1} parent=0 // pred_check
    _
  $region75: #{xlmr_ner_forward.1} parent=0 // pred_check_branch
    %2542 = sbr.rel (0) target = $region77
  $region76: #{xlmr_ner_forward.1} parent=0 // pred_region
    _
  $region77: #{xlmr_ner_forward.1} parent=0 // pred_fallthru
    _
  // Predicated region
  $region78: #{xlmr_ner_forward.1} parent=0 // pred_check
    _
  $region79: #{xlmr_ner_forward.1} parent=0 // pred_check_branch
    %2544 = sbr.rel (0) target = $region81
  $region80: #{xlmr_ner_forward.1} parent=0 // pred_region
    _
  $region81: #{xlmr_ner_forward.1} parent=0 // pred_fallthru
    _

</llo_original>
